<compile_context>
chip_gen: v7x
topology: tpu7x:2x2x1
jax: 0.10.0
libtpu: 0.0.40
codegen_flags: <defaults>
</compile_context>

<pallas_src>
import functools

import jax
import jax.numpy as jnp
from jax.experimental import pallas as pl
from jax.experimental.pallas import tpu as pltpu


# ---------------------------------------------------------------------------
# tuning helpers
# ---------------------------------------------------------------------------

@functools.lru_cache(maxsize=None)
def _vmem_limit_bytes():
    """Chip-adaptive scoped VMEM limit: ~75% of physical VMEM.

    -> ~96 MiB on v5e/v6e (128 MiB parts), ~48 MiB on v7x (64 MiB part)."""
    try:
        return int(pltpu.get_tpu_info().vmem_capacity_bytes * 3 // 4)
    except Exception:
        return 48 * 1024 * 1024


def _mosaic_params():
    return pltpu.CompilerParams(
        dimension_semantics=("parallel",),
        vmem_limit_bytes=_vmem_limit_bytes(),
    )


def _tile_targets():
    """Token-tile targets: larger on 128 MiB parts, tighter on v7x (64 MiB)."""
    if _vmem_limit_bytes() >= 80 * 1024 * 1024:
        return 1024, 512          # ln+qkv tile, ln+ff tile (v5e / v6e)
    return 512, 256               # v7x


def _pick_tile(m, target):
    """Bounded row tile: m itself if it fits the target, else the largest
    multiple-of-8 divisor of m that is <= target, else just `target`
    (grids use pl.cdiv, so the tail block is masked).  Never returns a tile
    larger than max(m_if_small, target) -> no VMEM blow-up for awkward m."""
    if m <= target:
        return m
    t = max(8, (target // 8) * 8)
    for cand in range(t, 7, -8):
        if m % cand == 0:
            return cand
    return t


def _pick_divisor(n, target):
    """Largest divisor of n that is <= target (>= 1)."""
    target = max(1, min(n, target))
    for cand in range(target, 0, -1):
        if n % cand == 0:
            return cand
    return 1


def _layernorm(x, g, b):
    mean = jnp.mean(x, axis=-1, keepdims=True)
    cen = x - mean
    var = jnp.mean(cen * cen, axis=-1, keepdims=True)
    return (cen * jax.lax.rsqrt(var + 1e-5)) * g + b   # nn.LayerNorm default eps


# ---------------------------------------------------------------------------
# kernel 1: fused LayerNorm + QKV projection (bias-free, bf16 output)
# ---------------------------------------------------------------------------

def _ln_qkv_kernel(x_ref, g_ref, b_ref, w_ref, o_ref):
    xn = _layernorm(x_ref[...], g_ref[...], b_ref[...])
    o_ref[...] = jnp.dot(xn.astype(w_ref.dtype), w_ref[...],
                         preferred_element_type=jnp.float32).astype(o_ref.dtype)


def ln_qkv(x2d, gamma, beta, w_qkv, tile_m):
    M, D = x2d.shape
    O = w_qkv.shape[1]
    return pl.pallas_call(
        _ln_qkv_kernel,
        out_shape=jax.ShapeDtypeStruct((M, O), jnp.bfloat16),   # bf16 intermediate
        grid=(pl.cdiv(M, tile_m),),
        in_specs=[pl.BlockSpec((tile_m, D), lambda i: (i, 0)),
                  pl.BlockSpec((1, D), lambda i: (0, 0)),
                  pl.BlockSpec((1, D), lambda i: (0, 0)),
                  pl.BlockSpec((D, O), lambda i: (0, 0))],
        out_specs=pl.BlockSpec((tile_m, O), lambda i: (i, 0)),
        compiler_params=_mosaic_params(),
    )(x2d, gamma.reshape(1, D), beta.reshape(1, D), w_qkv)


# ---------------------------------------------------------------------------
# kernel 2: attention + out-projection + bias + residual, all heads & several
#           (b, p) groups per grid step, in-place on the residual stream
# ---------------------------------------------------------------------------
# TODO(synk): for long sequences switch to a flash-style online softmax with a
# kv-tile grid axis and move the per-head split onto the DMA/index_map path.

def _attn_proj_residual_kernel(qkv_ref, w_ref, b_ref, x_ref, o_ref, *,
                               heads, dim_head, scale, project_out):
    inner = heads * dim_head
    qkv = qkv_ref[...]                       # (Gb, N, 3*inner) bf16
    x = x_ref[...]                           # (Gb, N, D)       f32
    acc = x + b_ref[...] if project_out else x

    for h in range(heads):
        lo = h * dim_head
        q = qkv[:, :, lo:lo + dim_head]
        k = qkv[:, :, inner + lo:inner + lo + dim_head]
        v = qkv[:, :, 2 * inner + lo:2 * inner + lo + dim_head]

        s = jnp.einsum('bqd,bkd->bqk', q, k,
                       preferred_element_type=jnp.float32) * scale
        m = jnp.max(s, axis=-1, keepdims=True)
        p = jnp.exp(s - m)
        l = jnp.sum(p, axis=-1, keepdims=True)
        p = p * pl.reciprocal(l, approx=True)          # EUP slot, ~free
        o_h = jnp.einsum('bqk,bkd->bqd', p.astype(qkv.dtype), v,
                         preferred_element_type=jnp.float32)   # (Gb, N, dh) f32
        if project_out:
            # accumulate this head's slice of the output projection directly:
            # sum_h o_h @ W_out[h*dh:(h+1)*dh, :]  ==  concat(o) @ W_out
            acc = acc + jnp.einsum('bnd,df->bnf', o_h.astype(w_ref.dtype),
                                   w_ref[pl.ds(lo, dim_head), :],
                                   preferred_element_type=jnp.float32)
        else:                                  # to_out == nn.Identity
            acc = acc + o_h

    o_ref[...] = acc


def attention_residual(qkv3d, w_out, b_out, x3d, gb, *,
                       heads, dim_head, scale, project_out):
    G, N, O3 = qkv3d.shape
    D = x3d.shape[-1]
    inner = heads * dim_head
    kernel = functools.partial(_attn_proj_residual_kernel, heads=heads,
                               dim_head=dim_head, scale=scale,
                               project_out=project_out)
    return pl.pallas_call(
        kernel,
        out_shape=jax.ShapeDtypeStruct((G, N, D), jnp.float32),
        grid=(pl.cdiv(G, gb),),
        in_specs=[pl.BlockSpec((gb, N, O3), lambda g: (g, 0, 0)),
                  pl.BlockSpec((inner, D), lambda g: (0, 0)),
                  pl.BlockSpec((1, D), lambda g: (0, 0)),
                  pl.BlockSpec((gb, N, D), lambda g: (g, 0, 0))],
        out_specs=pl.BlockSpec((gb, N, D), lambda g: (g, 0, 0)),
        input_output_aliases={3: 0},           # residual updated in place
        compiler_params=_mosaic_params(),
    )(qkv3d, w_out, b_out.reshape(1, D), x3d)


# ---------------------------------------------------------------------------
# kernel 3: fused LayerNorm + FeedForward (Linear -> SiLU -> Linear) + residual
# ---------------------------------------------------------------------------

def _ln_ff_residual_kernel(x_ref, g_ref, b_ref, w1_ref, b1_ref, w2_ref, b2_ref,
                           o_ref):
    x = x_ref[...]
    xn = _layernorm(x, g_ref[...], b_ref[...])
    h = jnp.dot(xn.astype(w1_ref.dtype), w1_ref[...],
                preferred_element_type=jnp.float32) + b1_ref[...]
    h = h * jax.nn.sigmoid(h)                              # SiLU in f32
    f = jnp.dot(h.astype(w2_ref.dtype), w2_ref[...],
                preferred_element_type=jnp.float32) + b2_ref[...]
    o_ref[...] = x + f


def ln_ff_residual(x2d, gamma, beta, w1, b1, w2, b2, tile_m):
    M, D = x2d.shape
    H = w1.shape[1]
    return pl.pallas_call(
        _ln_ff_residual_kernel,
        out_shape=jax.ShapeDtypeStruct((M, D), jnp.float32),
        grid=(pl.cdiv(M, tile_m),),
        in_specs=[pl.BlockSpec((tile_m, D), lambda i: (i, 0)),
                  pl.BlockSpec((1, D), lambda i: (0, 0)),
                  pl.BlockSpec((1, D), lambda i: (0, 0)),
                  pl.BlockSpec((D, H), lambda i: (0, 0)),
                  pl.BlockSpec((1, H), lambda i: (0, 0)),
                  pl.BlockSpec((H, D), lambda i: (0, 0)),
                  pl.BlockSpec((1, D), lambda i: (0, 0))],
        out_specs=pl.BlockSpec((tile_m, D), lambda i: (i, 0)),
        input_output_aliases={0: 0},            # residual updated in place
        compiler_params=_mosaic_params(),
    )(x2d, gamma.reshape(1, D), beta.reshape(1, D),
      w1, b1.reshape(1, H), w2, b2.reshape(1, D))


# ---------------------------------------------------------------------------
# params + model wrapper
# ---------------------------------------------------------------------------

def init_transformer_params(key, dim, depth, heads, dim_head, mlp_dim):
    """Weights stored as (in, out) = transpose of torch nn.Linear, pre-cast to
    bf16 ONCE here (no per-forward f32->bf16 converts)."""
    inner = heads * dim_head
    params = []
    for _ in range(depth):
        key, *ks = jax.random.split(key, 5)
        params.append({
            "ln1_g": jnp.ones((dim,), jnp.float32),
            "ln1_b": jnp.zeros((dim,), jnp.float32),
            "w_qkv": (0.02 * jax.random.normal(ks[0], (dim, 3 * inner),
                                               jnp.float32)).astype(jnp.bfloat16),
            "w_out": (0.02 * jax.random.normal(ks[1], (inner, dim),
                                               jnp.float32)).astype(jnp.bfloat16),
            "b_out": jnp.zeros((dim,), jnp.float32),
            "ln2_g": jnp.ones((dim,), jnp.float32),
            "ln2_b": jnp.zeros((dim,), jnp.float32),
            "w1": (0.02 * jax.random.normal(ks[2], (dim, mlp_dim),
                                            jnp.float32)).astype(jnp.bfloat16),
            "b1": jnp.zeros((mlp_dim,), jnp.float32),
            "w2": (0.02 * jax.random.normal(ks[3], (mlp_dim, dim),
                                            jnp.float32)).astype(jnp.bfloat16),
            "b2": jnp.zeros((dim,), jnp.float32),
        })
    return params


def transformer_forward(x, params, *, heads, dim_head):
    B, P, N, D = x.shape
    G, M = B * P, B * P * N
    inner = heads * dim_head
    scale = dim_head ** (-0.5)
    project_out = not (heads == 1 and dim_head == D)   # matches the reference

    tgt_m, tgt_m_ff = _tile_targets()
    tile_m = _pick_tile(M, tgt_m)
    tile_m_ff = _pick_tile(M, tgt_m_ff)
    # batch enough (b, p) groups per attention step to keep the MXU fed
    gb = _pick_divisor(G, max(1, pl.cdiv(512, N)))

    x2 = x.reshape(M, D)
    for layer in params:
        # ---- PreNorm(Attention) + residual (2 fused kernels) ----
        qkv = ln_qkv(x2, layer["ln1_g"], layer["ln1_b"], layer["w_qkv"], tile_m)
        x2 = attention_residual(
            qkv.reshape(G, N, 3 * inner), layer["w_out"], layer["b_out"],
            x2.reshape(G, N, D), gb, heads=heads, dim_head=dim_head,
            scale=scale, project_out=project_out).reshape(M, D)

        # ---- PreNorm(FeedForward) + residual (1 fused kernel) ----
        x2 = ln_ff_residual(x2, layer["ln2_g"], layer["ln2_b"],
                            layer["w1"], layer["b1"], layer["w2"], layer["b2"],
                            tile_m_ff)
    return x2.reshape(B, P, N, D)


# ---------------------------------------------------------------------------
# main
# ---------------------------------------------------------------------------

if __name__ == "__main__":
    # Small shapes consistent with the module's forward: x is (b, p, n, dim)
    B, P, N = 2, 2, 8
    dim, depth, heads, dim_head, mlp_dim = 32, 2, 4, 8, 64

    key = jax.random.PRNGKey(0)
    kx, kp = jax.random.split(key)
    x = jax.random.normal(kx, (B, P, N, dim), jnp.float32)
    params = init_transformer_params(kp, dim, depth, heads, dim_head, mlp_dim)

    fwd = jax.jit(functools.partial(transformer_forward,
                                    heads=heads, dim_head=dim_head))
    out = jax.block_until_ready(fwd(x, params))
    assert out.shape == (B, P, N, dim)
    print("KERNEL_OK")
</pallas_src>

<mosaic_0001>
module attributes {stable_mosaic.version = 11 : i64} {
  func.func @_ln_qkv_kernel(%arg0: i32, %arg1: memref<32x32xf32, #tpu.memory_space<vmem>>, %arg2: memref<1x32xf32, #tpu.memory_space<vmem>>, %arg3: memref<1x32xf32, #tpu.memory_space<vmem>>, %arg4: memref<32x96xbf16, #tpu.memory_space<vmem>>, %arg5: memref<32x96xbf16, #tpu.memory_space<vmem>>) attributes {dimension_semantics = [#tpu.dimension_semantics<parallel>], iteration_bounds = array<i64: 1>, scalar_prefetch = 0 : i64, scratch_operands = 0 : i64, tpu.core_type = #tpu.core_type<tc>, window_params = [{transform_indices = @transform_0, window_bounds = array<i64: 32, 32>}, {pipeline_mode = #tpu.pipeline_mode<synchronous>, transform_indices = @transform_1, window_bounds = array<i64: 1, 32>}, {pipeline_mode = #tpu.pipeline_mode<synchronous>, transform_indices = @transform_2, window_bounds = array<i64: 1, 32>}, {pipeline_mode = #tpu.pipeline_mode<synchronous>, transform_indices = @transform_3, window_bounds = array<i64: 32, 96>}, {transform_indices = @transform_4, window_bounds = array<i64: 32, 96>}]} {
    %c0 = arith.constant 0 : index
    %c0_0 = arith.constant 0 : index
    %0 = vector.load %arg1[%c0, %c0_0] : memref<32x32xf32, #tpu.memory_space<vmem>>, vector<32x32xf32>
    %c0_1 = arith.constant 0 : index
    %c0_2 = arith.constant 0 : index
    %1 = vector.load %arg2[%c0_1, %c0_2] : memref<1x32xf32, #tpu.memory_space<vmem>>, vector<1x32xf32>
    %c0_3 = arith.constant 0 : index
    %c0_4 = arith.constant 0 : index
    %2 = vector.load %arg3[%c0_3, %c0_4] : memref<1x32xf32, #tpu.memory_space<vmem>>, vector<1x32xf32>
    %cst = arith.constant dense<0.000000e+00> : vector<32xf32>
    %3 = vector.multi_reduction <add>, %0, %cst [1] : vector<32x32xf32> to vector<32xf32>
    %4 = vector.shape_cast %3 : vector<32xf32> to vector<32x1xf32>
    %cst_5 = arith.constant 3.200000e+01 : f32
    %5 = vector.broadcast %cst_5 : f32 to vector<32x1xf32>
    %6 = arith.divf %4, %5 : vector<32x1xf32>
    %7 = vector.broadcast %6 : vector<32x1xf32> to vector<32x32xf32>
    %8 = arith.subf %0, %7 : vector<32x32xf32>
    %9 = arith.mulf %8, %8 : vector<32x32xf32>
    %cst_6 = arith.constant dense<0.000000e+00> : vector<32xf32>
    %10 = vector.multi_reduction <add>, %9, %cst_6 [1] : vector<32x32xf32> to vector<32xf32>
    %11 = vector.shape_cast %10 : vector<32xf32> to vector<32x1xf32>
    %cst_7 = arith.constant 3.200000e+01 : f32
    %12 = vector.broadcast %cst_7 : f32 to vector<32x1xf32>
    %13 = arith.divf %11, %12 : vector<32x1xf32>
    %cst_8 = arith.constant 9.99999974E-6 : f32
    %14 = vector.broadcast %cst_8 : f32 to vector<32x1xf32>
    %15 = arith.addf %13, %14 : vector<32x1xf32>
    %16 = math.rsqrt %15 : vector<32x1xf32>
    %17 = vector.broadcast %16 : vector<32x1xf32> to vector<32x32xf32>
    %18 = arith.mulf %8, %17 : vector<32x32xf32>
    %19 = vector.broadcast %1 : vector<1x32xf32> to vector<32x32xf32>
    %20 = arith.mulf %18, %19 : vector<32x32xf32>
    %21 = vector.broadcast %2 : vector<1x32xf32> to vector<32x32xf32>
    %22 = arith.addf %20, %21 : vector<32x32xf32>
    %23 = arith.truncf %22 : vector<32x32xf32> to vector<32x32xbf16>
    %c0_9 = arith.constant 0 : index
    %c0_10 = arith.constant 0 : index
    %24 = vector.load %arg4[%c0_9, %c0_10] : memref<32x96xbf16, #tpu.memory_space<vmem>>, vector<32x96xbf16>
    %cst_11 = arith.constant dense<0.000000e+00> : vector<32x96xf32>
    %25 = tpu.matmul %23, %24, %cst_11 {dimension_numbers = #tpu.dot_dimension_numbers<[1], [0], [0], [1], [0, 0, 1, 1], [], []>} : vector<32x32xbf16>, vector<32x96xbf16>, vector<32x96xf32> -> vector<32x96xf32>
    %26 = arith.truncf %25 : vector<32x96xf32> to vector<32x96xbf16>
    %c0_12 = arith.constant 0 : index
    %c0_13 = arith.constant 0 : index
    %27 = vector.load %arg5[%c0_12, %c0_13] : memref<32x96xbf16, #tpu.memory_space<vmem>>, vector<32x96xbf16>
    tpu.vector_store %arg5[%c0_12, %c0_13], %26 {strides = array<i32>} : memref<32x96xbf16, #tpu.memory_space<vmem>>, vector<32x96xbf16>,
    return
  }
  func.func @transform_0(%arg0: i32) -> (i32, i32) {
    %c0_i32 = arith.constant 0 : i32
    %c0_i32_0 = arith.constant 0 : i32
    return %arg0, %c0_i32 : i32, i32
  }
  func.func @transform_1(%arg0: i32) -> (i32, i32) {
    %c0_i32 = arith.constant 0 : i32
    %c0_i32_0 = arith.constant 0 : i32
    %c0_i32_1 = arith.constant 0 : i32
    return %c0_i32, %c0_i32_0 : i32, i32
  }
  func.func @transform_2(%arg0: i32) -> (i32, i32) {
    %c0_i32 = arith.constant 0 : i32
    %c0_i32_0 = arith.constant 0 : i32
    %c0_i32_1 = arith.constant 0 : i32
    return %c0_i32, %c0_i32_0 : i32, i32
  }
  func.func @transform_3(%arg0: i32) -> (i32, i32) {
    %c0_i32 = arith.constant 0 : i32
    %c0_i32_0 = arith.constant 0 : i32
    %c0_i32_1 = arith.constant 0 : i32
    return %c0_i32, %c0_i32_0 : i32, i32
  }
  func.func @transform_4(%arg0: i32) -> (i32, i32) {
    %c0_i32 = arith.constant 0 : i32
    %c0_i32_0 = arith.constant 0 : i32
    return %arg0, %c0_i32 : i32, i32
  }
}

module attributes {stable_mosaic.version = 11 : i64} {
  func.func @_attn_proj_residual_kernel(%arg0: i32, %arg1: memref<4x8x96xbf16, #tpu.memory_space<vmem>>, %arg2: memref<32x32xbf16, #tpu.memory_space<vmem>>, %arg3: memref<1x32xf32, #tpu.memory_space<vmem>>, %arg4: memref<4x8x32xf32, #tpu.memory_space<vmem>>, %arg5: memref<4x8x32xf32, #tpu.memory_space<vmem>>) attributes {dimension_semantics = [#tpu.dimension_semantics<parallel>], iteration_bounds = array<i64: 1>, scalar_prefetch = 0 : i64, scratch_operands = 0 : i64, tpu.core_type = #tpu.core_type<tc>, window_params = [{transform_indices = @transform_0, window_bounds = array<i64: 4, 8, 96>}, {pipeline_mode = #tpu.pipeline_mode<synchronous>, transform_indices = @transform_1, window_bounds = array<i64: 32, 32>}, {pipeline_mode = #tpu.pipeline_mode<synchronous>, transform_indices = @transform_2, window_bounds = array<i64: 1, 32>}, {transform_indices = @transform_3, window_bounds = array<i64: 4, 8, 32>}, {transform_indices = @transform_4, window_bounds = array<i64: 4, 8, 32>}]} {
    %c0 = arith.constant 0 : index
    %c0_0 = arith.constant 0 : index
    %c0_1 = arith.constant 0 : index
    %0 = vector.load %arg1[%c0, %c0_0, %c0_1] : memref<4x8x96xbf16, #tpu.memory_space<vmem>>, vector<4x8x96xbf16>
    %c0_2 = arith.constant 0 : index
    %c0_3 = arith.constant 0 : index
    %c0_4 = arith.constant 0 : index
    %1 = vector.load %arg4[%c0_2, %c0_3, %c0_4] : memref<4x8x32xf32, #tpu.memory_space<vmem>>, vector<4x8x32xf32>
    %c0_5 = arith.constant 0 : index
    %c0_6 = arith.constant 0 : index
    %2 = vector.load %arg3[%c0_5, %c0_6] : memref<1x32xf32, #tpu.memory_space<vmem>>, vector<1x32xf32>
    %3 = vector.shape_cast %2 : vector<1x32xf32> to vector<1x1x32xf32>
    %4 = vector.broadcast %3 : vector<1x1x32xf32> to vector<4x8x32xf32>
    %5 = arith.addf %1, %4 : vector<4x8x32xf32>
    %6 = vector.extract_strided_slice %0 {offsets = [0, 0, 0], sizes = [4, 8, 8], strides = [1, 1, 1]} : vector<4x8x96xbf16> to vector<4x8x8xbf16>
    %7 = vector.extract_strided_slice %0 {offsets = [0, 0, 32], sizes = [4, 8, 8], strides = [1, 1, 1]} : vector<4x8x96xbf16> to vector<4x8x8xbf16>
    %8 = vector.extract_strided_slice %0 {offsets = [0, 0, 64], sizes = [4, 8, 8], strides = [1, 1, 1]} : vector<4x8x96xbf16> to vector<4x8x8xbf16>
    "tpu.trace_start"() <{level = 10 : i32, message = "bqd,bkd->bqk"}> : () -> ()
    %cst = arith.constant dense<0.000000e+00> : vector<4x8x8xf32>
    %9 = tpu.matmul %6, %7, %cst {dimension_numbers = #tpu.dot_dimension_numbers<[2], [2], [1], [1], [0, 0, 0, 1, 1, 1], [0], [0]>} : vector<4x8x8xbf16>, vector<4x8x8xbf16>, vector<4x8x8xf32> -> vector<4x8x8xf32>
    "tpu.trace_stop"() : () -> ()
    %cst_7 = arith.constant 0.353553385 : f32
    %10 = vector.broadcast %cst_7 : f32 to vector<4x8x8xf32>
    %11 = arith.mulf %9, %10 : vector<4x8x8xf32>
    %cst_8 = arith.constant dense<0xFF800000> : vector<4x8xf32>
    %12 = vector.multi_reduction <maximumf>, %11, %cst_8 [2] : vector<4x8x8xf32> to vector<4x8xf32>
    %13 = vector.shape_cast %12 : vector<4x8xf32> to vector<4x8x1xf32>
    %14 = vector.broadcast %13 : vector<4x8x1xf32> to vector<4x8x8xf32>
    %15 = arith.subf %11, %14 : vector<4x8x8xf32>
    %16 = math.exp %15 : vector<4x8x8xf32>
    %cst_9 = arith.constant dense<0.000000e+00> : vector<4x8xf32>
    %17 = vector.multi_reduction <add>, %16, %cst_9 [2] : vector<4x8x8xf32> to vector<4x8xf32>
    %18 = vector.shape_cast %17 : vector<4x8xf32> to vector<4x8x1xf32>
    %19 = tpu.reciprocal %18 {approx = true} : vector<4x8x1xf32> -> vector<4x8x1xf32>
    %20 = vector.broadcast %19 : vector<4x8x1xf32> to vector<4x8x8xf32>
    %21 = arith.mulf %16, %20 : vector<4x8x8xf32>
    %22 = arith.truncf %21 : vector<4x8x8xf32> to vector<4x8x8xbf16>
    "tpu.trace_start"() <{level = 10 : i32, message = "bqk,bkd->bqd"}> : () -> ()
    %cst_10 = arith.constant dense<0.000000e+00> : vector<4x8x8xf32>
    %23 = tpu.matmul %22, %8, %cst_10 {dimension_numbers = #tpu.dot_dimension_numbers<[2], [1], [1], [2], [0, 0, 0, 1, 1, 2], [0], [0]>} : vector<4x8x8xbf16>, vector<4x8x8xbf16>, vector<4x8x8xf32> -> vector<4x8x8xf32>
    "tpu.trace_stop"() : () -> ()
    %24 = arith.truncf %23 : vector<4x8x8xf32> to vector<4x8x8xbf16>
    %c0_11 = arith.constant 0 : index
    %c0_12 = arith.constant 0 : index
    %25 = vector.load %arg2[%c0_11, %c0_12] : memref<32x32xbf16, #tpu.memory_space<vmem>>, vector<8x32xbf16>
    "tpu.trace_start"() <{level = 10 : i32, message = "bnd,df->bnf"}> : () -> ()
    %cst_13 = arith.constant dense<0.000000e+00> : vector<4x8x32xf32>
    %26 = tpu.matmul %24, %25, %cst_13 {dimension_numbers = #tpu.dot_dimension_numbers<[2], [0], [0, 1], [1], [0, 0, 0, 1, 1, 1], [], []>} : vector<4x8x8xbf16>, vector<8x32xbf16>, vector<4x8x32xf32> -> vector<4x8x32xf32>
    "tpu.trace_stop"() : () -> ()
    %27 = arith.addf %5, %26 : vector<4x8x32xf32>
    %28 = vector.extract_strided_slice %0 {offsets = [0, 0, 8], sizes = [4, 8, 8], strides = [1, 1, 1]} : vector<4x8x96xbf16> to vector<4x8x8xbf16>
    %29 = vector.extract_strided_slice %0 {offsets = [0, 0, 40], sizes = [4, 8, 8], strides = [1, 1, 1]} : vector<4x8x96xbf16> to vector<4x8x8xbf16>
    %30 = vector.extract_strided_slice %0 {offsets = [0, 0, 72], sizes = [4, 8, 8], strides = [1, 1, 1]} : vector<4x8x96xbf16> to vector<4x8x8xbf16>
    "tpu.trace_start"() <{level = 10 : i32, message = "bqd,bkd->bqk"}> : () -> ()
    %cst_14 = arith.constant dense<0.000000e+00> : vector<4x8x8xf32>
    %31 = tpu.matmul %28, %29, %cst_14 {dimension_numbers = #tpu.dot_dimension_numbers<[2], [2], [1], [1], [0, 0, 0, 1, 1, 1], [0], [0]>} : vector<4x8x8xbf16>, vector<4x8x8xbf16>, vector<4x8x8xf32> -> vector<4x8x8xf32>
    "tpu.trace_stop"() : () -> ()
    %cst_15 = arith.constant 0.353553385 : f32
    %32 = vector.broadcast %cst_15 : f32 to vector<4x8x8xf32>
    %33 = arith.mulf %31, %32 : vector<4x8x8xf32>
    %cst_16 = arith.constant dense<0xFF800000> : vector<4x8xf32>
    %34 = vector.multi_reduction <maximumf>, %33, %cst_16 [2] : vector<4x8x8xf32> to vector<4x8xf32>
    %35 = vector.shape_cast %34 : vector<4x8xf32> to vector<4x8x1xf32>
    %36 = vector.broadcast %35 : vector<4x8x1xf32> to vector<4x8x8xf32>
    %37 = arith.subf %33, %36 : vector<4x8x8xf32>
    %38 = math.exp %37 : vector<4x8x8xf32>
    %cst_17 = arith.constant dense<0.000000e+00> : vector<4x8xf32>
    %39 = vector.multi_reduction <add>, %38, %cst_17 [2] : vector<4x8x8xf32> to vector<4x8xf32>
    %40 = vector.shape_cast %39 : vector<4x8xf32> to vector<4x8x1xf32>
    %41 = tpu.reciprocal %40 {approx = true} : vector<4x8x1xf32> -> vector<4x8x1xf32>
    %42 = vector.broadcast %41 : vector<4x8x1xf32> to vector<4x8x8xf32>
    %43 = arith.mulf %38, %42 : vector<4x8x8xf32>
    %44 = arith.truncf %43 : vector<4x8x8xf32> to vector<4x8x8xbf16>
    "tpu.trace_start"() <{level = 10 : i32, message = "bqk,bkd->bqd"}> : () -> ()
    %cst_18 = arith.constant dense<0.000000e+00> : vector<4x8x8xf32>
    %45 = tpu.matmul %44, %30, %cst_18 {dimension_numbers = #tpu.dot_dimension_numbers<[2], [1], [1], [2], [0, 0, 0, 1, 1, 2], [0], [0]>} : vector<4x8x8xbf16>, vector<4x8x8xbf16>, vector<4x8x8xf32> -> vector<4x8x8xf32>
    "tpu.trace_stop"() : () -> ()
    %46 = arith.truncf %45 : vector<4x8x8xf32> to vector<4x8x8xbf16>
    %c8 = arith.constant 8 : index
    %c0_19 = arith.constant 0 : index
    %47 = vector.load %arg2[%c8, %c0_19] : memref<32x32xbf16, #tpu.memory_space<vmem>>, vector<8x32xbf16>
    "tpu.trace_start"() <{level = 10 : i32, message = "bnd,df->bnf"}> : () -> ()
    %cst_20 = arith.constant dense<0.000000e+00> : vector<4x8x32xf32>
    %48 = tpu.matmul %46, %47, %cst_20 {dimension_numbers = #tpu.dot_dimension_numbers<[2], [0], [0, 1], [1], [0, 0, 0, 1, 1, 1], [], []>} : vector<4x8x8xbf16>, vector<8x32xbf16>, vector<4x8x32xf32> -> vector<4x8x32xf32>
    "tpu.trace_stop"() : () -> ()
    %49 = arith.addf %27, %48 : vector<4x8x32xf32>
    %50 = vector.extract_strided_slice %0 {offsets = [0, 0, 16], sizes = [4, 8, 8], strides = [1, 1, 1]} : vector<4x8x96xbf16> to vector<4x8x8xbf16>
    %51 = vector.extract_strided_slice %0 {offsets = [0, 0, 48], sizes = [4, 8, 8], strides = [1, 1, 1]} : vector<4x8x96xbf16> to vector<4x8x8xbf16>
    %52 = vector.extract_strided_slice %0 {offsets = [0, 0, 80], sizes = [4, 8, 8], strides = [1, 1, 1]} : vector<4x8x96xbf16> to vector<4x8x8xbf16>
    "tpu.trace_start"() <{level = 10 : i32, message = "bqd,bkd->bqk"}> : () -> ()
    %cst_21 = arith.constant dense<0.000000e+00> : vector<4x8x8xf32>
    %53 = tpu.matmul %50, %51, %cst_21 {dimension_numbers = #tpu.dot_dimension_numbers<[2], [2], [1], [1], [0, 0, 0, 1, 1, 1], [0], [0]>} : vector<4x8x8xbf16>, vector<4x8x8xbf16>, vector<4x8x8xf32> -> vector<4x8x8xf32>
    "tpu.trace_stop"() : () -> ()
    %cst_22 = arith.constant 0.353553385 : f32
    %54 = vector.broadcast %cst_22 : f32 to vector<4x8x8xf32>
    %55 = arith.mulf %53, %54 : vector<4x8x8xf32>
    %cst_23 = arith.constant dense<0xFF800000> : vector<4x8xf32>
    %56 = vector.multi_reduction <maximumf>, %55, %cst_23 [2] : vector<4x8x8xf32> to vector<4x8xf32>
    %57 = vector.shape_cast %56 : vector<4x8xf32> to vector<4x8x1xf32>
    %58 = vector.broadcast %57 : vector<4x8x1xf32> to vector<4x8x8xf32>
    %59 = arith.subf %55, %58 : vector<4x8x8xf32>
    %60 = math.exp %59 : vector<4x8x8xf32>
    %cst_24 = arith.constant dense<0.000000e+00> : vector<4x8xf32>
    %61 = vector.multi_reduction <add>, %60, %cst_24 [2] : vector<4x8x8xf32> to vector<4x8xf32>
    %62 = vector.shape_cast %61 : vector<4x8xf32> to vector<4x8x1xf32>
    %63 = tpu.reciprocal %62 {approx = true} : vector<4x8x1xf32> -> vector<4x8x1xf32>
    %64 = vector.broadcast %63 : vector<4x8x1xf32> to vector<4x8x8xf32>
    %65 = arith.mulf %60, %64 : vector<4x8x8xf32>
    %66 = arith.truncf %65 : vector<4x8x8xf32> to vector<4x8x8xbf16>
    "tpu.trace_start"() <{level = 10 : i32, message = "bqk,bkd->bqd"}> : () -> ()
    %cst_25 = arith.constant dense<0.000000e+00> : vector<4x8x8xf32>
    %67 = tpu.matmul %66, %52, %cst_25 {dimension_numbers = #tpu.dot_dimension_numbers<[2], [1], [1], [2], [0, 0, 0, 1, 1, 2], [0], [0]>} : vector<4x8x8xbf16>, vector<4x8x8xbf16>, vector<4x8x8xf32> -> vector<4x8x8xf32>
    "tpu.trace_stop"() : () -> ()
    %68 = arith.truncf %67 : vector<4x8x8xf32> to vector<4x8x8xbf16>
    %c16 = arith.constant 16 : index
    %c0_26 = arith.constant 0 : index
    %69 = vector.load %arg2[%c16, %c0_26] : memref<32x32xbf16, #tpu.memory_space<vmem>>, vector<8x32xbf16>
    "tpu.trace_start"() <{level = 10 : i32, message = "bnd,df->bnf"}> : () -> ()
    %cst_27 = arith.constant dense<0.000000e+00> : vector<4x8x32xf32>
    %70 = tpu.matmul %68, %69, %cst_27 {dimension_numbers = #tpu.dot_dimension_numbers<[2], [0], [0, 1], [1], [0, 0, 0, 1, 1, 1], [], []>} : vector<4x8x8xbf16>, vector<8x32xbf16>, vector<4x8x32xf32> -> vector<4x8x32xf32>
    "tpu.trace_stop"() : () -> ()
    %71 = arith.addf %49, %70 : vector<4x8x32xf32>
    %72 = vector.extract_strided_slice %0 {offsets = [0, 0, 24], sizes = [4, 8, 8], strides = [1, 1, 1]} : vector<4x8x96xbf16> to vector<4x8x8xbf16>
    %73 = vector.extract_strided_slice %0 {offsets = [0, 0, 56], sizes = [4, 8, 8], strides = [1, 1, 1]} : vector<4x8x96xbf16> to vector<4x8x8xbf16>
    %74 = vector.extract_strided_slice %0 {offsets = [0, 0, 88], sizes = [4, 8, 8], strides = [1, 1, 1]} : vector<4x8x96xbf16> to vector<4x8x8xbf16>
    "tpu.trace_start"() <{level = 10 : i32, message = "bqd,bkd->bqk"}> : () -> ()
    %cst_28 = arith.constant dense<0.000000e+00> : vector<4x8x8xf32>
    %75 = tpu.matmul %72, %73, %cst_28 {dimension_numbers = #tpu.dot_dimension_numbers<[2], [2], [1], [1], [0, 0, 0, 1, 1, 1], [0], [0]>} : vector<4x8x8xbf16>, vector<4x8x8xbf16>, vector<4x8x8xf32> -> vector<4x8x8xf32>
    "tpu.trace_stop"() : () -> ()
    %cst_29 = arith.constant 0.353553385 : f32
    %76 = vector.broadcast %cst_29 : f32 to vector<4x8x8xf32>
    %77 = arith.mulf %75, %76 : vector<4x8x8xf32>
    %cst_30 = arith.constant dense<0xFF800000> : vector<4x8xf32>
    %78 = vector.multi_reduction <maximumf>, %77, %cst_30 [2] : vector<4x8x8xf32> to vector<4x8xf32>
    %79 = vector.shape_cast %78 : vector<4x8xf32> to vector<4x8x1xf32>
    %80 = vector.broadcast %79 : vector<4x8x1xf32> to vector<4x8x8xf32>
    %81 = arith.subf %77, %80 : vector<4x8x8xf32>
    %82 = math.exp %81 : vector<4x8x8xf32>
    %cst_31 = arith.constant dense<0.000000e+00> : vector<4x8xf32>
    %83 = vector.multi_reduction <add>, %82, %cst_31 [2] : vector<4x8x8xf32> to vector<4x8xf32>
    %84 = vector.shape_cast %83 : vector<4x8xf32> to vector<4x8x1xf32>
    %85 = tpu.reciprocal %84 {approx = true} : vector<4x8x1xf32> -> vector<4x8x1xf32>
    %86 = vector.broadcast %85 : vector<4x8x1xf32> to vector<4x8x8xf32>
    %87 = arith.mulf %82, %86 : vector<4x8x8xf32>
    %88 = arith.truncf %87 : vector<4x8x8xf32> to vector<4x8x8xbf16>
    "tpu.trace_start"() <{level = 10 : i32, message = "bqk,bkd->bqd"}> : () -> ()
    %cst_32 = arith.constant dense<0.000000e+00> : vector<4x8x8xf32>
    %89 = tpu.matmul %88, %74, %cst_32 {dimension_numbers = #tpu.dot_dimension_numbers<[2], [1], [1], [2], [0, 0, 0, 1, 1, 2], [0], [0]>} : vector<4x8x8xbf16>, vector<4x8x8xbf16>, vector<4x8x8xf32> -> vector<4x8x8xf32>
    "tpu.trace_stop"() : () -> ()
    %90 = arith.truncf %89 : vector<4x8x8xf32> to vector<4x8x8xbf16>
    %c24 = arith.constant 24 : index
    %c0_33 = arith.constant 0 : index
    %91 = vector.load %arg2[%c24, %c0_33] : memref<32x32xbf16, #tpu.memory_space<vmem>>, vector<8x32xbf16>
    "tpu.trace_start"() <{level = 10 : i32, message = "bnd,df->bnf"}> : () -> ()
    %cst_34 = arith.constant dense<0.000000e+00> : vector<4x8x32xf32>
    %92 = tpu.matmul %90, %91, %cst_34 {dimension_numbers = #tpu.dot_dimension_numbers<[2], [0], [0, 1], [1], [0, 0, 0, 1, 1, 1], [], []>} : vector<4x8x8xbf16>, vector<8x32xbf16>, vector<4x8x32xf32> -> vector<4x8x32xf32>
    "tpu.trace_stop"() : () -> ()
    %93 = arith.addf %71, %92 : vector<4x8x32xf32>
    %c0_35 = arith.constant 0 : index
    %c0_36 = arith.constant 0 : index
    %c0_37 = arith.constant 0 : index
    %94 = vector.load %arg5[%c0_35, %c0_36, %c0_37] : memref<4x8x32xf32, #tpu.memory_space<vmem>>, vector<4x8x32xf32>
    tpu.vector_store %arg5[%c0_35, %c0_36, %c0_37], %93 {strides = array<i32>} : memref<4x8x32xf32, #tpu.memory_space<vmem>>, vector<4x8x32xf32>,
    return
  }
  func.func @transform_0(%arg0: i32) -> (i32, i32, i32) {
    %c0_i32 = arith.constant 0 : i32
    %c0_i32_0 = arith.constant 0 : i32
    %c0_i32_1 = arith.constant 0 : i32
    return %arg0, %c0_i32, %c0_i32_0 : i32, i32, i32
  }
  func.func @transform_1(%arg0: i32) -> (i32, i32) {
    %c0_i32 = arith.constant 0 : i32
    %c0_i32_0 = arith.constant 0 : i32
    %c0_i32_1 = arith.constant 0 : i32
    return %c0_i32, %c0_i32_0 : i32, i32
  }
  func.func @transform_2(%arg0: i32) -> (i32, i32) {
    %c0_i32 = arith.constant 0 : i32
    %c0_i32_0 = arith.constant 0 : i32
    %c0_i32_1 = arith.constant 0 : i32
    return %c0_i32, %c0_i32_0 : i32, i32
  }
  func.func @transform_3(%arg0: i32) -> (i32, i32, i32) {
    %c0_i32 = arith.constant 0 : i32
    %c0_i32_0 = arith.constant 0 : i32
    %c0_i32_1 = arith.constant 0 : i32
    return %arg0, %c0_i32, %c0_i32_0 : i32, i32, i32
  }
  func.func @transform_4(%arg0: i32) -> (i32, i32, i32) {
    %c0_i32 = arith.constant 0 : i32
    %c0_i32_0 = arith.constant 0 : i32
    %c0_i32_1 = arith.constant 0 : i32
    return %arg0, %c0_i32, %c0_i32_0 : i32, i32, i32
  }
}

module attributes {stable_mosaic.version = 11 : i64} {
  func.func @_ln_ff_residual_kernel(%arg0: i32, %arg1: memref<32x32xf32, #tpu.memory_space<vmem>>, %arg2: memref<1x32xf32, #tpu.memory_space<vmem>>, %arg3: memref<1x32xf32, #tpu.memory_space<vmem>>, %arg4: memref<32x64xbf16, #tpu.memory_space<vmem>>, %arg5: memref<1x64xf32, #tpu.memory_space<vmem>>, %arg6: memref<64x32xbf16, #tpu.memory_space<vmem>>, %arg7: memref<1x32xf32, #tpu.memory_space<vmem>>, %arg8: memref<32x32xf32, #tpu.memory_space<vmem>>) attributes {dimension_semantics = [#tpu.dimension_semantics<parallel>], iteration_bounds = array<i64: 1>, scalar_prefetch = 0 : i64, scratch_operands = 0 : i64, tpu.core_type = #tpu.core_type<tc>, window_params = [{transform_indices = @transform_0, window_bounds = array<i64: 32, 32>}, {pipeline_mode = #tpu.pipeline_mode<synchronous>, transform_indices = @transform_1, window_bounds = array<i64: 1, 32>}, {pipeline_mode = #tpu.pipeline_mode<synchronous>, transform_indices = @transform_2, window_bounds = array<i64: 1, 32>}, {pipeline_mode = #tpu.pipeline_mode<synchronous>, transform_indices = @transform_3, window_bounds = array<i64: 32, 64>}, {pipeline_mode = #tpu.pipeline_mode<synchronous>, transform_indices = @transform_4, window_bounds = array<i64: 1, 64>}, {pipeline_mode = #tpu.pipeline_mode<synchronous>, transform_indices = @transform_5, window_bounds = array<i64: 64, 32>}, {pipeline_mode = #tpu.pipeline_mode<synchronous>, transform_indices = @transform_6, window_bounds = array<i64: 1, 32>}, {transform_indices = @transform_7, window_bounds = array<i64: 32, 32>}]} {
    %c0 = arith.constant 0 : index
    %c0_0 = arith.constant 0 : index
    %0 = vector.load %arg1[%c0, %c0_0] : memref<32x32xf32, #tpu.memory_space<vmem>>, vector<32x32xf32>
    %c0_1 = arith.constant 0 : index
    %c0_2 = arith.constant 0 : index
    %1 = vector.load %arg2[%c0_1, %c0_2] : memref<1x32xf32, #tpu.memory_space<vmem>>, vector<1x32xf32>
    %c0_3 = arith.constant 0 : index
    %c0_4 = arith.constant 0 : index
    %2 = vector.load %arg3[%c0_3, %c0_4] : memref<1x32xf32, #tpu.memory_space<vmem>>, vector<1x32xf32>
    %cst = arith.constant dense<0.000000e+00> : vector<32xf32>
    %3 = vector.multi_reduction <add>, %0, %cst [1] : vector<32x32xf32> to vector<32xf32>
    %4 = vector.shape_cast %3 : vector<32xf32> to vector<32x1xf32>
    %cst_5 = arith.constant 3.200000e+01 : f32
    %5 = vector.broadcast %cst_5 : f32 to vector<32x1xf32>
    %6 = arith.divf %4, %5 : vector<32x1xf32>
    %7 = vector.broadcast %6 : vector<32x1xf32> to vector<32x32xf32>
    %8 = arith.subf %0, %7 : vector<32x32xf32>
    %9 = arith.mulf %8, %8 : vector<32x32xf32>
    %cst_6 = arith.constant dense<0.000000e+00> : vector<32xf32>
    %10 = vector.multi_reduction <add>, %9, %cst_6 [1] : vector<32x32xf32> to vector<32xf32>
    %11 = vector.shape_cast %10 : vector<32xf32> to vector<32x1xf32>
    %cst_7 = arith.constant 3.200000e+01 : f32
    %12 = vector.broadcast %cst_7 : f32 to vector<32x1xf32>
    %13 = arith.divf %11, %12 : vector<32x1xf32>
    %cst_8 = arith.constant 9.99999974E-6 : f32
    %14 = vector.broadcast %cst_8 : f32 to vector<32x1xf32>
    %15 = arith.addf %13, %14 : vector<32x1xf32>
    %16 = math.rsqrt %15 : vector<32x1xf32>
    %17 = vector.broadcast %16 : vector<32x1xf32> to vector<32x32xf32>
    %18 = arith.mulf %8, %17 : vector<32x32xf32>
    %19 = vector.broadcast %1 : vector<1x32xf32> to vector<32x32xf32>
    %20 = arith.mulf %18, %19 : vector<32x32xf32>
    %21 = vector.broadcast %2 : vector<1x32xf32> to vector<32x32xf32>
    %22 = arith.addf %20, %21 : vector<32x32xf32>
    %23 = arith.truncf %22 : vector<32x32xf32> to vector<32x32xbf16>
    %c0_9 = arith.constant 0 : index
    %c0_10 = arith.constant 0 : index
    %24 = vector.load %arg4[%c0_9, %c0_10] : memref<32x64xbf16, #tpu.memory_space<vmem>>, vector<32x64xbf16>
    %cst_11 = arith.constant dense<0.000000e+00> : vector<32x64xf32>
    %25 = tpu.matmul %23, %24, %cst_11 {dimension_numbers = #tpu.dot_dimension_numbers<[1], [0], [0], [1], [0, 0, 1, 1], [], []>} : vector<32x32xbf16>, vector<32x64xbf16>, vector<32x64xf32> -> vector<32x64xf32>
    %c0_12 = arith.constant 0 : index
    %c0_13 = arith.constant 0 : index
    %26 = vector.load %arg5[%c0_12, %c0_13] : memref<1x64xf32, #tpu.memory_space<vmem>>, vector<1x64xf32>
    %27 = vector.broadcast %26 : vector<1x64xf32> to vector<32x64xf32>
    %28 = arith.addf %25, %27 : vector<32x64xf32>
    %29 = arith.negf %28 : vector<32x64xf32>
    %30 = math.exp %29 : vector<32x64xf32>
    %cst_14 = arith.constant 1.000000e+00 : f32
    %31 = vector.broadcast %cst_14 : f32 to vector<32x64xf32>
    %32 = arith.addf %31, %30 : vector<32x64xf32>
    %33 = arith.divf %31, %32 : vector<32x64xf32>
    %34 = arith.mulf %28, %33 : vector<32x64xf32>
    %35 = arith.truncf %34 : vector<32x64xf32> to vector<32x64xbf16>
    %c0_15 = arith.constant 0 : index
    %c0_16 = arith.constant 0 : index
    %36 = vector.load %arg6[%c0_15, %c0_16] : memref<64x32xbf16, #tpu.memory_space<vmem>>, vector<64x32xbf16>
    %cst_17 = arith.constant dense<0.000000e+00> : vector<32x32xf32>
    %37 = tpu.matmul %35, %36, %cst_17 {dimension_numbers = #tpu.dot_dimension_numbers<[1], [0], [0], [1], [0, 0, 1, 1], [], []>} : vector<32x64xbf16>, vector<64x32xbf16>, vector<32x32xf32> -> vector<32x32xf32>
    %c0_18 = arith.constant 0 : index
    %c0_19 = arith.constant 0 : index
    %38 = vector.load %arg7[%c0_18, %c0_19] : memref<1x32xf32, #tpu.memory_space<vmem>>, vector<1x32xf32>
    %39 = vector.broadcast %38 : vector<1x32xf32> to vector<32x32xf32>
    %40 = arith.addf %37, %39 : vector<32x32xf32>
    %41 = arith.addf %0, %40 : vector<32x32xf32>
    %c0_20 = arith.constant 0 : index
    %c0_21 = arith.constant 0 : index
    %42 = vector.load %arg8[%c0_20, %c0_21] : memref<32x32xf32, #tpu.memory_space<vmem>>, vector<32x32xf32>
    tpu.vector_store %arg8[%c0_20, %c0_21], %41 {strides = array<i32>} : memref<32x32xf32, #tpu.memory_space<vmem>>, vector<32x32xf32>,
    return
  }
  func.func @transform_0(%arg0: i32) -> (i32, i32) {
    %c0_i32 = arith.constant 0 : i32
    %c0_i32_0 = arith.constant 0 : i32
    return %arg0, %c0_i32 : i32, i32
  }
  func.func @transform_1(%arg0: i32) -> (i32, i32) {
    %c0_i32 = arith.constant 0 : i32
    %c0_i32_0 = arith.constant 0 : i32
    %c0_i32_1 = arith.constant 0 : i32
    return %c0_i32, %c0_i32_0 : i32, i32
  }
  func.func @transform_2(%arg0: i32) -> (i32, i32) {
    %c0_i32 = arith.constant 0 : i32
    %c0_i32_0 = arith.constant 0 : i32
    %c0_i32_1 = arith.constant 0 : i32
    return %c0_i32, %c0_i32_0 : i32, i32
  }
  func.func @transform_3(%arg0: i32) -> (i32, i32) {
    %c0_i32 = arith.constant 0 : i32
    %c0_i32_0 = arith.constant 0 : i32
    %c0_i32_1 = arith.constant 0 : i32
    return %c0_i32, %c0_i32_0 : i32, i32
  }
  func.func @transform_4(%arg0: i32) -> (i32, i32) {
    %c0_i32 = arith.constant 0 : i32
    %c0_i32_0 = arith.constant 0 : i32
    %c0_i32_1 = arith.constant 0 : i32
    return %c0_i32, %c0_i32_0 : i32, i32
  }
  func.func @transform_5(%arg0: i32) -> (i32, i32) {
    %c0_i32 = arith.constant 0 : i32
    %c0_i32_0 = arith.constant 0 : i32
    %c0_i32_1 = arith.constant 0 : i32
    return %c0_i32, %c0_i32_0 : i32, i32
  }
  func.func @transform_6(%arg0: i32) -> (i32, i32) {
    %c0_i32 = arith.constant 0 : i32
    %c0_i32_0 = arith.constant 0 : i32
    %c0_i32_1 = arith.constant 0 : i32
    return %c0_i32, %c0_i32_0 : i32, i32
  }
  func.func @transform_7(%arg0: i32) -> (i32, i32) {
    %c0_i32 = arith.constant 0 : i32
    %c0_i32_0 = arith.constant 0 : i32
    return %arg0, %c0_i32 : i32, i32
  }
}

</mosaic_0001>

<llo_original>
// kernel: transformer_forward.6
$region0: #{transformer_forward.6}
  #allocation0 [shape = 'u32[]', space=smem, size = 0x4, offset = 0x4, fixed_abs, tag = 'smem constant byte address 0x4 - core index']
  #allocation1 [shape = 'u32[144,128]{1,0:T(1,128)}', space=vmem, size = 0x12000, scoped, tag = 'internal scratch']
  %s0 = inlined_call_operand.vmem [shape: f32[32,32], index: 0, kind: input, shape index: {}]
  %s1 = inlined_call_operand.vmem [shape: f32[1,32], index: 1, kind: input, shape index: {}]
  %s2 = inlined_call_operand.vmem [shape: f32[1,32], index: 2, kind: input, shape index: {}]
  %s3 = inlined_call_operand.vmem [shape: bf16[32,96], index: 3, kind: input, shape index: {}]
  %s4 = inlined_call_operand.vmem [shape: bf16[32,96], index: 4, kind: output, shape index: {}]
  %s5 = sld [smem:[#allocation0]]
  $region26: #{transformer_forward.6} parent=0
    _
  %s7 = ssub.s32 1, %s5
  %s8 = scalar_select 0, %s7, %s5
  // Predicated region
  $region2: #{transformer_forward.6} parent=0 // pred_check
    _
  $region3: #{transformer_forward.6} parent=0 // pred_check_branch
    %10 = sbr.rel (0) target = $region5
  $region4: #{transformer_forward.6} parent=0 // pred_region
    _
  $region5: #{transformer_forward.6} parent=0 // pred_fallthru
    _
  // Predicated region
  $region6: #{transformer_forward.6} parent=0 // pred_check
    _
  $region7: #{transformer_forward.6} parent=0 // pred_check_branch
    %12 = sbr.rel (0) target = $region9
  $region8: #{transformer_forward.6} parent=0 // pred_region
    _
  $region9: #{transformer_forward.6} parent=0 // pred_fallthru
    _
  // Predicated region
  $region10: #{transformer_forward.6} parent=0 // pred_check
    _
  $region11: #{transformer_forward.6} parent=0 // pred_check_branch
    %14 = sbr.rel (0) target = $region13
  $region12: #{transformer_forward.6} parent=0 // pred_region
    _
  $region13: #{transformer_forward.6} parent=0 // pred_fallthru
    _
  // Predicated region
  $region14: #{transformer_forward.6} parent=0 // pred_check
    _
  $region15: #{transformer_forward.6} parent=0 // pred_check_branch
    %16 = sbr.rel (0) target = $region17
  $region16: #{transformer_forward.6} parent=0 // pred_region
    _
  $region17: #{transformer_forward.6} parent=0 // pred_fallthru
    _
  %v18 = vld [vmem:[%s0] sm:$0xff]
  %v19 = vld [vmem:[%s0 + $0x8] sm:$0xff]
  %v20 = vld [vmem:[%s0 + $0x10] sm:$0xff]
  %v21 = vld [vmem:[%s0 + $0x18] sm:$0xff]
  %v22 = vld [vmem:[%s1] sm:$0x1]
  %v23 = vld [vmem:[%s2] sm:$0x1]
  %vm24 = vcmask 261120
  %v25 = vsel %vm24, %v18, 0.0
  %26 = vadd.xlane.f32.xlu0 %v25
  %v27 = vpop.xlane.xlu0 %26
  %v28 = vsel %vm24, %v19, 0.0
  %29 = vadd.xlane.f32.xlu0 %v28
  %v30 = vpop.xlane.xlu0 %29
  %v31 = vsel %vm24, %v20, 0.0
  %32 = vadd.xlane.f32.xlu0 %v31
  %v33 = vpop.xlane.xlu0 %32
  %v34 = vsel %vm24, %v21, 0.0
  %35 = vadd.xlane.f32.xlu0 %v34
  %v36 = vpop.xlane.xlu0 %35
  %v37 = vrcp.pop 32.0
  %v38 = vmul.f32 %v27, %v37
  %v39 = vmul.f32 %v30, %v37
  %v40 = vmul.f32 %v33, %v37
  %v41 = vmul.f32 %v36, %v37
  %v42 = vsub.f32 %v18, %v38
  %v43 = vsub.f32 %v19, %v39
  %v44 = vsub.f32 %v20, %v40
  %v45 = vsub.f32 %v21, %v41
  %v46 = vmul.f32 %v42, %v42
  %v47 = vmul.f32 %v43, %v43
  %v48 = vmul.f32 %v44, %v44
  %v49 = vmul.f32 %v45, %v45
  %v50 = vsel %vm24, %v46, 0.0
  %51 = vadd.xlane.f32.xlu0 %v50
  %v52 = vpop.xlane.xlu0 %51
  %v53 = vsel %vm24, %v47, 0.0
  %54 = vadd.xlane.f32.xlu0 %v53
  %v55 = vpop.xlane.xlu0 %54
  %v56 = vsel %vm24, %v48, 0.0
  %57 = vadd.xlane.f32.xlu0 %v56
  %v58 = vpop.xlane.xlu0 %57
  %v59 = vsel %vm24, %v49, 0.0
  %60 = vadd.xlane.f32.xlu0 %v59
  %v61 = vpop.xlane.xlu0 %60
  %v62 = vmul.f32 %v52, %v37
  %v63 = vmul.f32 %v55, %v37
  %v64 = vmul.f32 %v58, %v37
  %v65 = vmul.f32 %v61, %v37
  %v66 = vadd.f32 %v62, 1e-05
  %v67 = vadd.f32 %v63, 1e-05
  %v68 = vadd.f32 %v64, 1e-05
  %v69 = vadd.f32 %v65, 1e-05
  %v70 = vrsqrt.pop %v66
  %v71 = vrsqrt.pop %v67
  %v72 = vrsqrt.pop %v68
  %v73 = vrsqrt.pop %v69
  %v74 = vmul.f32 %v42, %v70
  %v75 = vmul.f32 %v43, %v71
  %v76 = vmul.f32 %v44, %v72
  %v77 = vmul.f32 %v45, %v73
  %v79 = vlaneseq
  %v80 = vshrl.u32 %v79, 7
  %v81 = vsub.s32 0, %v80
  %v82 = vrot.slane %v22, %v81
  %v84 = vmul.f32 %v74, %v82
  %v85 = vmul.f32 %v75, %v82
  %v86 = vmul.f32 %v76, %v82
  %v87 = vmul.f32 %v77, %v82
  %v89 = vlaneseq
  %v90 = vshrl.u32 %v89, 7
  %v91 = vsub.s32 0, %v90
  %v92 = vrot.slane %v23, %v91
  %v94 = vadd.f32 %v84, %v92
  %v95 = vadd.f32 %v85, %v92
  %v96 = vadd.f32 %v86, %v92
  %v97 = vadd.f32 %v87, %v92
  %v98 = vpack.c.bf16 %v95, %v94
  %v99 = vpack.c.bf16 %v97, %v96
  %v100 = vld [vmem:[%s3] sm:$0xf]
  %v101 = vld [vmem:[%s3 + $0x4] sm:$0xf]
  %v102 = vld [vmem:[%s3 + $0x8] sm:$0xf]
  %v103 = vld [vmem:[%s3 + $0xc] sm:$0xf]
  %v108 = vunpack.c.l.b16 %v100
  %v109 = vunpack.c.l.b16 %v101
  %v110 = vunpack.c.l.b16 %v102
  %v111 = vunpack.c.l.b16 %v103
  %v112 = vpack.c.b16 %v109, %v108
  %v113 = vpack.c.b16 %v111, %v110
  %v117 = vsel %vm24, %v98, 0
  %v120 = vsel %vm24, %v99, 0
  %122 = vmatprep.subr.bf16.mxu0 0
  %123 = vmatpush1.bf16.msra.mxu0 %v112
  %124 = vmatprep.subr.bf16.mxu0 0
  %125 = vmatpush1.bf16.msra.mxu0 %v113
  %126 = vmatprep.subr.bf16.mxu0 0
  %127 = vmatpush1.bf16.msra.mxu0 0
  %128 = vmatprep.subr.bf16.mxu0 0
  %129 = vmatpush1.bf16.msra.mxu0 0
  %130 = vmatprep.subr.bf16.mxu0 0
  %131 = vmatpush1.bf16.msra.mxu0 0
  %132 = vmatprep.subr.bf16.mxu0 0
  %133 = vmatpush1.bf16.msra.mxu0 0
  %134 = vmatprep.subr.bf16.mxu0 0
  %135 = vmatpush1.bf16.msra.mxu0 0
  %136 = vmatprep.subr.bf16.mxu0 0
  %137 = vmatpush1.bf16.msra.mxu0 0
  %138 = vmatprep.subr.bf16.mxu0 0
  %139 = vmatpush1.bf16.msra.mxu0 0
  %140 = vmatprep.subr.bf16.mxu0 0
  %141 = vmatpush1.bf16.msra.mxu0 0
  %142 = vmatprep.subr.bf16.mxu0 0
  %143 = vmatpush1.bf16.msra.mxu0 0
  %144 = vmatprep.subr.bf16.mxu0 0
  %145 = vmatpush1.bf16.msra.mxu0 0
  %146 = vmatprep.subr.bf16.mxu0 0
  %147 = vmatpush1.bf16.msra.mxu0 0
  %148 = vmatprep.subr.bf16.mxu0 0
  %149 = vmatpush1.bf16.msra.mxu0 0
  %150 = vmatprep.subr.bf16.mxu0 0
  %151 = vmatpush1.bf16.msra.mxu0 0
  %152 = vmatprep.subr.bf16.mxu0 0
  %153 = vmatpush1.bf16.msra.mxu0 0
  %154 = vmatprep.mubr.bf16.mxu0 0
  %155 = vmatmul.mubr.bf16.gmra.mrb[0].mxu0 %v117
  %v156 = vpop.f32.mrb[0].mxu0
  %v157 = vadd.f32 0.0, %v156
  %v158 = vpop.f32.mrb[0].mxu0
  %v159 = vpop.f32.mrb[0].mxu0
  %v160 = vadd.f32 0.0, %v159
  %v161 = vpop.f32.mrb[0].mxu0
  %162 = vmatprep.mubr.bf16.mxu0 0
  %163 = vmatmul.mubr.bf16.gmra.mrb[0].mxu0 %v120
  %v164 = vpop.f32.mrb[0].mxu0
  %v165 = vadd.f32 0.0, %v164
  %v166 = vpop.f32.mrb[0].mxu0
  %v167 = vpop.f32.mrb[0].mxu0
  %v168 = vadd.f32 0.0, %v167
  %v169 = vpop.f32.mrb[0].mxu0
  %170 = vdwg.mxu0
  %v171 = vpack.c.bf16 %v160, %v157
  %v172 = vpack.c.bf16 %v168, %v165
  %v175 = vunpack.c.l.b16 %v171
  %v176 = vunpack.c.h.b16 %v171
  %v177 = vunpack.c.l.b16 %v172
  %v178 = vunpack.c.h.b16 %v172
  %v179 = vpack.c.b16 %v175, %v175
  %v180 = vpack.c.b16 %v176, %v176
  %v181 = vpack.c.b16 %v177, %v177
  %v182 = vpack.c.b16 %v178, %v178
  %vm187 = vcmask 781312
  %188 = vst.msk [vmem:[%s4] sm:$0xf] %vm187, %v179
  %189 = vst.msk [vmem:[%s4 + $0x4] sm:$0xf] %vm187, %v180
  %190 = vst.msk [vmem:[%s4 + $0x8] sm:$0xf] %vm187, %v181
  %191 = vst.msk [vmem:[%s4 + $0xc] sm:$0xf] %vm187, %v182
  // Predicated region
  $region18: #{transformer_forward.6} parent=0 // pred_check
    _
  $region19: #{transformer_forward.6} parent=0 // pred_check_branch
    %193 = sbr.rel (0) target = $region21
  $region20: #{transformer_forward.6} parent=0 // pred_region
    _
  $region21: #{transformer_forward.6} parent=0 // pred_fallthru
    _
  // Predicated region
  $region22: #{transformer_forward.6} parent=0 // pred_check
    _
  $region23: #{transformer_forward.6} parent=0 // pred_check_branch
    %195 = sbr.rel (0) target = $region25
  $region24: #{transformer_forward.6} parent=0 // pred_region
    _
  $region25: #{transformer_forward.6} parent=0 // pred_fallthru
    _

// kernel: transformer_forward.8
$region0: #{transformer_forward.8}
  #allocation0 [shape = 'u32[]', space=smem, size = 0x4, offset = 0x4, fixed_abs, tag = 'smem constant byte address 0x4 - core index']
  #allocation1 [shape = 'u32[144,128]{1,0:T(1,128)}', space=vmem, size = 0x12000, scoped, tag = 'internal scratch']
  %s0 = inlined_call_operand.vmem [shape: f32[32,32], index: 0, kind: input, shape index: {}, may-alias: {0,7}]
  %s1 = inlined_call_operand.vmem [shape: f32[1,32], index: 1, kind: input, shape index: {}]
  %s2 = inlined_call_operand.vmem [shape: f32[1,32], index: 2, kind: input, shape index: {}]
  %s3 = inlined_call_operand.vmem [shape: bf16[32,64], index: 3, kind: input, shape index: {}]
  %s4 = inlined_call_operand.vmem [shape: f32[1,64], index: 4, kind: input, shape index: {}]
  %s5 = inlined_call_operand.vmem [shape: bf16[64,32], index: 5, kind: input, shape index: {}]
  %s6 = inlined_call_operand.vmem [shape: f32[1,32], index: 6, kind: input, shape index: {}]
  %s7 = inlined_call_operand.vmem [shape: f32[32,32], index: 7, kind: output, shape index: {}, may-alias: {0,7}]
  %s8 = sld [smem:[#allocation0]]
  $region38: #{transformer_forward.8} parent=0
    _
  %s10 = ssub.s32 1, %s8
  %s11 = scalar_select 0, %s10, %s8
  // Predicated region
  $region2: #{transformer_forward.8} parent=0 // pred_check
    _
  $region3: #{transformer_forward.8} parent=0 // pred_check_branch
    %13 = sbr.rel (0) target = $region5
  $region4: #{transformer_forward.8} parent=0 // pred_region
    _
  $region5: #{transformer_forward.8} parent=0 // pred_fallthru
    _
  // Predicated region
  $region6: #{transformer_forward.8} parent=0 // pred_check
    _
  $region7: #{transformer_forward.8} parent=0 // pred_check_branch
    %15 = sbr.rel (0) target = $region9
  $region8: #{transformer_forward.8} parent=0 // pred_region
    _
  $region9: #{transformer_forward.8} parent=0 // pred_fallthru
    _
  // Predicated region
  $region10: #{transformer_forward.8} parent=0 // pred_check
    _
  $region11: #{transformer_forward.8} parent=0 // pred_check_branch
    %17 = sbr.rel (0) target = $region13
  $region12: #{transformer_forward.8} parent=0 // pred_region
    _
  $region13: #{transformer_forward.8} parent=0 // pred_fallthru
    _
  // Predicated region
  $region14: #{transformer_forward.8} parent=0 // pred_check
    _
  $region15: #{transformer_forward.8} parent=0 // pred_check_branch
    %19 = sbr.rel (0) target = $region17
  $region16: #{transformer_forward.8} parent=0 // pred_region
    _
  $region17: #{transformer_forward.8} parent=0 // pred_fallthru
    _
  // Predicated region
  $region18: #{transformer_forward.8} parent=0 // pred_check
    _
  $region19: #{transformer_forward.8} parent=0 // pred_check_branch
    %21 = sbr.rel (0) target = $region21
  $region20: #{transformer_forward.8} parent=0 // pred_region
    _
  $region21: #{transformer_forward.8} parent=0 // pred_fallthru
    _
  // Predicated region
  $region22: #{transformer_forward.8} parent=0 // pred_check
    _
  $region23: #{transformer_forward.8} parent=0 // pred_check_branch
    %23 = sbr.rel (0) target = $region25
  $region24: #{transformer_forward.8} parent=0 // pred_region
    _
  $region25: #{transformer_forward.8} parent=0 // pred_fallthru
    _
  // Predicated region
  $region26: #{transformer_forward.8} parent=0 // pred_check
    _
  $region27: #{transformer_forward.8} parent=0 // pred_check_branch
    %25 = sbr.rel (0) target = $region29
  $region28: #{transformer_forward.8} parent=0 // pred_region
    _
  $region29: #{transformer_forward.8} parent=0 // pred_fallthru
    _
  %v27 = vld [vmem:[%s0] sm:$0xff]
  %v28 = vld [vmem:[%s0 + $0x8] sm:$0xff]
  %v29 = vld [vmem:[%s0 + $0x10] sm:$0xff]
  %v30 = vld [vmem:[%s0 + $0x18] sm:$0xff]
  %v31 = vld [vmem:[%s1] sm:$0x1]
  %v32 = vld [vmem:[%s2] sm:$0x1]
  %vm33 = vcmask 261120
  %v34 = vsel %vm33, %v27, 0.0
  %35 = vadd.xlane.f32.xlu0 %v34
  %v36 = vpop.xlane.xlu0 %35
  %v37 = vsel %vm33, %v28, 0.0
  %38 = vadd.xlane.f32.xlu0 %v37
  %v39 = vpop.xlane.xlu0 %38
  %v40 = vsel %vm33, %v29, 0.0
  %41 = vadd.xlane.f32.xlu0 %v40
  %v42 = vpop.xlane.xlu0 %41
  %v43 = vsel %vm33, %v30, 0.0
  %44 = vadd.xlane.f32.xlu0 %v43
  %v45 = vpop.xlane.xlu0 %44
  %v46 = vrcp.pop 32.0
  %v47 = vmul.f32 %v36, %v46
  %v48 = vmul.f32 %v39, %v46
  %v49 = vmul.f32 %v42, %v46
  %v50 = vmul.f32 %v45, %v46
  %v51 = vsub.f32 %v27, %v47
  %v52 = vsub.f32 %v28, %v48
  %v53 = vsub.f32 %v29, %v49
  %v54 = vsub.f32 %v30, %v50
  %v55 = vmul.f32 %v51, %v51
  %v56 = vmul.f32 %v52, %v52
  %v57 = vmul.f32 %v53, %v53
  %v58 = vmul.f32 %v54, %v54
  %v59 = vsel %vm33, %v55, 0.0
  %60 = vadd.xlane.f32.xlu0 %v59
  %v61 = vpop.xlane.xlu0 %60
  %v62 = vsel %vm33, %v56, 0.0
  %63 = vadd.xlane.f32.xlu0 %v62
  %v64 = vpop.xlane.xlu0 %63
  %v65 = vsel %vm33, %v57, 0.0
  %66 = vadd.xlane.f32.xlu0 %v65
  %v67 = vpop.xlane.xlu0 %66
  %v68 = vsel %vm33, %v58, 0.0
  %69 = vadd.xlane.f32.xlu0 %v68
  %v70 = vpop.xlane.xlu0 %69
  %v71 = vmul.f32 %v61, %v46
  %v72 = vmul.f32 %v64, %v46
  %v73 = vmul.f32 %v67, %v46
  %v74 = vmul.f32 %v70, %v46
  %v75 = vadd.f32 %v71, 1e-05
  %v76 = vadd.f32 %v72, 1e-05
  %v77 = vadd.f32 %v73, 1e-05
  %v78 = vadd.f32 %v74, 1e-05
  %v79 = vrsqrt.pop %v75
  %v80 = vrsqrt.pop %v76
  %v81 = vrsqrt.pop %v77
  %v82 = vrsqrt.pop %v78
  %v83 = vmul.f32 %v51, %v79
  %v84 = vmul.f32 %v52, %v80
  %v85 = vmul.f32 %v53, %v81
  %v86 = vmul.f32 %v54, %v82
  %v88 = vlaneseq
  %v89 = vshrl.u32 %v88, 7
  %v90 = vsub.s32 0, %v89
  %v91 = vrot.slane %v31, %v90
  %v93 = vmul.f32 %v83, %v91
  %v94 = vmul.f32 %v84, %v91
  %v95 = vmul.f32 %v85, %v91
  %v96 = vmul.f32 %v86, %v91
  %v98 = vlaneseq
  %v99 = vshrl.u32 %v98, 7
  %v100 = vsub.s32 0, %v99
  %v101 = vrot.slane %v32, %v100
  %v103 = vadd.f32 %v93, %v101
  %v104 = vadd.f32 %v94, %v101
  %v105 = vadd.f32 %v95, %v101
  %v106 = vadd.f32 %v96, %v101
  %v107 = vpack.c.bf16 %v104, %v103
  %v108 = vpack.c.bf16 %v106, %v105
  %v109 = vld [vmem:[%s3] sm:$0xf]
  %v110 = vld [vmem:[%s3 + $0x4] sm:$0xf]
  %v111 = vld [vmem:[%s3 + $0x8] sm:$0xf]
  %v112 = vld [vmem:[%s3 + $0xc] sm:$0xf]
  %v113 = vld [vmem:[%s4] sm:$0x1]
  %v115 = vlaneseq
  %v116 = vshrl.u32 %v115, 7
  %v117 = vsub.s32 0, %v116
  %v118 = vrot.slane %v113, %v117
  %v124 = vunpack.c.l.b16 %v109
  %v125 = vunpack.c.l.b16 %v110
  %v126 = vunpack.c.l.b16 %v111
  %v127 = vunpack.c.l.b16 %v112
  %v128 = vpack.c.b16 %v125, %v124
  %v129 = vpack.c.b16 %v127, %v126
  %v133 = vsel %vm33, %v107, 0
  %v136 = vsel %vm33, %v108, 0
  %138 = vmatprep.subr.bf16.mxu0 0
  %139 = vmatpush1.bf16.msra.mxu0 %v128
  %140 = vmatprep.subr.bf16.mxu0 0
  %141 = vmatpush1.bf16.msra.mxu0 %v129
  %142 = vmatprep.subr.bf16.mxu0 0
  %143 = vmatpush1.bf16.msra.mxu0 0
  %144 = vmatprep.subr.bf16.mxu0 0
  %145 = vmatpush1.bf16.msra.mxu0 0
  %146 = vmatprep.subr.bf16.mxu0 0
  %147 = vmatpush1.bf16.msra.mxu0 0
  %148 = vmatprep.subr.bf16.mxu0 0
  %149 = vmatpush1.bf16.msra.mxu0 0
  %150 = vmatprep.subr.bf16.mxu0 0
  %151 = vmatpush1.bf16.msra.mxu0 0
  %152 = vmatprep.subr.bf16.mxu0 0
  %153 = vmatpush1.bf16.msra.mxu0 0
  %154 = vmatprep.subr.bf16.mxu0 0
  %155 = vmatpush1.bf16.msra.mxu0 0
  %156 = vmatprep.subr.bf16.mxu0 0
  %157 = vmatpush1.bf16.msra.mxu0 0
  %158 = vmatprep.subr.bf16.mxu0 0
  %159 = vmatpush1.bf16.msra.mxu0 0
  %160 = vmatprep.subr.bf16.mxu0 0
  %161 = vmatpush1.bf16.msra.mxu0 0
  %162 = vmatprep.subr.bf16.mxu0 0
  %163 = vmatpush1.bf16.msra.mxu0 0
  %164 = vmatprep.subr.bf16.mxu0 0
  %165 = vmatpush1.bf16.msra.mxu0 0
  %166 = vmatprep.subr.bf16.mxu0 0
  %167 = vmatpush1.bf16.msra.mxu0 0
  %168 = vmatprep.subr.bf16.mxu0 0
  %169 = vmatpush1.bf16.msra.mxu0 0
  %170 = vmatprep.mubr.bf16.mxu0 0
  %171 = vmatmul.mubr.bf16.gmra.mrb[0].mxu0 %v133
  %v172 = vpop.f32.mrb[0].mxu0
  %v173 = vadd.f32 %v118, %v172
  %v174 = vpop.f32.mrb[0].mxu0
  %v175 = vpop.f32.mrb[0].mxu0
  %v176 = vadd.f32 %v118, %v175
  %v177 = vpop.f32.mrb[0].mxu0
  %178 = vmatprep.mubr.bf16.mxu0 0
  %179 = vmatmul.mubr.bf16.gmra.mrb[0].mxu0 %v136
  %v180 = vpop.f32.mrb[0].mxu0
  %v181 = vadd.f32 %v118, %v180
  %v182 = vpop.f32.mrb[0].mxu0
  %v183 = vpop.f32.mrb[0].mxu0
  %v184 = vadd.f32 %v118, %v183
  %v185 = vpop.f32.mrb[0].mxu0
  %186 = vdwg.mxu0
  %v187 = vxor.u32 %v173, 2147483648
  %v188 = vxor.u32 %v176, 2147483648
  %v189 = vxor.u32 %v181, 2147483648
  %v190 = vxor.u32 %v184, 2147483648
  %v191 = vmul.f32 %v187, 1.442695
  %v192 = vpow.pop %v191
  %v193 = vmul.f32 %v188, 1.442695
  %v194 = vpow.pop %v193
  %v195 = vmul.f32 %v189, 1.442695
  %v196 = vpow.pop %v195
  %v197 = vmul.f32 %v190, 1.442695
  %v198 = vpow.pop %v197
  %v199 = vadd.f32 %v192, 1.0
  %v200 = vadd.f32 %v194, 1.0
  %v201 = vadd.f32 %v196, 1.0
  %v202 = vadd.f32 %v198, 1.0
  %v203 = vrcp.pop %v199
  %v204 = vmul.f32 1.0, %v203
  %v205 = vrcp.pop %v200
  %v206 = vmul.f32 1.0, %v205
  %v207 = vrcp.pop %v201
  %v208 = vmul.f32 1.0, %v207
  %v209 = vrcp.pop %v202
  %v210 = vmul.f32 1.0, %v209
  %v211 = vmul.f32 %v173, %v204
  %v212 = vmul.f32 %v176, %v206
  %v213 = vmul.f32 %v181, %v208
  %v214 = vmul.f32 %v184, %v210
  %v215 = vpack.c.bf16 %v212, %v211
  %v216 = vpack.c.bf16 %v214, %v213
  %v217 = vld [vmem:[%s5] sm:$0xf]
  %v218 = vld [vmem:[%s5 + $0x4] sm:$0xf]
  %v219 = vld [vmem:[%s5 + $0x8] sm:$0xf]
  %v220 = vld [vmem:[%s5 + $0xc] sm:$0xf]
  %v221 = vld [vmem:[%s5 + $0x10] sm:$0xf]
  %v222 = vld [vmem:[%s5 + $0x14] sm:$0xf]
  %v223 = vld [vmem:[%s5 + $0x18] sm:$0xf]
  %v224 = vld [vmem:[%s5 + $0x1c] sm:$0xf]
  %v225 = vld [vmem:[%s6] sm:$0x1]
  %v227 = vlaneseq
  %v228 = vshrl.u32 %v227, 7
  %v229 = vsub.s32 0, %v228
  %v230 = vrot.slane %v225, %v229
  %v240 = vunpack.c.l.b16 %v217
  %v241 = vunpack.c.l.b16 %v218
  %v242 = vunpack.c.l.b16 %v219
  %v243 = vunpack.c.l.b16 %v220
  %v244 = vunpack.c.l.b16 %v221
  %v245 = vunpack.c.l.b16 %v222
  %v246 = vunpack.c.l.b16 %v223
  %v247 = vunpack.c.l.b16 %v224
  %v248 = vpack.c.b16 %v241, %v240
  %v249 = vpack.c.b16 %v243, %v242
  %v250 = vpack.c.b16 %v245, %v244
  %v251 = vpack.c.b16 %v247, %v246
  %vm256 = vcmask 523264
  %v258 = vsel %vm256, %v215, 0
  %v261 = vsel %vm256, %v216, 0
  %263 = vmatprep.subr.bf16.mxu0 0
  %264 = vmatpush1.bf16.msra.mxu0 %v248
  %265 = vmatprep.subr.bf16.mxu0 0
  %266 = vmatpush1.bf16.msra.mxu0 %v249
  %267 = vmatprep.subr.bf16.mxu0 0
  %268 = vmatpush1.bf16.msra.mxu0 %v250
  %269 = vmatprep.subr.bf16.mxu0 0
  %270 = vmatpush1.bf16.msra.mxu0 %v251
  %271 = vmatprep.subr.bf16.mxu0 0
  %272 = vmatpush1.bf16.msra.mxu0 0
  %273 = vmatprep.subr.bf16.mxu0 0
  %274 = vmatpush1.bf16.msra.mxu0 0
  %275 = vmatprep.subr.bf16.mxu0 0
  %276 = vmatpush1.bf16.msra.mxu0 0
  %277 = vmatprep.subr.bf16.mxu0 0
  %278 = vmatpush1.bf16.msra.mxu0 0
  %279 = vmatprep.subr.bf16.mxu0 0
  %280 = vmatpush1.bf16.msra.mxu0 0
  %281 = vmatprep.subr.bf16.mxu0 0
  %282 = vmatpush1.bf16.msra.mxu0 0
  %283 = vmatprep.subr.bf16.mxu0 0
  %284 = vmatpush1.bf16.msra.mxu0 0
  %285 = vmatprep.subr.bf16.mxu0 0
  %286 = vmatpush1.bf16.msra.mxu0 0
  %287 = vmatprep.subr.bf16.mxu0 0
  %288 = vmatpush1.bf16.msra.mxu0 0
  %289 = vmatprep.subr.bf16.mxu0 0
  %290 = vmatpush1.bf16.msra.mxu0 0
  %291 = vmatprep.subr.bf16.mxu0 0
  %292 = vmatpush1.bf16.msra.mxu0 0
  %293 = vmatprep.subr.bf16.mxu0 0
  %294 = vmatpush1.bf16.msra.mxu0 0
  %295 = vmatprep.mubr.bf16.mxu0 0
  %296 = vmatmul.mubr.bf16.gmra.mrb[0].mxu0 %v258
  %v297 = vpop.f32.mrb[0].mxu0
  %v298 = vadd.f32 %v230, %v297
  %v299 = vpop.f32.mrb[0].mxu0
  %v300 = vpop.f32.mrb[0].mxu0
  %v301 = vadd.f32 %v230, %v300
  %v302 = vpop.f32.mrb[0].mxu0
  %303 = vmatprep.mubr.bf16.mxu0 0
  %304 = vmatmul.mubr.bf16.gmra.mrb[0].mxu0 %v261
  %v305 = vpop.f32.mrb[0].mxu0
  %v306 = vadd.f32 %v230, %v305
  %v307 = vpop.f32.mrb[0].mxu0
  %v308 = vpop.f32.mrb[0].mxu0
  %v309 = vadd.f32 %v230, %v308
  %v310 = vpop.f32.mrb[0].mxu0
  %311 = vdwg.mxu0
  %v312 = vadd.f32 %v27, %v298
  %v313 = vadd.f32 %v28, %v301
  %v314 = vadd.f32 %v29, %v306
  %v315 = vadd.f32 %v30, %v309
  %316 = vst.msk [vmem:[%s7] sm:$0xff] %vm33, %v312
  %317 = vst.msk [vmem:[%s7 + $0x8] sm:$0xff] %vm33, %v313
  %318 = vst.msk [vmem:[%s7 + $0x10] sm:$0xff] %vm33, %v314
  %319 = vst.msk [vmem:[%s7 + $0x18] sm:$0xff] %vm33, %v315
  // Predicated region
  $region30: #{transformer_forward.8} parent=0 // pred_check
    _
  $region31: #{transformer_forward.8} parent=0 // pred_check_branch
    %321 = sbr.rel (0) target = $region33
  $region32: #{transformer_forward.8} parent=0 // pred_region
    _
  $region33: #{transformer_forward.8} parent=0 // pred_fallthru
    _
  // Predicated region
  $region34: #{transformer_forward.8} parent=0 // pred_check
    _
  $region35: #{transformer_forward.8} parent=0 // pred_check_branch
    %323 = sbr.rel (0) target = $region37
  $region36: #{transformer_forward.8} parent=0 // pred_region
    _
  $region37: #{transformer_forward.8} parent=0 // pred_fallthru
    _

// kernel: transformer_forward.7
$region0: #{transformer_forward.7}
  #allocation0 [shape = 'u32[]', space=smem, size = 0x4, offset = 0x4, fixed_abs, tag = 'smem constant byte address 0x4 - core index']
  #allocation1 [shape = 'u32[144,128]{1,0:T(1,128)}', space=vmem, size = 0x12000, scoped, tag = 'internal scratch']
  %s0 = inlined_call_operand.vmem [shape: bf16[4,8,96], index: 0, kind: input, shape index: {}]
  %s1 = inlined_call_operand.vmem [shape: bf16[32,32], index: 1, kind: input, shape index: {}]
  %s2 = inlined_call_operand.vmem [shape: f32[1,32], index: 2, kind: input, shape index: {}]
  %s3 = inlined_call_operand.vmem [shape: f32[4,8,32], index: 3, kind: input, shape index: {}, may-alias: {3,4}]
  %s4 = inlined_call_operand.vmem [shape: f32[4,8,32], index: 4, kind: output, shape index: {}, may-alias: {3,4}]
  %s5 = sld [smem:[#allocation0]]
  $region26: #{transformer_forward.7} parent=0
    _
  %s7 = ssub.s32 1, %s5
  %s8 = scalar_select 0, %s7, %s5
  // Predicated region
  $region2: #{transformer_forward.7} parent=0 // pred_check
    _
  $region3: #{transformer_forward.7} parent=0 // pred_check_branch
    %10 = sbr.rel (0) target = $region5
  $region4: #{transformer_forward.7} parent=0 // pred_region
    _
  $region5: #{transformer_forward.7} parent=0 // pred_fallthru
    _
  // Predicated region
  $region6: #{transformer_forward.7} parent=0 // pred_check
    _
  $region7: #{transformer_forward.7} parent=0 // pred_check_branch
    %12 = sbr.rel (0) target = $region9
  $region8: #{transformer_forward.7} parent=0 // pred_region
    _
  $region9: #{transformer_forward.7} parent=0 // pred_fallthru
    _
  // Predicated region
  $region10: #{transformer_forward.7} parent=0 // pred_check
    _
  $region11: #{transformer_forward.7} parent=0 // pred_check_branch
    %14 = sbr.rel (0) target = $region13
  $region12: #{transformer_forward.7} parent=0 // pred_region
    _
  $region13: #{transformer_forward.7} parent=0 // pred_fallthru
    _
  // Predicated region
  $region14: #{transformer_forward.7} parent=0 // pred_check
    _
  $region15: #{transformer_forward.7} parent=0 // pred_check_branch
    %16 = sbr.rel (0) target = $region17
  $region16: #{transformer_forward.7} parent=0 // pred_region
    _
  $region17: #{transformer_forward.7} parent=0 // pred_fallthru
    _
  %v18 = vld [vmem:[%s0] sm:$0xf]
  %v19 = vld [vmem:[%s0 + $0x4] sm:$0xf]
  %v20 = vld [vmem:[%s0 + $0x8] sm:$0xf]
  %v21 = vld [vmem:[%s0 + $0xc] sm:$0xf]
  %v22 = vld [vmem:[%s3] sm:$0xff]
  %v23 = vld [vmem:[%s3 + $0x8] sm:$0xff]
  %v24 = vld [vmem:[%s3 + $0x10] sm:$0xff]
  %v25 = vld [vmem:[%s3 + $0x18] sm:$0xff]
  %v26 = vld [vmem:[%s2] sm:$0x1]
  %v28 = vlaneseq
  %v29 = vshrl.u32 %v28, 7
  %v30 = vsub.s32 0, %v29
  %v31 = vrot.slane %v26, %v30
  %v33 = vadd.f32 %v22, %v31
  %v34 = vadd.f32 %v23, %v31
  %v35 = vadd.f32 %v24, %v31
  %v36 = vadd.f32 %v25, %v31
  %v38 = vunpack.c.l.b16 %v18
  %v39 = vpack.c.b16 %v38, %v38
  %40 = vrot.lane.b32.xlu0 %v39, 96
  %v41 = vpop.permute.xlu0 %40
  %vm42 = vcmask 64512
  %v44 = vsel %vm42, %v18, 0
  %v47 = vsel %vm42, %v41, 0
  %49 = vmatprep.subr.bf16.mxu0 0
  %50 = vmatpush1.bf16.xpose.msra.mxu0 %v47
  %51 = vmatprep.subr.bf16.mxu0 0
  %52 = vmatpush1.bf16.xpose.msra.mxu0 0
  %53 = vmatprep.subr.bf16.mxu0 0
  %54 = vmatpush1.bf16.xpose.msra.mxu0 0
  %55 = vmatprep.subr.bf16.mxu0 0
  %56 = vmatpush1.bf16.xpose.msra.mxu0 0
  %57 = vmatprep.subr.bf16.mxu0 0
  %58 = vmatpush1.bf16.xpose.msra.mxu0 0
  %59 = vmatprep.subr.bf16.mxu0 0
  %60 = vmatpush1.bf16.xpose.msra.mxu0 0
  %61 = vmatprep.subr.bf16.mxu0 0
  %62 = vmatpush1.bf16.xpose.msra.mxu0 0
  %63 = vmatprep.subr.bf16.mxu0 0
  %64 = vmatpush1.bf16.xpose.msra.mxu0 0
  %65 = vmatprep.subr.bf16.mxu0 0
  %66 = vmatpush1.bf16.xpose.msra.mxu0 0
  %67 = vmatprep.subr.bf16.mxu0 0
  %68 = vmatpush1.bf16.xpose.msra.mxu0 0
  %69 = vmatprep.subr.bf16.mxu0 0
  %70 = vmatpush1.bf16.xpose.msra.mxu0 0
  %71 = vmatprep.subr.bf16.mxu0 0
  %72 = vmatpush1.bf16.xpose.msra.mxu0 0
  %73 = vmatprep.subr.bf16.mxu0 0
  %74 = vmatpush1.bf16.xpose.msra.mxu0 0
  %75 = vmatprep.subr.bf16.mxu0 0
  %76 = vmatpush1.bf16.xpose.msra.mxu0 0
  %77 = vmatprep.subr.bf16.mxu0 0
  %78 = vmatpush1.bf16.xpose.msra.mxu0 0
  %79 = vmatprep.subr.bf16.mxu0 0
  %80 = vmatpush1.bf16.xpose.msra.mxu0 0
  %81 = vmatprep.mubr.bf16.mxu0 0
  %82 = vmatmul.mubr.bf16.gmra.mrb[0].mxu0 %v44
  %v83 = vpop.f32.mrb[0].mxu0
  %v84 = vadd.f32 0.0, %v83
  %v85 = vpop.f32.mrb[0].mxu0
  %v86 = vpop.f32.mrb[0].mxu0
  %v87 = vpop.f32.mrb[0].mxu0
  %88 = vdwg.mxu0
  %v90 = vunpack.c.l.b16 %v19
  %v91 = vpack.c.b16 %v90, %v90
  %92 = vrot.lane.b32.xlu0 %v91, 96
  %v93 = vpop.permute.xlu0 %92
  %v95 = vsel %vm42, %v19, 0
  %v98 = vsel %vm42, %v93, 0
  %100 = vmatprep.subr.bf16.mxu0 0
  %101 = vmatpush1.bf16.xpose.msra.mxu0 %v98
  %102 = vmatprep.subr.bf16.mxu0 0
  %103 = vmatpush1.bf16.xpose.msra.mxu0 0
  %104 = vmatprep.subr.bf16.mxu0 0
  %105 = vmatpush1.bf16.xpose.msra.mxu0 0
  %106 = vmatprep.subr.bf16.mxu0 0
  %107 = vmatpush1.bf16.xpose.msra.mxu0 0
  %108 = vmatprep.subr.bf16.mxu0 0
  %109 = vmatpush1.bf16.xpose.msra.mxu0 0
  %110 = vmatprep.subr.bf16.mxu0 0
  %111 = vmatpush1.bf16.xpose.msra.mxu0 0
  %112 = vmatprep.subr.bf16.mxu0 0
  %113 = vmatpush1.bf16.xpose.msra.mxu0 0
  %114 = vmatprep.subr.bf16.mxu0 0
  %115 = vmatpush1.bf16.xpose.msra.mxu0 0
  %116 = vmatprep.subr.bf16.mxu0 0
  %117 = vmatpush1.bf16.xpose.msra.mxu0 0
  %118 = vmatprep.subr.bf16.mxu0 0
  %119 = vmatpush1.bf16.xpose.msra.mxu0 0
  %120 = vmatprep.subr.bf16.mxu0 0
  %121 = vmatpush1.bf16.xpose.msra.mxu0 0
  %122 = vmatprep.subr.bf16.mxu0 0
  %123 = vmatpush1.bf16.xpose.msra.mxu0 0
  %124 = vmatprep.subr.bf16.mxu0 0
  %125 = vmatpush1.bf16.xpose.msra.mxu0 0
  %126 = vmatprep.subr.bf16.mxu0 0
  %127 = vmatpush1.bf16.xpose.msra.mxu0 0
  %128 = vmatprep.subr.bf16.mxu0 0
  %129 = vmatpush1.bf16.xpose.msra.mxu0 0
  %130 = vmatprep.subr.bf16.mxu0 0
  %131 = vmatpush1.bf16.xpose.msra.mxu0 0
  %132 = vmatprep.mubr.bf16.mxu0 0
  %133 = vmatmul.mubr.bf16.gmra.mrb[0].mxu0 %v95
  %v134 = vpop.f32.mrb[0].mxu0
  %v135 = vadd.f32 0.0, %v134
  %v136 = vpop.f32.mrb[0].mxu0
  %v137 = vpop.f32.mrb[0].mxu0
  %v138 = vpop.f32.mrb[0].mxu0
  %139 = vdwg.mxu0
  %v141 = vunpack.c.l.b16 %v20
  %v142 = vpack.c.b16 %v141, %v141
  %143 = vrot.lane.b32.xlu0 %v142, 96
  %v144 = vpop.permute.xlu0 %143
  %v146 = vsel %vm42, %v20, 0
  %v149 = vsel %vm42, %v144, 0
  %151 = vmatprep.subr.bf16.mxu0 0
  %152 = vmatpush1.bf16.xpose.msra.mxu0 %v149
  %153 = vmatprep.subr.bf16.mxu0 0
  %154 = vmatpush1.bf16.xpose.msra.mxu0 0
  %155 = vmatprep.subr.bf16.mxu0 0
  %156 = vmatpush1.bf16.xpose.msra.mxu0 0
  %157 = vmatprep.subr.bf16.mxu0 0
  %158 = vmatpush1.bf16.xpose.msra.mxu0 0
  %159 = vmatprep.subr.bf16.mxu0 0
  %160 = vmatpush1.bf16.xpose.msra.mxu0 0
  %161 = vmatprep.subr.bf16.mxu0 0
  %162 = vmatpush1.bf16.xpose.msra.mxu0 0
  %163 = vmatprep.subr.bf16.mxu0 0
  %164 = vmatpush1.bf16.xpose.msra.mxu0 0
  %165 = vmatprep.subr.bf16.mxu0 0
  %166 = vmatpush1.bf16.xpose.msra.mxu0 0
  %167 = vmatprep.subr.bf16.mxu0 0
  %168 = vmatpush1.bf16.xpose.msra.mxu0 0
  %169 = vmatprep.subr.bf16.mxu0 0
  %170 = vmatpush1.bf16.xpose.msra.mxu0 0
  %171 = vmatprep.subr.bf16.mxu0 0
  %172 = vmatpush1.bf16.xpose.msra.mxu0 0
  %173 = vmatprep.subr.bf16.mxu0 0
  %174 = vmatpush1.bf16.xpose.msra.mxu0 0
  %175 = vmatprep.subr.bf16.mxu0 0
  %176 = vmatpush1.bf16.xpose.msra.mxu0 0
  %177 = vmatprep.subr.bf16.mxu0 0
  %178 = vmatpush1.bf16.xpose.msra.mxu0 0
  %179 = vmatprep.subr.bf16.mxu0 0
  %180 = vmatpush1.bf16.xpose.msra.mxu0 0
  %181 = vmatprep.subr.bf16.mxu0 0
  %182 = vmatpush1.bf16.xpose.msra.mxu0 0
  %183 = vmatprep.mubr.bf16.mxu0 0
  %184 = vmatmul.mubr.bf16.gmra.mrb[0].mxu0 %v146
  %v185 = vpop.f32.mrb[0].mxu0
  %v186 = vadd.f32 0.0, %v185
  %v187 = vpop.f32.mrb[0].mxu0
  %v188 = vpop.f32.mrb[0].mxu0
  %v189 = vpop.f32.mrb[0].mxu0
  %190 = vdwg.mxu0
  %v192 = vunpack.c.l.b16 %v21
  %v193 = vpack.c.b16 %v192, %v192
  %194 = vrot.lane.b32.xlu0 %v193, 96
  %v195 = vpop.permute.xlu0 %194
  %v197 = vsel %vm42, %v21, 0
  %v200 = vsel %vm42, %v195, 0
  %202 = vmatprep.subr.bf16.mxu0 0
  %203 = vmatpush1.bf16.xpose.msra.mxu0 %v200
  %204 = vmatprep.subr.bf16.mxu0 0
  %205 = vmatpush1.bf16.xpose.msra.mxu0 0
  %206 = vmatprep.subr.bf16.mxu0 0
  %207 = vmatpush1.bf16.xpose.msra.mxu0 0
  %208 = vmatprep.subr.bf16.mxu0 0
  %209 = vmatpush1.bf16.xpose.msra.mxu0 0
  %210 = vmatprep.subr.bf16.mxu0 0
  %211 = vmatpush1.bf16.xpose.msra.mxu0 0
  %212 = vmatprep.subr.bf16.mxu0 0
  %213 = vmatpush1.bf16.xpose.msra.mxu0 0
  %214 = vmatprep.subr.bf16.mxu0 0
  %215 = vmatpush1.bf16.xpose.msra.mxu0 0
  %216 = vmatprep.subr.bf16.mxu0 0
  %217 = vmatpush1.bf16.xpose.msra.mxu0 0
  %218 = vmatprep.subr.bf16.mxu0 0
  %219 = vmatpush1.bf16.xpose.msra.mxu0 0
  %220 = vmatprep.subr.bf16.mxu0 0
  %221 = vmatpush1.bf16.xpose.msra.mxu0 0
  %222 = vmatprep.subr.bf16.mxu0 0
  %223 = vmatpush1.bf16.xpose.msra.mxu0 0
  %224 = vmatprep.subr.bf16.mxu0 0
  %225 = vmatpush1.bf16.xpose.msra.mxu0 0
  %226 = vmatprep.subr.bf16.mxu0 0
  %227 = vmatpush1.bf16.xpose.msra.mxu0 0
  %228 = vmatprep.subr.bf16.mxu0 0
  %229 = vmatpush1.bf16.xpose.msra.mxu0 0
  %230 = vmatprep.subr.bf16.mxu0 0
  %231 = vmatpush1.bf16.xpose.msra.mxu0 0
  %232 = vmatprep.subr.bf16.mxu0 0
  %233 = vmatpush1.bf16.xpose.msra.mxu0 0
  %234 = vmatprep.mubr.bf16.mxu0 0
  %235 = vmatmul.mubr.bf16.gmra.mrb[0].mxu0 %v197
  %v236 = vpop.f32.mrb[0].mxu0
  %v237 = vadd.f32 0.0, %v236
  %v238 = vpop.f32.mrb[0].mxu0
  %v239 = vpop.f32.mrb[0].mxu0
  %v240 = vpop.f32.mrb[0].mxu0
  %241 = vdwg.mxu0
  %v242 = vmul.f32 %v84, 0.35355338
  %v243 = vmul.f32 %v135, 0.35355338
  %v244 = vmul.f32 %v186, 0.35355338
  %v245 = vmul.f32 %v237, 0.35355338
  %v246 = vsel %vm42, %v242, -inf
  %247 = vmax.xlane.f32.xlu0 %v246
  %v248 = vpop.xlane.xlu0 %247
  %v249 = vsel %vm42, %v243, -inf
  %250 = vmax.xlane.f32.xlu0 %v249
  %v251 = vpop.xlane.xlu0 %250
  %v252 = vsel %vm42, %v244, -inf
  %253 = vmax.xlane.f32.xlu0 %v252
  %v254 = vpop.xlane.xlu0 %253
  %v255 = vsel %vm42, %v245, -inf
  %256 = vmax.xlane.f32.xlu0 %v255
  %v257 = vpop.xlane.xlu0 %256
  %v258 = vsub.f32 %v242, %v248
  %v259 = vsub.f32 %v243, %v251
  %v260 = vsub.f32 %v244, %v254
  %v261 = vsub.f32 %v245, %v257
  %v262 = vmul.f32 %v258, 1.442695
  %v263 = vpow.pop %v262
  %v264 = vmul.f32 %v259, 1.442695
  %v265 = vpow.pop %v264
  %v266 = vmul.f32 %v260, 1.442695
  %v267 = vpow.pop %v266
  %v268 = vmul.f32 %v261, 1.442695
  %v269 = vpow.pop %v268
  %v270 = vsel %vm42, %v263, 0.0
  %271 = vadd.xlane.f32.xlu0 %v270
  %v272 = vpop.xlane.xlu0 %271
  %v273 = vsel %vm42, %v265, 0.0
  %274 = vadd.xlane.f32.xlu0 %v273
  %v275 = vpop.xlane.xlu0 %274
  %v276 = vsel %vm42, %v267, 0.0
  %277 = vadd.xlane.f32.xlu0 %v276
  %v278 = vpop.xlane.xlu0 %277
  %v279 = vsel %vm42, %v269, 0.0
  %280 = vadd.xlane.f32.xlu0 %v279
  %v281 = vpop.xlane.xlu0 %280
  %v282 = vrcp.pop %v272
  %v283 = vrcp.pop %v275
  %v284 = vrcp.pop %v278
  %v285 = vrcp.pop %v281
  %v286 = vmul.f32 %v263, %v282
  %v287 = vmul.f32 %v265, %v283
  %v288 = vmul.f32 %v267, %v284
  %v289 = vmul.f32 %v269, %v285
  %v290 = vpack.c.bf16 %v286, %v286
  %v291 = vpack.c.bf16 %v287, %v287
  %v292 = vpack.c.bf16 %v288, %v288
  %v293 = vpack.c.bf16 %v289, %v289
  %294 = vrot.lane.b32.xlu0 %v39, 64
  %v295 = vpop.permute.xlu0 %294
  %v297 = vsel %vm42, %v290, 0
  %vm299 = vcmask 1043456
  %v301 = vsel %vm299, %v295, 0
  %303 = vmatprep.subr.bf16.mxu0 0
  %304 = vmatpush1.bf16.msra.mxu0 %v301
  %305 = vmatprep.subr.bf16.mxu0 0
  %306 = vmatpush1.bf16.msra.mxu0 0
  %307 = vmatprep.subr.bf16.mxu0 0
  %308 = vmatpush1.bf16.msra.mxu0 0
  %309 = vmatprep.subr.bf16.mxu0 0
  %310 = vmatpush1.bf16.msra.mxu0 0
  %311 = vmatprep.subr.bf16.mxu0 0
  %312 = vmatpush1.bf16.msra.mxu0 0
  %313 = vmatprep.subr.bf16.mxu0 0
  %314 = vmatpush1.bf16.msra.mxu0 0
  %315 = vmatprep.subr.bf16.mxu0 0
  %316 = vmatpush1.bf16.msra.mxu0 0
  %317 = vmatprep.subr.bf16.mxu0 0
  %318 = vmatpush1.bf16.msra.mxu0 0
  %319 = vmatprep.subr.bf16.mxu0 0
  %320 = vmatpush1.bf16.msra.mxu0 0
  %321 = vmatprep.subr.bf16.mxu0 0
  %322 = vmatpush1.bf16.msra.mxu0 0
  %323 = vmatprep.subr.bf16.mxu0 0
  %324 = vmatpush1.bf16.msra.mxu0 0
  %325 = vmatprep.subr.bf16.mxu0 0
  %326 = vmatpush1.bf16.msra.mxu0 0
  %327 = vmatprep.subr.bf16.mxu0 0
  %328 = vmatpush1.bf16.msra.mxu0 0
  %329 = vmatprep.subr.bf16.mxu0 0
  %330 = vmatpush1.bf16.msra.mxu0 0
  %331 = vmatprep.subr.bf16.mxu0 0
  %332 = vmatpush1.bf16.msra.mxu0 0
  %333 = vmatprep.subr.bf16.mxu0 0
  %334 = vmatpush1.bf16.msra.mxu0 0
  %335 = vmatprep.mubr.bf16.mxu0 0
  %336 = vmatmul.mubr.bf16.gmra.mrb[0].mxu0 %v297
  %v337 = vpop.f32.mrb[0].mxu0
  %v338 = vadd.f32 0.0, %v337
  %v339 = vpop.f32.mrb[0].mxu0
  %v340 = vpop.f32.mrb[0].mxu0
  %v341 = vpop.f32.mrb[0].mxu0
  %342 = vdwg.mxu0
  %343 = vrot.lane.b32.xlu0 %v91, 64
  %v344 = vpop.permute.xlu0 %343
  %v346 = vsel %vm42, %v291, 0
  %v349 = vsel %vm299, %v344, 0
  %351 = vmatprep.subr.bf16.mxu0 0
  %352 = vmatpush1.bf16.msra.mxu0 %v349
  %353 = vmatprep.subr.bf16.mxu0 0
  %354 = vmatpush1.bf16.msra.mxu0 0
  %355 = vmatprep.subr.bf16.mxu0 0
  %356 = vmatpush1.bf16.msra.mxu0 0
  %357 = vmatprep.subr.bf16.mxu0 0
  %358 = vmatpush1.bf16.msra.mxu0 0
  %359 = vmatprep.subr.bf16.mxu0 0
  %360 = vmatpush1.bf16.msra.mxu0 0
  %361 = vmatprep.subr.bf16.mxu0 0
  %362 = vmatpush1.bf16.msra.mxu0 0
  %363 = vmatprep.subr.bf16.mxu0 0
  %364 = vmatpush1.bf16.msra.mxu0 0
  %365 = vmatprep.subr.bf16.mxu0 0
  %366 = vmatpush1.bf16.msra.mxu0 0
  %367 = vmatprep.subr.bf16.mxu0 0
  %368 = vmatpush1.bf16.msra.mxu0 0
  %369 = vmatprep.subr.bf16.mxu0 0
  %370 = vmatpush1.bf16.msra.mxu0 0
  %371 = vmatprep.subr.bf16.mxu0 0
  %372 = vmatpush1.bf16.msra.mxu0 0
  %373 = vmatprep.subr.bf16.mxu0 0
  %374 = vmatpush1.bf16.msra.mxu0 0
  %375 = vmatprep.subr.bf16.mxu0 0
  %376 = vmatpush1.bf16.msra.mxu0 0
  %377 = vmatprep.subr.bf16.mxu0 0
  %378 = vmatpush1.bf16.msra.mxu0 0
  %379 = vmatprep.subr.bf16.mxu0 0
  %380 = vmatpush1.bf16.msra.mxu0 0
  %381 = vmatprep.subr.bf16.mxu0 0
  %382 = vmatpush1.bf16.msra.mxu0 0
  %383 = vmatprep.mubr.bf16.mxu0 0
  %384 = vmatmul.mubr.bf16.gmra.mrb[0].mxu0 %v346
  %v385 = vpop.f32.mrb[0].mxu0
  %v386 = vadd.f32 0.0, %v385
  %v387 = vpop.f32.mrb[0].mxu0
  %v388 = vpop.f32.mrb[0].mxu0
  %v389 = vpop.f32.mrb[0].mxu0
  %390 = vdwg.mxu0
  %391 = vrot.lane.b32.xlu0 %v142, 64
  %v392 = vpop.permute.xlu0 %391
  %v394 = vsel %vm42, %v292, 0
  %v397 = vsel %vm299, %v392, 0
  %399 = vmatprep.subr.bf16.mxu0 0
  %400 = vmatpush1.bf16.msra.mxu0 %v397
  %401 = vmatprep.subr.bf16.mxu0 0
  %402 = vmatpush1.bf16.msra.mxu0 0
  %403 = vmatprep.subr.bf16.mxu0 0
  %404 = vmatpush1.bf16.msra.mxu0 0
  %405 = vmatprep.subr.bf16.mxu0 0
  %406 = vmatpush1.bf16.msra.mxu0 0
  %407 = vmatprep.subr.bf16.mxu0 0
  %408 = vmatpush1.bf16.msra.mxu0 0
  %409 = vmatprep.subr.bf16.mxu0 0
  %410 = vmatpush1.bf16.msra.mxu0 0
  %411 = vmatprep.subr.bf16.mxu0 0
  %412 = vmatpush1.bf16.msra.mxu0 0
  %413 = vmatprep.subr.bf16.mxu0 0
  %414 = vmatpush1.bf16.msra.mxu0 0
  %415 = vmatprep.subr.bf16.mxu0 0
  %416 = vmatpush1.bf16.msra.mxu0 0
  %417 = vmatprep.subr.bf16.mxu0 0
  %418 = vmatpush1.bf16.msra.mxu0 0
  %419 = vmatprep.subr.bf16.mxu0 0
  %420 = vmatpush1.bf16.msra.mxu0 0
  %421 = vmatprep.subr.bf16.mxu0 0
  %422 = vmatpush1.bf16.msra.mxu0 0
  %423 = vmatprep.subr.bf16.mxu0 0
  %424 = vmatpush1.bf16.msra.mxu0 0
  %425 = vmatprep.subr.bf16.mxu0 0
  %426 = vmatpush1.bf16.msra.mxu0 0
  %427 = vmatprep.subr.bf16.mxu0 0
  %428 = vmatpush1.bf16.msra.mxu0 0
  %429 = vmatprep.subr.bf16.mxu0 0
  %430 = vmatpush1.bf16.msra.mxu0 0
  %431 = vmatprep.mubr.bf16.mxu0 0
  %432 = vmatmul.mubr.bf16.gmra.mrb[0].mxu0 %v394
  %v433 = vpop.f32.mrb[0].mxu0
  %v434 = vadd.f32 0.0, %v433
  %v435 = vpop.f32.mrb[0].mxu0
  %v436 = vpop.f32.mrb[0].mxu0
  %v437 = vpop.f32.mrb[0].mxu0
  %438 = vdwg.mxu0
  %439 = vrot.lane.b32.xlu0 %v193, 64
  %v440 = vpop.permute.xlu0 %439
  %v442 = vsel %vm42, %v293, 0
  %v445 = vsel %vm299, %v440, 0
  %447 = vmatprep.subr.bf16.mxu0 0
  %448 = vmatpush1.bf16.msra.mxu0 %v445
  %449 = vmatprep.subr.bf16.mxu0 0
  %450 = vmatpush1.bf16.msra.mxu0 0
  %451 = vmatprep.subr.bf16.mxu0 0
  %452 = vmatpush1.bf16.msra.mxu0 0
  %453 = vmatprep.subr.bf16.mxu0 0
  %454 = vmatpush1.bf16.msra.mxu0 0
  %455 = vmatprep.subr.bf16.mxu0 0
  %456 = vmatpush1.bf16.msra.mxu0 0
  %457 = vmatprep.subr.bf16.mxu0 0
  %458 = vmatpush1.bf16.msra.mxu0 0
  %459 = vmatprep.subr.bf16.mxu0 0
  %460 = vmatpush1.bf16.msra.mxu0 0
  %461 = vmatprep.subr.bf16.mxu0 0
  %462 = vmatpush1.bf16.msra.mxu0 0
  %463 = vmatprep.subr.bf16.mxu0 0
  %464 = vmatpush1.bf16.msra.mxu0 0
  %465 = vmatprep.subr.bf16.mxu0 0
  %466 = vmatpush1.bf16.msra.mxu0 0
  %467 = vmatprep.subr.bf16.mxu0 0
  %468 = vmatpush1.bf16.msra.mxu0 0
  %469 = vmatprep.subr.bf16.mxu0 0
  %470 = vmatpush1.bf16.msra.mxu0 0
  %471 = vmatprep.subr.bf16.mxu0 0
  %472 = vmatpush1.bf16.msra.mxu0 0
  %473 = vmatprep.subr.bf16.mxu0 0
  %474 = vmatpush1.bf16.msra.mxu0 0
  %475 = vmatprep.subr.bf16.mxu0 0
  %476 = vmatpush1.bf16.msra.mxu0 0
  %477 = vmatprep.subr.bf16.mxu0 0
  %478 = vmatpush1.bf16.msra.mxu0 0
  %479 = vmatprep.mubr.bf16.mxu0 0
  %480 = vmatmul.mubr.bf16.gmra.mrb[0].mxu0 %v442
  %v481 = vpop.f32.mrb[0].mxu0
  %v482 = vadd.f32 0.0, %v481
  %v483 = vpop.f32.mrb[0].mxu0
  %v484 = vpop.f32.mrb[0].mxu0
  %v485 = vpop.f32.mrb[0].mxu0
  %486 = vdwg.mxu0
  %v487 = vpack.c.bf16 %v338, %v338
  %v488 = vpack.c.bf16 %v386, %v386
  %v489 = vpack.c.bf16 %v434, %v434
  %v490 = vpack.c.bf16 %v482, %v482
  %v491 = vld [vmem:[%s1] sm:$0xf]
  %v496 = vunpack.c.l.b16 %v487
  %v497 = vunpack.c.l.b16 %v488
  %v498 = vunpack.c.l.b16 %v489
  %v499 = vunpack.c.l.b16 %v490
  %v500 = vpack.c.b16 %v497, %v496
  %v501 = vpack.c.b16 %v499, %v498
  %v503 = vsel %vm42, %v500, 0
  %v506 = vsel %vm42, %v501, 0
  %v509 = vsel %vm299, %v491, 0
  %511 = vmatprep.subr.bf16.mxu0 0
  %512 = vmatpush1.bf16.msra.mxu0 %v509
  %513 = vmatprep.subr.bf16.mxu0 0
  %514 = vmatpush1.bf16.msra.mxu0 0
  %515 = vmatprep.subr.bf16.mxu0 0
  %516 = vmatpush1.bf16.msra.mxu0 0
  %517 = vmatprep.subr.bf16.mxu0 0
  %518 = vmatpush1.bf16.msra.mxu0 0
  %519 = vmatprep.subr.bf16.mxu0 0
  %520 = vmatpush1.bf16.msra.mxu0 0
  %521 = vmatprep.subr.bf16.mxu0 0
  %522 = vmatpush1.bf16.msra.mxu0 0
  %523 = vmatprep.subr.bf16.mxu0 0
  %524 = vmatpush1.bf16.msra.mxu0 0
  %525 = vmatprep.subr.bf16.mxu0 0
  %526 = vmatpush1.bf16.msra.mxu0 0
  %527 = vmatprep.subr.bf16.mxu0 0
  %528 = vmatpush1.bf16.msra.mxu0 0
  %529 = vmatprep.subr.bf16.mxu0 0
  %530 = vmatpush1.bf16.msra.mxu0 0
  %531 = vmatprep.subr.bf16.mxu0 0
  %532 = vmatpush1.bf16.msra.mxu0 0
  %533 = vmatprep.subr.bf16.mxu0 0
  %534 = vmatpush1.bf16.msra.mxu0 0
  %535 = vmatprep.subr.bf16.mxu0 0
  %536 = vmatpush1.bf16.msra.mxu0 0
  %537 = vmatprep.subr.bf16.mxu0 0
  %538 = vmatpush1.bf16.msra.mxu0 0
  %539 = vmatprep.subr.bf16.mxu0 0
  %540 = vmatpush1.bf16.msra.mxu0 0
  %541 = vmatprep.subr.bf16.mxu0 0
  %542 = vmatpush1.bf16.msra.mxu0 0
  %543 = vmatprep.mubr.bf16.mxu0 0
  %544 = vmatmul.mubr.bf16.gmra.mrb[0].mxu0 %v503
  %v545 = vpop.f32.mrb[0].mxu0
  %v546 = vadd.f32 0.0, %v545
  %v547 = vpop.f32.mrb[0].mxu0
  %v548 = vpop.f32.mrb[0].mxu0
  %v549 = vadd.f32 0.0, %v548
  %v550 = vpop.f32.mrb[0].mxu0
  %551 = vmatprep.mubr.bf16.mxu0 0
  %552 = vmatmul.mubr.bf16.gmra.mrb[0].mxu0 %v506
  %v553 = vpop.f32.mrb[0].mxu0
  %v554 = vadd.f32 0.0, %v553
  %v555 = vpop.f32.mrb[0].mxu0
  %v556 = vpop.f32.mrb[0].mxu0
  %v557 = vadd.f32 0.0, %v556
  %v558 = vpop.f32.mrb[0].mxu0
  %559 = vdwg.mxu0
  %v560 = vadd.f32 %v33, %v546
  %v561 = vadd.f32 %v34, %v549
  %v562 = vadd.f32 %v35, %v554
  %v563 = vadd.f32 %v36, %v557
  %564 = vrot.lane.b32.xlu0 %v39, 120
  %v565 = vpop.permute.xlu0 %564
  %566 = vrot.lane.b32.xlu0 %v39, 88
  %v567 = vpop.permute.xlu0 %566
  %v569 = vsel %vm42, %v565, 0
  %v572 = vsel %vm42, %v567, 0
  %574 = vmatprep.subr.bf16.mxu0 0
  %575 = vmatpush1.bf16.xpose.msra.mxu0 %v572
  %576 = vmatprep.subr.bf16.mxu0 0
  %577 = vmatpush1.bf16.xpose.msra.mxu0 0
  %578 = vmatprep.subr.bf16.mxu0 0
  %579 = vmatpush1.bf16.xpose.msra.mxu0 0
  %580 = vmatprep.subr.bf16.mxu0 0
  %581 = vmatpush1.bf16.xpose.msra.mxu0 0
  %582 = vmatprep.subr.bf16.mxu0 0
  %583 = vmatpush1.bf16.xpose.msra.mxu0 0
  %584 = vmatprep.subr.bf16.mxu0 0
  %585 = vmatpush1.bf16.xpose.msra.mxu0 0
  %586 = vmatprep.subr.bf16.mxu0 0
  %587 = vmatpush1.bf16.xpose.msra.mxu0 0
  %588 = vmatprep.subr.bf16.mxu0 0
  %589 = vmatpush1.bf16.xpose.msra.mxu0 0
  %590 = vmatprep.subr.bf16.mxu0 0
  %591 = vmatpush1.bf16.xpose.msra.mxu0 0
  %592 = vmatprep.subr.bf16.mxu0 0
  %593 = vmatpush1.bf16.xpose.msra.mxu0 0
  %594 = vmatprep.subr.bf16.mxu0 0
  %595 = vmatpush1.bf16.xpose.msra.mxu0 0
  %596 = vmatprep.subr.bf16.mxu0 0
  %597 = vmatpush1.bf16.xpose.msra.mxu0 0
  %598 = vmatprep.subr.bf16.mxu0 0
  %599 = vmatpush1.bf16.xpose.msra.mxu0 0
  %600 = vmatprep.subr.bf16.mxu0 0
  %601 = vmatpush1.bf16.xpose.msra.mxu0 0
  %602 = vmatprep.subr.bf16.mxu0 0
  %603 = vmatpush1.bf16.xpose.msra.mxu0 0
  %604 = vmatprep.subr.bf16.mxu0 0
  %605 = vmatpush1.bf16.xpose.msra.mxu0 0
  %606 = vmatprep.mubr.bf16.mxu0 0
  %607 = vmatmul.mubr.bf16.gmra.mrb[0].mxu0 %v569
  %v608 = vpop.f32.mrb[0].mxu0
  %v609 = vadd.f32 0.0, %v608
  %v610 = vpop.f32.mrb[0].mxu0
  %v611 = vpop.f32.mrb[0].mxu0
  %v612 = vpop.f32.mrb[0].mxu0
  %613 = vdwg.mxu0
  %614 = vrot.lane.b32.xlu0 %v91, 120
  %v615 = vpop.permute.xlu0 %614
  %616 = vrot.lane.b32.xlu0 %v91, 88
  %v617 = vpop.permute.xlu0 %616
  %v619 = vsel %vm42, %v615, 0
  %v622 = vsel %vm42, %v617, 0
  %624 = vmatprep.subr.bf16.mxu0 0
  %625 = vmatpush1.bf16.xpose.msra.mxu0 %v622
  %626 = vmatprep.subr.bf16.mxu0 0
  %627 = vmatpush1.bf16.xpose.msra.mxu0 0
  %628 = vmatprep.subr.bf16.mxu0 0
  %629 = vmatpush1.bf16.xpose.msra.mxu0 0
  %630 = vmatprep.subr.bf16.mxu0 0
  %631 = vmatpush1.bf16.xpose.msra.mxu0 0
  %632 = vmatprep.subr.bf16.mxu0 0
  %633 = vmatpush1.bf16.xpose.msra.mxu0 0
  %634 = vmatprep.subr.bf16.mxu0 0
  %635 = vmatpush1.bf16.xpose.msra.mxu0 0
  %636 = vmatprep.subr.bf16.mxu0 0
  %637 = vmatpush1.bf16.xpose.msra.mxu0 0
  %638 = vmatprep.subr.bf16.mxu0 0
  %639 = vmatpush1.bf16.xpose.msra.mxu0 0
  %640 = vmatprep.subr.bf16.mxu0 0
  %641 = vmatpush1.bf16.xpose.msra.mxu0 0
  %642 = vmatprep.subr.bf16.mxu0 0
  %643 = vmatpush1.bf16.xpose.msra.mxu0 0
  %644 = vmatprep.subr.bf16.mxu0 0
  %645 = vmatpush1.bf16.xpose.msra.mxu0 0
  %646 = vmatprep.subr.bf16.mxu0 0
  %647 = vmatpush1.bf16.xpose.msra.mxu0 0
  %648 = vmatprep.subr.bf16.mxu0 0
  %649 = vmatpush1.bf16.xpose.msra.mxu0 0
  %650 = vmatprep.subr.bf16.mxu0 0
  %651 = vmatpush1.bf16.xpose.msra.mxu0 0
  %652 = vmatprep.subr.bf16.mxu0 0
  %653 = vmatpush1.bf16.xpose.msra.mxu0 0
  %654 = vmatprep.subr.bf16.mxu0 0
  %655 = vmatpush1.bf16.xpose.msra.mxu0 0
  %656 = vmatprep.mubr.bf16.mxu0 0
  %657 = vmatmul.mubr.bf16.gmra.mrb[0].mxu0 %v619
  %v658 = vpop.f32.mrb[0].mxu0
  %v659 = vadd.f32 0.0, %v658
  %v660 = vpop.f32.mrb[0].mxu0
  %v661 = vpop.f32.mrb[0].mxu0
  %v662 = vpop.f32.mrb[0].mxu0
  %663 = vdwg.mxu0
  %664 = vrot.lane.b32.xlu0 %v142, 120
  %v665 = vpop.permute.xlu0 %664
  %666 = vrot.lane.b32.xlu0 %v142, 88
  %v667 = vpop.permute.xlu0 %666
  %v669 = vsel %vm42, %v665, 0
  %v672 = vsel %vm42, %v667, 0
  %674 = vmatprep.subr.bf16.mxu0 0
  %675 = vmatpush1.bf16.xpose.msra.mxu0 %v672
  %676 = vmatprep.subr.bf16.mxu0 0
  %677 = vmatpush1.bf16.xpose.msra.mxu0 0
  %678 = vmatprep.subr.bf16.mxu0 0
  %679 = vmatpush1.bf16.xpose.msra.mxu0 0
  %680 = vmatprep.subr.bf16.mxu0 0
  %681 = vmatpush1.bf16.xpose.msra.mxu0 0
  %682 = vmatprep.subr.bf16.mxu0 0
  %683 = vmatpush1.bf16.xpose.msra.mxu0 0
  %684 = vmatprep.subr.bf16.mxu0 0
  %685 = vmatpush1.bf16.xpose.msra.mxu0 0
  %686 = vmatprep.subr.bf16.mxu0 0
  %687 = vmatpush1.bf16.xpose.msra.mxu0 0
  %688 = vmatprep.subr.bf16.mxu0 0
  %689 = vmatpush1.bf16.xpose.msra.mxu0 0
  %690 = vmatprep.subr.bf16.mxu0 0
  %691 = vmatpush1.bf16.xpose.msra.mxu0 0
  %692 = vmatprep.subr.bf16.mxu0 0
  %693 = vmatpush1.bf16.xpose.msra.mxu0 0
  %694 = vmatprep.subr.bf16.mxu0 0
  %695 = vmatpush1.bf16.xpose.msra.mxu0 0
  %696 = vmatprep.subr.bf16.mxu0 0
  %697 = vmatpush1.bf16.xpose.msra.mxu0 0
  %698 = vmatprep.subr.bf16.mxu0 0
  %699 = vmatpush1.bf16.xpose.msra.mxu0 0
  %700 = vmatprep.subr.bf16.mxu0 0
  %701 = vmatpush1.bf16.xpose.msra.mxu0 0
  %702 = vmatprep.subr.bf16.mxu0 0
  %703 = vmatpush1.bf16.xpose.msra.mxu0 0
  %704 = vmatprep.subr.bf16.mxu0 0
  %705 = vmatpush1.bf16.xpose.msra.mxu0 0
  %706 = vmatprep.mubr.bf16.mxu0 0
  %707 = vmatmul.mubr.bf16.gmra.mrb[0].mxu0 %v669
  %v708 = vpop.f32.mrb[0].mxu0
  %v709 = vadd.f32 0.0, %v708
  %v710 = vpop.f32.mrb[0].mxu0
  %v711 = vpop.f32.mrb[0].mxu0
  %v712 = vpop.f32.mrb[0].mxu0
  %713 = vdwg.mxu0
  %714 = vrot.lane.b32.xlu0 %v193, 120
  %v715 = vpop.permute.xlu0 %714
  %716 = vrot.lane.b32.xlu0 %v193, 88
  %v717 = vpop.permute.xlu0 %716
  %v719 = vsel %vm42, %v715, 0
  %v722 = vsel %vm42, %v717, 0
  %724 = vmatprep.subr.bf16.mxu0 0
  %725 = vmatpush1.bf16.xpose.msra.mxu0 %v722
  %726 = vmatprep.subr.bf16.mxu0 0
  %727 = vmatpush1.bf16.xpose.msra.mxu0 0
  %728 = vmatprep.subr.bf16.mxu0 0
  %729 = vmatpush1.bf16.xpose.msra.mxu0 0
  %730 = vmatprep.subr.bf16.mxu0 0
  %731 = vmatpush1.bf16.xpose.msra.mxu0 0
  %732 = vmatprep.subr.bf16.mxu0 0
  %733 = vmatpush1.bf16.xpose.msra.mxu0 0
  %734 = vmatprep.subr.bf16.mxu0 0
  %735 = vmatpush1.bf16.xpose.msra.mxu0 0
  %736 = vmatprep.subr.bf16.mxu0 0
  %737 = vmatpush1.bf16.xpose.msra.mxu0 0
  %738 = vmatprep.subr.bf16.mxu0 0
  %739 = vmatpush1.bf16.xpose.msra.mxu0 0
  %740 = vmatprep.subr.bf16.mxu0 0
  %741 = vmatpush1.bf16.xpose.msra.mxu0 0
  %742 = vmatprep.subr.bf16.mxu0 0
  %743 = vmatpush1.bf16.xpose.msra.mxu0 0
  %744 = vmatprep.subr.bf16.mxu0 0
  %745 = vmatpush1.bf16.xpose.msra.mxu0 0
  %746 = vmatprep.subr.bf16.mxu0 0
  %747 = vmatpush1.bf16.xpose.msra.mxu0 0
  %748 = vmatprep.subr.bf16.mxu0 0
  %749 = vmatpush1.bf16.xpose.msra.mxu0 0
  %750 = vmatprep.subr.bf16.mxu0 0
  %751 = vmatpush1.bf16.xpose.msra.mxu0 0
  %752 = vmatprep.subr.bf16.mxu0 0
  %753 = vmatpush1.bf16.xpose.msra.mxu0 0
  %754 = vmatprep.subr.bf16.mxu0 0
  %755 = vmatpush1.bf16.xpose.msra.mxu0 0
  %756 = vmatprep.mubr.bf16.mxu0 0
  %757 = vmatmul.mubr.bf16.gmra.mrb[0].mxu0 %v719
  %v758 = vpop.f32.mrb[0].mxu0
  %v759 = vadd.f32 0.0, %v758
  %v760 = vpop.f32.mrb[0].mxu0
  %v761 = vpop.f32.mrb[0].mxu0
  %v762 = vpop.f32.mrb[0].mxu0
  %763 = vdwg.mxu0
  %v764 = vmul.f32 %v609, 0.35355338
  %v765 = vmul.f32 %v659, 0.35355338
  %v766 = vmul.f32 %v709, 0.35355338
  %v767 = vmul.f32 %v759, 0.35355338
  %v768 = vsel %vm42, %v764, -inf
  %769 = vmax.xlane.f32.xlu0 %v768
  %v770 = vpop.xlane.xlu0 %769
  %v771 = vsel %vm42, %v765, -inf
  %772 = vmax.xlane.f32.xlu0 %v771
  %v773 = vpop.xlane.xlu0 %772
  %v774 = vsel %vm42, %v766, -inf
  %775 = vmax.xlane.f32.xlu0 %v774
  %v776 = vpop.xlane.xlu0 %775
  %v777 = vsel %vm42, %v767, -inf
  %778 = vmax.xlane.f32.xlu0 %v777
  %v779 = vpop.xlane.xlu0 %778
  %v780 = vsub.f32 %v764, %v770
  %v781 = vsub.f32 %v765, %v773
  %v782 = vsub.f32 %v766, %v776
  %v783 = vsub.f32 %v767, %v779
  %v784 = vmul.f32 %v780, 1.442695
  %v785 = vpow.pop %v784
  %v786 = vmul.f32 %v781, 1.442695
  %v787 = vpow.pop %v786
  %v788 = vmul.f32 %v782, 1.442695
  %v789 = vpow.pop %v788
  %v790 = vmul.f32 %v783, 1.442695
  %v791 = vpow.pop %v790
  %v792 = vsel %vm42, %v785, 0.0
  %793 = vadd.xlane.f32.xlu0 %v792
  %v794 = vpop.xlane.xlu0 %793
  %v795 = vsel %vm42, %v787, 0.0
  %796 = vadd.xlane.f32.xlu0 %v795
  %v797 = vpop.xlane.xlu0 %796
  %v798 = vsel %vm42, %v789, 0.0
  %799 = vadd.xlane.f32.xlu0 %v798
  %v800 = vpop.xlane.xlu0 %799
  %v801 = vsel %vm42, %v791, 0.0
  %802 = vadd.xlane.f32.xlu0 %v801
  %v803 = vpop.xlane.xlu0 %802
  %v804 = vrcp.pop %v794
  %v805 = vrcp.pop %v797
  %v806 = vrcp.pop %v800
  %v807 = vrcp.pop %v803
  %v808 = vmul.f32 %v785, %v804
  %v809 = vmul.f32 %v787, %v805
  %v810 = vmul.f32 %v789, %v806
  %v811 = vmul.f32 %v791, %v807
  %v812 = vpack.c.bf16 %v808, %v808
  %v813 = vpack.c.bf16 %v809, %v809
  %v814 = vpack.c.bf16 %v810, %v810
  %v815 = vpack.c.bf16 %v811, %v811
  %816 = vrot.lane.b32.xlu0 %v39, 56
  %v817 = vpop.permute.xlu0 %816
  %v819 = vsel %vm42, %v812, 0
  %v822 = vsel %vm299, %v817, 0
  %824 = vmatprep.subr.bf16.mxu0 0
  %825 = vmatpush1.bf16.msra.mxu0 %v822
  %826 = vmatprep.subr.bf16.mxu0 0
  %827 = vmatpush1.bf16.msra.mxu0 0
  %828 = vmatprep.subr.bf16.mxu0 0
  %829 = vmatpush1.bf16.msra.mxu0 0
  %830 = vmatprep.subr.bf16.mxu0 0
  %831 = vmatpush1.bf16.msra.mxu0 0
  %832 = vmatprep.subr.bf16.mxu0 0
  %833 = vmatpush1.bf16.msra.mxu0 0
  %834 = vmatprep.subr.bf16.mxu0 0
  %835 = vmatpush1.bf16.msra.mxu0 0
  %836 = vmatprep.subr.bf16.mxu0 0
  %837 = vmatpush1.bf16.msra.mxu0 0
  %838 = vmatprep.subr.bf16.mxu0 0
  %839 = vmatpush1.bf16.msra.mxu0 0
  %840 = vmatprep.subr.bf16.mxu0 0
  %841 = vmatpush1.bf16.msra.mxu0 0
  %842 = vmatprep.subr.bf16.mxu0 0
  %843 = vmatpush1.bf16.msra.mxu0 0
  %844 = vmatprep.subr.bf16.mxu0 0
  %845 = vmatpush1.bf16.msra.mxu0 0
  %846 = vmatprep.subr.bf16.mxu0 0
  %847 = vmatpush1.bf16.msra.mxu0 0
  %848 = vmatprep.subr.bf16.mxu0 0
  %849 = vmatpush1.bf16.msra.mxu0 0
  %850 = vmatprep.subr.bf16.mxu0 0
  %851 = vmatpush1.bf16.msra.mxu0 0
  %852 = vmatprep.subr.bf16.mxu0 0
  %853 = vmatpush1.bf16.msra.mxu0 0
  %854 = vmatprep.subr.bf16.mxu0 0
  %855 = vmatpush1.bf16.msra.mxu0 0
  %856 = vmatprep.mubr.bf16.mxu0 0
  %857 = vmatmul.mubr.bf16.gmra.mrb[0].mxu0 %v819
  %v858 = vpop.f32.mrb[0].mxu0
  %v859 = vadd.f32 0.0, %v858
  %v860 = vpop.f32.mrb[0].mxu0
  %v861 = vpop.f32.mrb[0].mxu0
  %v862 = vpop.f32.mrb[0].mxu0
  %863 = vdwg.mxu0
  %864 = vrot.lane.b32.xlu0 %v91, 56
  %v865 = vpop.permute.xlu0 %864
  %v867 = vsel %vm42, %v813, 0
  %v870 = vsel %vm299, %v865, 0
  %872 = vmatprep.subr.bf16.mxu0 0
  %873 = vmatpush1.bf16.msra.mxu0 %v870
  %874 = vmatprep.subr.bf16.mxu0 0
  %875 = vmatpush1.bf16.msra.mxu0 0
  %876 = vmatprep.subr.bf16.mxu0 0
  %877 = vmatpush1.bf16.msra.mxu0 0
  %878 = vmatprep.subr.bf16.mxu0 0
  %879 = vmatpush1.bf16.msra.mxu0 0
  %880 = vmatprep.subr.bf16.mxu0 0
  %881 = vmatpush1.bf16.msra.mxu0 0
  %882 = vmatprep.subr.bf16.mxu0 0
  %883 = vmatpush1.bf16.msra.mxu0 0
  %884 = vmatprep.subr.bf16.mxu0 0
  %885 = vmatpush1.bf16.msra.mxu0 0
  %886 = vmatprep.subr.bf16.mxu0 0
  %887 = vmatpush1.bf16.msra.mxu0 0
  %888 = vmatprep.subr.bf16.mxu0 0
  %889 = vmatpush1.bf16.msra.mxu0 0
  %890 = vmatprep.subr.bf16.mxu0 0
  %891 = vmatpush1.bf16.msra.mxu0 0
  %892 = vmatprep.subr.bf16.mxu0 0
  %893 = vmatpush1.bf16.msra.mxu0 0
  %894 = vmatprep.subr.bf16.mxu0 0
  %895 = vmatpush1.bf16.msra.mxu0 0
  %896 = vmatprep.subr.bf16.mxu0 0
  %897 = vmatpush1.bf16.msra.mxu0 0
  %898 = vmatprep.subr.bf16.mxu0 0
  %899 = vmatpush1.bf16.msra.mxu0 0
  %900 = vmatprep.subr.bf16.mxu0 0
  %901 = vmatpush1.bf16.msra.mxu0 0
  %902 = vmatprep.subr.bf16.mxu0 0
  %903 = vmatpush1.bf16.msra.mxu0 0
  %904 = vmatprep.mubr.bf16.mxu0 0
  %905 = vmatmul.mubr.bf16.gmra.mrb[0].mxu0 %v867
  %v906 = vpop.f32.mrb[0].mxu0
  %v907 = vadd.f32 0.0, %v906
  %v908 = vpop.f32.mrb[0].mxu0
  %v909 = vpop.f32.mrb[0].mxu0
  %v910 = vpop.f32.mrb[0].mxu0
  %911 = vdwg.mxu0
  %912 = vrot.lane.b32.xlu0 %v142, 56
  %v913 = vpop.permute.xlu0 %912
  %v915 = vsel %vm42, %v814, 0
  %v918 = vsel %vm299, %v913, 0
  %920 = vmatprep.subr.bf16.mxu0 0
  %921 = vmatpush1.bf16.msra.mxu0 %v918
  %922 = vmatprep.subr.bf16.mxu0 0
  %923 = vmatpush1.bf16.msra.mxu0 0
  %924 = vmatprep.subr.bf16.mxu0 0
  %925 = vmatpush1.bf16.msra.mxu0 0
  %926 = vmatprep.subr.bf16.mxu0 0
  %927 = vmatpush1.bf16.msra.mxu0 0
  %928 = vmatprep.subr.bf16.mxu0 0
  %929 = vmatpush1.bf16.msra.mxu0 0
  %930 = vmatprep.subr.bf16.mxu0 0
  %931 = vmatpush1.bf16.msra.mxu0 0
  %932 = vmatprep.subr.bf16.mxu0 0
  %933 = vmatpush1.bf16.msra.mxu0 0
  %934 = vmatprep.subr.bf16.mxu0 0
  %935 = vmatpush1.bf16.msra.mxu0 0
  %936 = vmatprep.subr.bf16.mxu0 0
  %937 = vmatpush1.bf16.msra.mxu0 0
  %938 = vmatprep.subr.bf16.mxu0 0
  %939 = vmatpush1.bf16.msra.mxu0 0
  %940 = vmatprep.subr.bf16.mxu0 0
  %941 = vmatpush1.bf16.msra.mxu0 0
  %942 = vmatprep.subr.bf16.mxu0 0
  %943 = vmatpush1.bf16.msra.mxu0 0
  %944 = vmatprep.subr.bf16.mxu0 0
  %945 = vmatpush1.bf16.msra.mxu0 0
  %946 = vmatprep.subr.bf16.mxu0 0
  %947 = vmatpush1.bf16.msra.mxu0 0
  %948 = vmatprep.subr.bf16.mxu0 0
  %949 = vmatpush1.bf16.msra.mxu0 0
  %950 = vmatprep.subr.bf16.mxu0 0
  %951 = vmatpush1.bf16.msra.mxu0 0
  %952 = vmatprep.mubr.bf16.mxu0 0
  %953 = vmatmul.mubr.bf16.gmra.mrb[0].mxu0 %v915
  %v954 = vpop.f32.mrb[0].mxu0
  %v955 = vadd.f32 0.0, %v954
  %v956 = vpop.f32.mrb[0].mxu0
  %v957 = vpop.f32.mrb[0].mxu0
  %v958 = vpop.f32.mrb[0].mxu0
  %959 = vdwg.mxu0
  %960 = vrot.lane.b32.xlu0 %v193, 56
  %v961 = vpop.permute.xlu0 %960
  %v963 = vsel %vm42, %v815, 0
  %v966 = vsel %vm299, %v961, 0
  %968 = vmatprep.subr.bf16.mxu0 0
  %969 = vmatpush1.bf16.msra.mxu0 %v966
  %970 = vmatprep.subr.bf16.mxu0 0
  %971 = vmatpush1.bf16.msra.mxu0 0
  %972 = vmatprep.subr.bf16.mxu0 0
  %973 = vmatpush1.bf16.msra.mxu0 0
  %974 = vmatprep.subr.bf16.mxu0 0
  %975 = vmatpush1.bf16.msra.mxu0 0
  %976 = vmatprep.subr.bf16.mxu0 0
  %977 = vmatpush1.bf16.msra.mxu0 0
  %978 = vmatprep.subr.bf16.mxu0 0
  %979 = vmatpush1.bf16.msra.mxu0 0
  %980 = vmatprep.subr.bf16.mxu0 0
  %981 = vmatpush1.bf16.msra.mxu0 0
  %982 = vmatprep.subr.bf16.mxu0 0
  %983 = vmatpush1.bf16.msra.mxu0 0
  %984 = vmatprep.subr.bf16.mxu0 0
  %985 = vmatpush1.bf16.msra.mxu0 0
  %986 = vmatprep.subr.bf16.mxu0 0
  %987 = vmatpush1.bf16.msra.mxu0 0
  %988 = vmatprep.subr.bf16.mxu0 0
  %989 = vmatpush1.bf16.msra.mxu0 0
  %990 = vmatprep.subr.bf16.mxu0 0
  %991 = vmatpush1.bf16.msra.mxu0 0
  %992 = vmatprep.subr.bf16.mxu0 0
  %993 = vmatpush1.bf16.msra.mxu0 0
  %994 = vmatprep.subr.bf16.mxu0 0
  %995 = vmatpush1.bf16.msra.mxu0 0
  %996 = vmatprep.subr.bf16.mxu0 0
  %997 = vmatpush1.bf16.msra.mxu0 0
  %998 = vmatprep.subr.bf16.mxu0 0
  %999 = vmatpush1.bf16.msra.mxu0 0
  %1000 = vmatprep.mubr.bf16.mxu0 0
  %1001 = vmatmul.mubr.bf16.gmra.mrb[0].mxu0 %v963
  %v1002 = vpop.f32.mrb[0].mxu0
  %v1003 = vadd.f32 0.0, %v1002
  %v1004 = vpop.f32.mrb[0].mxu0
  %v1005 = vpop.f32.mrb[0].mxu0
  %v1006 = vpop.f32.mrb[0].mxu0
  %1007 = vdwg.mxu0
  %v1008 = vpack.c.bf16 %v859, %v859
  %v1009 = vpack.c.bf16 %v907, %v907
  %v1010 = vpack.c.bf16 %v955, %v955
  %v1011 = vpack.c.bf16 %v1003, %v1003
  %v1012 = vld [vmem:[%s1 + $0x4] sm:$0xf]
  %v1017 = vunpack.c.l.b16 %v1008
  %v1018 = vunpack.c.l.b16 %v1009
  %v1019 = vunpack.c.l.b16 %v1010
  %v1020 = vunpack.c.l.b16 %v1011
  %v1021 = vpack.c.b16 %v1018, %v1017
  %v1022 = vpack.c.b16 %v1020, %v1019
  %v1024 = vsel %vm42, %v1021, 0
  %v1027 = vsel %vm42, %v1022, 0
  %v1030 = vsel %vm299, %v1012, 0
  %1032 = vmatprep.subr.bf16.mxu0 0
  %1033 = vmatpush1.bf16.msra.mxu0 %v1030
  %1034 = vmatprep.subr.bf16.mxu0 0
  %1035 = vmatpush1.bf16.msra.mxu0 0
  %1036 = vmatprep.subr.bf16.mxu0 0
  %1037 = vmatpush1.bf16.msra.mxu0 0
  %1038 = vmatprep.subr.bf16.mxu0 0
  %1039 = vmatpush1.bf16.msra.mxu0 0
  %1040 = vmatprep.subr.bf16.mxu0 0
  %1041 = vmatpush1.bf16.msra.mxu0 0
  %1042 = vmatprep.subr.bf16.mxu0 0
  %1043 = vmatpush1.bf16.msra.mxu0 0
  %1044 = vmatprep.subr.bf16.mxu0 0
  %1045 = vmatpush1.bf16.msra.mxu0 0
  %1046 = vmatprep.subr.bf16.mxu0 0
  %1047 = vmatpush1.bf16.msra.mxu0 0
  %1048 = vmatprep.subr.bf16.mxu0 0
  %1049 = vmatpush1.bf16.msra.mxu0 0
  %1050 = vmatprep.subr.bf16.mxu0 0
  %1051 = vmatpush1.bf16.msra.mxu0 0
  %1052 = vmatprep.subr.bf16.mxu0 0
  %1053 = vmatpush1.bf16.msra.mxu0 0
  %1054 = vmatprep.subr.bf16.mxu0 0
  %1055 = vmatpush1.bf16.msra.mxu0 0
  %1056 = vmatprep.subr.bf16.mxu0 0
  %1057 = vmatpush1.bf16.msra.mxu0 0
  %1058 = vmatprep.subr.bf16.mxu0 0
  %1059 = vmatpush1.bf16.msra.mxu0 0
  %1060 = vmatprep.subr.bf16.mxu0 0
  %1061 = vmatpush1.bf16.msra.mxu0 0
  %1062 = vmatprep.subr.bf16.mxu0 0
  %1063 = vmatpush1.bf16.msra.mxu0 0
  %1064 = vmatprep.mubr.bf16.mxu0 0
  %1065 = vmatmul.mubr.bf16.gmra.mrb[0].mxu0 %v1024
  %v1066 = vpop.f32.mrb[0].mxu0
  %v1067 = vadd.f32 0.0, %v1066
  %v1068 = vpop.f32.mrb[0].mxu0
  %v1069 = vpop.f32.mrb[0].mxu0
  %v1070 = vadd.f32 0.0, %v1069
  %v1071 = vpop.f32.mrb[0].mxu0
  %1072 = vmatprep.mubr.bf16.mxu0 0
  %1073 = vmatmul.mubr.bf16.gmra.mrb[0].mxu0 %v1027
  %v1074 = vpop.f32.mrb[0].mxu0
  %v1075 = vadd.f32 0.0, %v1074
  %v1076 = vpop.f32.mrb[0].mxu0
  %v1077 = vpop.f32.mrb[0].mxu0
  %v1078 = vadd.f32 0.0, %v1077
  %v1079 = vpop.f32.mrb[0].mxu0
  %1080 = vdwg.mxu0
  %v1081 = vadd.f32 %v560, %v1067
  %v1082 = vadd.f32 %v561, %v1070
  %v1083 = vadd.f32 %v562, %v1075
  %v1084 = vadd.f32 %v563, %v1078
  %1085 = vrot.lane.b32.xlu0 %v39, 112
  %v1086 = vpop.permute.xlu0 %1085
  %1087 = vrot.lane.b32.xlu0 %v39, 80
  %v1088 = vpop.permute.xlu0 %1087
  %v1090 = vsel %vm42, %v1086, 0
  %v1093 = vsel %vm42, %v1088, 0
  %1095 = vmatprep.subr.bf16.mxu0 0
  %1096 = vmatpush1.bf16.xpose.msra.mxu0 %v1093
  %1097 = vmatprep.subr.bf16.mxu0 0
  %1098 = vmatpush1.bf16.xpose.msra.mxu0 0
  %1099 = vmatprep.subr.bf16.mxu0 0
  %1100 = vmatpush1.bf16.xpose.msra.mxu0 0
  %1101 = vmatprep.subr.bf16.mxu0 0
  %1102 = vmatpush1.bf16.xpose.msra.mxu0 0
  %1103 = vmatprep.subr.bf16.mxu0 0
  %1104 = vmatpush1.bf16.xpose.msra.mxu0 0
  %1105 = vmatprep.subr.bf16.mxu0 0
  %1106 = vmatpush1.bf16.xpose.msra.mxu0 0
  %1107 = vmatprep.subr.bf16.mxu0 0
  %1108 = vmatpush1.bf16.xpose.msra.mxu0 0
  %1109 = vmatprep.subr.bf16.mxu0 0
  %1110 = vmatpush1.bf16.xpose.msra.mxu0 0
  %1111 = vmatprep.subr.bf16.mxu0 0
  %1112 = vmatpush1.bf16.xpose.msra.mxu0 0
  %1113 = vmatprep.subr.bf16.mxu0 0
  %1114 = vmatpush1.bf16.xpose.msra.mxu0 0
  %1115 = vmatprep.subr.bf16.mxu0 0
  %1116 = vmatpush1.bf16.xpose.msra.mxu0 0
  %1117 = vmatprep.subr.bf16.mxu0 0
  %1118 = vmatpush1.bf16.xpose.msra.mxu0 0
  %1119 = vmatprep.subr.bf16.mxu0 0
  %1120 = vmatpush1.bf16.xpose.msra.mxu0 0
  %1121 = vmatprep.subr.bf16.mxu0 0
  %1122 = vmatpush1.bf16.xpose.msra.mxu0 0
  %1123 = vmatprep.subr.bf16.mxu0 0
  %1124 = vmatpush1.bf16.xpose.msra.mxu0 0
  %1125 = vmatprep.subr.bf16.mxu0 0
  %1126 = vmatpush1.bf16.xpose.msra.mxu0 0
  %1127 = vmatprep.mubr.bf16.mxu0 0
  %1128 = vmatmul.mubr.bf16.gmra.mrb[0].mxu0 %v1090
  %v1129 = vpop.f32.mrb[0].mxu0
  %v1130 = vadd.f32 0.0, %v1129
  %v1131 = vpop.f32.mrb[0].mxu0
  %v1132 = vpop.f32.mrb[0].mxu0
  %v1133 = vpop.f32.mrb[0].mxu0
  %1134 = vdwg.mxu0
  %1135 = vrot.lane.b32.xlu0 %v91, 112
  %v1136 = vpop.permute.xlu0 %1135
  %1137 = vrot.lane.b32.xlu0 %v91, 80
  %v1138 = vpop.permute.xlu0 %1137
  %v1140 = vsel %vm42, %v1136, 0
  %v1143 = vsel %vm42, %v1138, 0
  %1145 = vmatprep.subr.bf16.mxu0 0
  %1146 = vmatpush1.bf16.xpose.msra.mxu0 %v1143
  %1147 = vmatprep.subr.bf16.mxu0 0
  %1148 = vmatpush1.bf16.xpose.msra.mxu0 0
  %1149 = vmatprep.subr.bf16.mxu0 0
  %1150 = vmatpush1.bf16.xpose.msra.mxu0 0
  %1151 = vmatprep.subr.bf16.mxu0 0
  %1152 = vmatpush1.bf16.xpose.msra.mxu0 0
  %1153 = vmatprep.subr.bf16.mxu0 0
  %1154 = vmatpush1.bf16.xpose.msra.mxu0 0
  %1155 = vmatprep.subr.bf16.mxu0 0
  %1156 = vmatpush1.bf16.xpose.msra.mxu0 0
  %1157 = vmatprep.subr.bf16.mxu0 0
  %1158 = vmatpush1.bf16.xpose.msra.mxu0 0
  %1159 = vmatprep.subr.bf16.mxu0 0
  %1160 = vmatpush1.bf16.xpose.msra.mxu0 0
  %1161 = vmatprep.subr.bf16.mxu0 0
  %1162 = vmatpush1.bf16.xpose.msra.mxu0 0
  %1163 = vmatprep.subr.bf16.mxu0 0
  %1164 = vmatpush1.bf16.xpose.msra.mxu0 0
  %1165 = vmatprep.subr.bf16.mxu0 0
  %1166 = vmatpush1.bf16.xpose.msra.mxu0 0
  %1167 = vmatprep.subr.bf16.mxu0 0
  %1168 = vmatpush1.bf16.xpose.msra.mxu0 0
  %1169 = vmatprep.subr.bf16.mxu0 0
  %1170 = vmatpush1.bf16.xpose.msra.mxu0 0
  %1171 = vmatprep.subr.bf16.mxu0 0
  %1172 = vmatpush1.bf16.xpose.msra.mxu0 0
  %1173 = vmatprep.subr.bf16.mxu0 0
  %1174 = vmatpush1.bf16.xpose.msra.mxu0 0
  %1175 = vmatprep.subr.bf16.mxu0 0
  %1176 = vmatpush1.bf16.xpose.msra.mxu0 0
  %1177 = vmatprep.mubr.bf16.mxu0 0
  %1178 = vmatmul.mubr.bf16.gmra.mrb[0].mxu0 %v1140
  %v1179 = vpop.f32.mrb[0].mxu0
  %v1180 = vadd.f32 0.0, %v1179
  %v1181 = vpop.f32.mrb[0].mxu0
  %v1182 = vpop.f32.mrb[0].mxu0
  %v1183 = vpop.f32.mrb[0].mxu0
  %1184 = vdwg.mxu0
  %1185 = vrot.lane.b32.xlu0 %v142, 112
  %v1186 = vpop.permute.xlu0 %1185
  %1187 = vrot.lane.b32.xlu0 %v142, 80
  %v1188 = vpop.permute.xlu0 %1187
  %v1190 = vsel %vm42, %v1186, 0
  %v1193 = vsel %vm42, %v1188, 0
  %1195 = vmatprep.subr.bf16.mxu0 0
  %1196 = vmatpush1.bf16.xpose.msra.mxu0 %v1193
  %1197 = vmatprep.subr.bf16.mxu0 0
  %1198 = vmatpush1.bf16.xpose.msra.mxu0 0
  %1199 = vmatprep.subr.bf16.mxu0 0
  %1200 = vmatpush1.bf16.xpose.msra.mxu0 0
  %1201 = vmatprep.subr.bf16.mxu0 0
  %1202 = vmatpush1.bf16.xpose.msra.mxu0 0
  %1203 = vmatprep.subr.bf16.mxu0 0
  %1204 = vmatpush1.bf16.xpose.msra.mxu0 0
  %1205 = vmatprep.subr.bf16.mxu0 0
  %1206 = vmatpush1.bf16.xpose.msra.mxu0 0
  %1207 = vmatprep.subr.bf16.mxu0 0
  %1208 = vmatpush1.bf16.xpose.msra.mxu0 0
  %1209 = vmatprep.subr.bf16.mxu0 0
  %1210 = vmatpush1.bf16.xpose.msra.mxu0 0
  %1211 = vmatprep.subr.bf16.mxu0 0
  %1212 = vmatpush1.bf16.xpose.msra.mxu0 0
  %1213 = vmatprep.subr.bf16.mxu0 0
  %1214 = vmatpush1.bf16.xpose.msra.mxu0 0
  %1215 = vmatprep.subr.bf16.mxu0 0
  %1216 = vmatpush1.bf16.xpose.msra.mxu0 0
  %1217 = vmatprep.subr.bf16.mxu0 0
  %1218 = vmatpush1.bf16.xpose.msra.mxu0 0
  %1219 = vmatprep.subr.bf16.mxu0 0
  %1220 = vmatpush1.bf16.xpose.msra.mxu0 0
  %1221 = vmatprep.subr.bf16.mxu0 0
  %1222 = vmatpush1.bf16.xpose.msra.mxu0 0
  %1223 = vmatprep.subr.bf16.mxu0 0
  %1224 = vmatpush1.bf16.xpose.msra.mxu0 0
  %1225 = vmatprep.subr.bf16.mxu0 0
  %1226 = vmatpush1.bf16.xpose.msra.mxu0 0
  %1227 = vmatprep.mubr.bf16.mxu0 0
  %1228 = vmatmul.mubr.bf16.gmra.mrb[0].mxu0 %v1190
  %v1229 = vpop.f32.mrb[0].mxu0
  %v1230 = vadd.f32 0.0, %v1229
  %v1231 = vpop.f32.mrb[0].mxu0
  %v1232 = vpop.f32.mrb[0].mxu0
  %v1233 = vpop.f32.mrb[0].mxu0
  %1234 = vdwg.mxu0
  %1235 = vrot.lane.b32.xlu0 %v193, 112
  %v1236 = vpop.permute.xlu0 %1235
  %1237 = vrot.lane.b32.xlu0 %v193, 80
  %v1238 = vpop.permute.xlu0 %1237
  %v1240 = vsel %vm42, %v1236, 0
  %v1243 = vsel %vm42, %v1238, 0
  %1245 = vmatprep.subr.bf16.mxu0 0
  %1246 = vmatpush1.bf16.xpose.msra.mxu0 %v1243
  %1247 = vmatprep.subr.bf16.mxu0 0
  %1248 = vmatpush1.bf16.xpose.msra.mxu0 0
  %1249 = vmatprep.subr.bf16.mxu0 0
  %1250 = vmatpush1.bf16.xpose.msra.mxu0 0
  %1251 = vmatprep.subr.bf16.mxu0 0
  %1252 = vmatpush1.bf16.xpose.msra.mxu0 0
  %1253 = vmatprep.subr.bf16.mxu0 0
  %1254 = vmatpush1.bf16.xpose.msra.mxu0 0
  %1255 = vmatprep.subr.bf16.mxu0 0
  %1256 = vmatpush1.bf16.xpose.msra.mxu0 0
  %1257 = vmatprep.subr.bf16.mxu0 0
  %1258 = vmatpush1.bf16.xpose.msra.mxu0 0
  %1259 = vmatprep.subr.bf16.mxu0 0
  %1260 = vmatpush1.bf16.xpose.msra.mxu0 0
  %1261 = vmatprep.subr.bf16.mxu0 0
  %1262 = vmatpush1.bf16.xpose.msra.mxu0 0
  %1263 = vmatprep.subr.bf16.mxu0 0
  %1264 = vmatpush1.bf16.xpose.msra.mxu0 0
  %1265 = vmatprep.subr.bf16.mxu0 0
  %1266 = vmatpush1.bf16.xpose.msra.mxu0 0
  %1267 = vmatprep.subr.bf16.mxu0 0
  %1268 = vmatpush1.bf16.xpose.msra.mxu0 0
  %1269 = vmatprep.subr.bf16.mxu0 0
  %1270 = vmatpush1.bf16.xpose.msra.mxu0 0
  %1271 = vmatprep.subr.bf16.mxu0 0
  %1272 = vmatpush1.bf16.xpose.msra.mxu0 0
  %1273 = vmatprep.subr.bf16.mxu0 0
  %1274 = vmatpush1.bf16.xpose.msra.mxu0 0
  %1275 = vmatprep.subr.bf16.mxu0 0
  %1276 = vmatpush1.bf16.xpose.msra.mxu0 0
  %1277 = vmatprep.mubr.bf16.mxu0 0
  %1278 = vmatmul.mubr.bf16.gmra.mrb[0].mxu0 %v1240
  %v1279 = vpop.f32.mrb[0].mxu0
  %v1280 = vadd.f32 0.0, %v1279
  %v1281 = vpop.f32.mrb[0].mxu0
  %v1282 = vpop.f32.mrb[0].mxu0
  %v1283 = vpop.f32.mrb[0].mxu0
  %1284 = vdwg.mxu0
  %v1285 = vmul.f32 %v1130, 0.35355338
  %v1286 = vmul.f32 %v1180, 0.35355338
  %v1287 = vmul.f32 %v1230, 0.35355338
  %v1288 = vmul.f32 %v1280, 0.35355338
  %v1289 = vsel %vm42, %v1285, -inf
  %1290 = vmax.xlane.f32.xlu0 %v1289
  %v1291 = vpop.xlane.xlu0 %1290
  %v1292 = vsel %vm42, %v1286, -inf
  %1293 = vmax.xlane.f32.xlu0 %v1292
  %v1294 = vpop.xlane.xlu0 %1293
  %v1295 = vsel %vm42, %v1287, -inf
  %1296 = vmax.xlane.f32.xlu0 %v1295
  %v1297 = vpop.xlane.xlu0 %1296
  %v1298 = vsel %vm42, %v1288, -inf
  %1299 = vmax.xlane.f32.xlu0 %v1298
  %v1300 = vpop.xlane.xlu0 %1299
  %v1301 = vsub.f32 %v1285, %v1291
  %v1302 = vsub.f32 %v1286, %v1294
  %v1303 = vsub.f32 %v1287, %v1297
  %v1304 = vsub.f32 %v1288, %v1300
  %v1305 = vmul.f32 %v1301, 1.442695
  %v1306 = vpow.pop %v1305
  %v1307 = vmul.f32 %v1302, 1.442695
  %v1308 = vpow.pop %v1307
  %v1309 = vmul.f32 %v1303, 1.442695
  %v1310 = vpow.pop %v1309
  %v1311 = vmul.f32 %v1304, 1.442695
  %v1312 = vpow.pop %v1311
  %v1313 = vsel %vm42, %v1306, 0.0
  %1314 = vadd.xlane.f32.xlu0 %v1313
  %v1315 = vpop.xlane.xlu0 %1314
  %v1316 = vsel %vm42, %v1308, 0.0
  %1317 = vadd.xlane.f32.xlu0 %v1316
  %v1318 = vpop.xlane.xlu0 %1317
  %v1319 = vsel %vm42, %v1310, 0.0
  %1320 = vadd.xlane.f32.xlu0 %v1319
  %v1321 = vpop.xlane.xlu0 %1320
  %v1322 = vsel %vm42, %v1312, 0.0
  %1323 = vadd.xlane.f32.xlu0 %v1322
  %v1324 = vpop.xlane.xlu0 %1323
  %v1325 = vrcp.pop %v1315
  %v1326 = vrcp.pop %v1318
  %v1327 = vrcp.pop %v1321
  %v1328 = vrcp.pop %v1324
  %v1329 = vmul.f32 %v1306, %v1325
  %v1330 = vmul.f32 %v1308, %v1326
  %v1331 = vmul.f32 %v1310, %v1327
  %v1332 = vmul.f32 %v1312, %v1328
  %v1333 = vpack.c.bf16 %v1329, %v1329
  %v1334 = vpack.c.bf16 %v1330, %v1330
  %v1335 = vpack.c.bf16 %v1331, %v1331
  %v1336 = vpack.c.bf16 %v1332, %v1332
  %1337 = vrot.lane.b32.xlu0 %v39, 48
  %v1338 = vpop.permute.xlu0 %1337
  %v1340 = vsel %vm42, %v1333, 0
  %v1343 = vsel %vm299, %v1338, 0
  %1345 = vmatprep.subr.bf16.mxu0 0
  %1346 = vmatpush1.bf16.msra.mxu0 %v1343
  %1347 = vmatprep.subr.bf16.mxu0 0
  %1348 = vmatpush1.bf16.msra.mxu0 0
  %1349 = vmatprep.subr.bf16.mxu0 0
  %1350 = vmatpush1.bf16.msra.mxu0 0
  %1351 = vmatprep.subr.bf16.mxu0 0
  %1352 = vmatpush1.bf16.msra.mxu0 0
  %1353 = vmatprep.subr.bf16.mxu0 0
  %1354 = vmatpush1.bf16.msra.mxu0 0
  %1355 = vmatprep.subr.bf16.mxu0 0
  %1356 = vmatpush1.bf16.msra.mxu0 0
  %1357 = vmatprep.subr.bf16.mxu0 0
  %1358 = vmatpush1.bf16.msra.mxu0 0
  %1359 = vmatprep.subr.bf16.mxu0 0
  %1360 = vmatpush1.bf16.msra.mxu0 0
  %1361 = vmatprep.subr.bf16.mxu0 0
  %1362 = vmatpush1.bf16.msra.mxu0 0
  %1363 = vmatprep.subr.bf16.mxu0 0
  %1364 = vmatpush1.bf16.msra.mxu0 0
  %1365 = vmatprep.subr.bf16.mxu0 0
  %1366 = vmatpush1.bf16.msra.mxu0 0
  %1367 = vmatprep.subr.bf16.mxu0 0
  %1368 = vmatpush1.bf16.msra.mxu0 0
  %1369 = vmatprep.subr.bf16.mxu0 0
  %1370 = vmatpush1.bf16.msra.mxu0 0
  %1371 = vmatprep.subr.bf16.mxu0 0
  %1372 = vmatpush1.bf16.msra.mxu0 0
  %1373 = vmatprep.subr.bf16.mxu0 0
  %1374 = vmatpush1.bf16.msra.mxu0 0
  %1375 = vmatprep.subr.bf16.mxu0 0
  %1376 = vmatpush1.bf16.msra.mxu0 0
  %1377 = vmatprep.mubr.bf16.mxu0 0
  %1378 = vmatmul.mubr.bf16.gmra.mrb[0].mxu0 %v1340
  %v1379 = vpop.f32.mrb[0].mxu0
  %v1380 = vadd.f32 0.0, %v1379
  %v1381 = vpop.f32.mrb[0].mxu0
  %v1382 = vpop.f32.mrb[0].mxu0
  %v1383 = vpop.f32.mrb[0].mxu0
  %1384 = vdwg.mxu0
  %1385 = vrot.lane.b32.xlu0 %v91, 48
  %v1386 = vpop.permute.xlu0 %1385
  %v1388 = vsel %vm42, %v1334, 0
  %v1391 = vsel %vm299, %v1386, 0
  %1393 = vmatprep.subr.bf16.mxu0 0
  %1394 = vmatpush1.bf16.msra.mxu0 %v1391
  %1395 = vmatprep.subr.bf16.mxu0 0
  %1396 = vmatpush1.bf16.msra.mxu0 0
  %1397 = vmatprep.subr.bf16.mxu0 0
  %1398 = vmatpush1.bf16.msra.mxu0 0
  %1399 = vmatprep.subr.bf16.mxu0 0
  %1400 = vmatpush1.bf16.msra.mxu0 0
  %1401 = vmatprep.subr.bf16.mxu0 0
  %1402 = vmatpush1.bf16.msra.mxu0 0
  %1403 = vmatprep.subr.bf16.mxu0 0
  %1404 = vmatpush1.bf16.msra.mxu0 0
  %1405 = vmatprep.subr.bf16.mxu0 0
  %1406 = vmatpush1.bf16.msra.mxu0 0
  %1407 = vmatprep.subr.bf16.mxu0 0
  %1408 = vmatpush1.bf16.msra.mxu0 0
  %1409 = vmatprep.subr.bf16.mxu0 0
  %1410 = vmatpush1.bf16.msra.mxu0 0
  %1411 = vmatprep.subr.bf16.mxu0 0
  %1412 = vmatpush1.bf16.msra.mxu0 0
  %1413 = vmatprep.subr.bf16.mxu0 0
  %1414 = vmatpush1.bf16.msra.mxu0 0
  %1415 = vmatprep.subr.bf16.mxu0 0
  %1416 = vmatpush1.bf16.msra.mxu0 0
  %1417 = vmatprep.subr.bf16.mxu0 0
  %1418 = vmatpush1.bf16.msra.mxu0 0
  %1419 = vmatprep.subr.bf16.mxu0 0
  %1420 = vmatpush1.bf16.msra.mxu0 0
  %1421 = vmatprep.subr.bf16.mxu0 0
  %1422 = vmatpush1.bf16.msra.mxu0 0
  %1423 = vmatprep.subr.bf16.mxu0 0
  %1424 = vmatpush1.bf16.msra.mxu0 0
  %1425 = vmatprep.mubr.bf16.mxu0 0
  %1426 = vmatmul.mubr.bf16.gmra.mrb[0].mxu0 %v1388
  %v1427 = vpop.f32.mrb[0].mxu0
  %v1428 = vadd.f32 0.0, %v1427
  %v1429 = vpop.f32.mrb[0].mxu0
  %v1430 = vpop.f32.mrb[0].mxu0
  %v1431 = vpop.f32.mrb[0].mxu0
  %1432 = vdwg.mxu0
  %1433 = vrot.lane.b32.xlu0 %v142, 48
  %v1434 = vpop.permute.xlu0 %1433
  %v1436 = vsel %vm42, %v1335, 0
  %v1439 = vsel %vm299, %v1434, 0
  %1441 = vmatprep.subr.bf16.mxu0 0
  %1442 = vmatpush1.bf16.msra.mxu0 %v1439
  %1443 = vmatprep.subr.bf16.mxu0 0
  %1444 = vmatpush1.bf16.msra.mxu0 0
  %1445 = vmatprep.subr.bf16.mxu0 0
  %1446 = vmatpush1.bf16.msra.mxu0 0
  %1447 = vmatprep.subr.bf16.mxu0 0
  %1448 = vmatpush1.bf16.msra.mxu0 0
  %1449 = vmatprep.subr.bf16.mxu0 0
  %1450 = vmatpush1.bf16.msra.mxu0 0
  %1451 = vmatprep.subr.bf16.mxu0 0
  %1452 = vmatpush1.bf16.msra.mxu0 0
  %1453 = vmatprep.subr.bf16.mxu0 0
  %1454 = vmatpush1.bf16.msra.mxu0 0
  %1455 = vmatprep.subr.bf16.mxu0 0
  %1456 = vmatpush1.bf16.msra.mxu0 0
  %1457 = vmatprep.subr.bf16.mxu0 0
  %1458 = vmatpush1.bf16.msra.mxu0 0
  %1459 = vmatprep.subr.bf16.mxu0 0
  %1460 = vmatpush1.bf16.msra.mxu0 0
  %1461 = vmatprep.subr.bf16.mxu0 0
  %1462 = vmatpush1.bf16.msra.mxu0 0
  %1463 = vmatprep.subr.bf16.mxu0 0
  %1464 = vmatpush1.bf16.msra.mxu0 0
  %1465 = vmatprep.subr.bf16.mxu0 0
  %1466 = vmatpush1.bf16.msra.mxu0 0
  %1467 = vmatprep.subr.bf16.mxu0 0
  %1468 = vmatpush1.bf16.msra.mxu0 0
  %1469 = vmatprep.subr.bf16.mxu0 0
  %1470 = vmatpush1.bf16.msra.mxu0 0
  %1471 = vmatprep.subr.bf16.mxu0 0
  %1472 = vmatpush1.bf16.msra.mxu0 0
  %1473 = vmatprep.mubr.bf16.mxu0 0
  %1474 = vmatmul.mubr.bf16.gmra.mrb[0].mxu0 %v1436
  %v1475 = vpop.f32.mrb[0].mxu0
  %v1476 = vadd.f32 0.0, %v1475
  %v1477 = vpop.f32.mrb[0].mxu0
  %v1478 = vpop.f32.mrb[0].mxu0
  %v1479 = vpop.f32.mrb[0].mxu0
  %1480 = vdwg.mxu0
  %1481 = vrot.lane.b32.xlu0 %v193, 48
  %v1482 = vpop.permute.xlu0 %1481
  %v1484 = vsel %vm42, %v1336, 0
  %v1487 = vsel %vm299, %v1482, 0
  %1489 = vmatprep.subr.bf16.mxu0 0
  %1490 = vmatpush1.bf16.msra.mxu0 %v1487
  %1491 = vmatprep.subr.bf16.mxu0 0
  %1492 = vmatpush1.bf16.msra.mxu0 0
  %1493 = vmatprep.subr.bf16.mxu0 0
  %1494 = vmatpush1.bf16.msra.mxu0 0
  %1495 = vmatprep.subr.bf16.mxu0 0
  %1496 = vmatpush1.bf16.msra.mxu0 0
  %1497 = vmatprep.subr.bf16.mxu0 0
  %1498 = vmatpush1.bf16.msra.mxu0 0
  %1499 = vmatprep.subr.bf16.mxu0 0
  %1500 = vmatpush1.bf16.msra.mxu0 0
  %1501 = vmatprep.subr.bf16.mxu0 0
  %1502 = vmatpush1.bf16.msra.mxu0 0
  %1503 = vmatprep.subr.bf16.mxu0 0
  %1504 = vmatpush1.bf16.msra.mxu0 0
  %1505 = vmatprep.subr.bf16.mxu0 0
  %1506 = vmatpush1.bf16.msra.mxu0 0
  %1507 = vmatprep.subr.bf16.mxu0 0
  %1508 = vmatpush1.bf16.msra.mxu0 0
  %1509 = vmatprep.subr.bf16.mxu0 0
  %1510 = vmatpush1.bf16.msra.mxu0 0
  %1511 = vmatprep.subr.bf16.mxu0 0
  %1512 = vmatpush1.bf16.msra.mxu0 0
  %1513 = vmatprep.subr.bf16.mxu0 0
  %1514 = vmatpush1.bf16.msra.mxu0 0
  %1515 = vmatprep.subr.bf16.mxu0 0
  %1516 = vmatpush1.bf16.msra.mxu0 0
  %1517 = vmatprep.subr.bf16.mxu0 0
  %1518 = vmatpush1.bf16.msra.mxu0 0
  %1519 = vmatprep.subr.bf16.mxu0 0
  %1520 = vmatpush1.bf16.msra.mxu0 0
  %1521 = vmatprep.mubr.bf16.mxu0 0
  %1522 = vmatmul.mubr.bf16.gmra.mrb[0].mxu0 %v1484
  %v1523 = vpop.f32.mrb[0].mxu0
  %v1524 = vadd.f32 0.0, %v1523
  %v1525 = vpop.f32.mrb[0].mxu0
  %v1526 = vpop.f32.mrb[0].mxu0
  %v1527 = vpop.f32.mrb[0].mxu0
  %1528 = vdwg.mxu0
  %v1529 = vpack.c.bf16 %v1380, %v1380
  %v1530 = vpack.c.bf16 %v1428, %v1428
  %v1531 = vpack.c.bf16 %v1476, %v1476
  %v1532 = vpack.c.bf16 %v1524, %v1524
  %v1533 = vld [vmem:[%s1 + $0x8] sm:$0xf]
  %v1538 = vunpack.c.l.b16 %v1529
  %v1539 = vunpack.c.l.b16 %v1530
  %v1540 = vunpack.c.l.b16 %v1531
  %v1541 = vunpack.c.l.b16 %v1532
  %v1542 = vpack.c.b16 %v1539, %v1538
  %v1543 = vpack.c.b16 %v1541, %v1540
  %v1545 = vsel %vm42, %v1542, 0
  %v1548 = vsel %vm42, %v1543, 0
  %v1551 = vsel %vm299, %v1533, 0
  %1553 = vmatprep.subr.bf16.mxu0 0
  %1554 = vmatpush1.bf16.msra.mxu0 %v1551
  %1555 = vmatprep.subr.bf16.mxu0 0
  %1556 = vmatpush1.bf16.msra.mxu0 0
  %1557 = vmatprep.subr.bf16.mxu0 0
  %1558 = vmatpush1.bf16.msra.mxu0 0
  %1559 = vmatprep.subr.bf16.mxu0 0
  %1560 = vmatpush1.bf16.msra.mxu0 0
  %1561 = vmatprep.subr.bf16.mxu0 0
  %1562 = vmatpush1.bf16.msra.mxu0 0
  %1563 = vmatprep.subr.bf16.mxu0 0
  %1564 = vmatpush1.bf16.msra.mxu0 0
  %1565 = vmatprep.subr.bf16.mxu0 0
  %1566 = vmatpush1.bf16.msra.mxu0 0
  %1567 = vmatprep.subr.bf16.mxu0 0
  %1568 = vmatpush1.bf16.msra.mxu0 0
  %1569 = vmatprep.subr.bf16.mxu0 0
  %1570 = vmatpush1.bf16.msra.mxu0 0
  %1571 = vmatprep.subr.bf16.mxu0 0
  %1572 = vmatpush1.bf16.msra.mxu0 0
  %1573 = vmatprep.subr.bf16.mxu0 0
  %1574 = vmatpush1.bf16.msra.mxu0 0
  %1575 = vmatprep.subr.bf16.mxu0 0
  %1576 = vmatpush1.bf16.msra.mxu0 0
  %1577 = vmatprep.subr.bf16.mxu0 0
  %1578 = vmatpush1.bf16.msra.mxu0 0
  %1579 = vmatprep.subr.bf16.mxu0 0
  %1580 = vmatpush1.bf16.msra.mxu0 0
  %1581 = vmatprep.subr.bf16.mxu0 0
  %1582 = vmatpush1.bf16.msra.mxu0 0
  %1583 = vmatprep.subr.bf16.mxu0 0
  %1584 = vmatpush1.bf16.msra.mxu0 0
  %1585 = vmatprep.mubr.bf16.mxu0 0
  %1586 = vmatmul.mubr.bf16.gmra.mrb[0].mxu0 %v1545
  %v1587 = vpop.f32.mrb[0].mxu0
  %v1588 = vadd.f32 0.0, %v1587
  %v1589 = vpop.f32.mrb[0].mxu0
  %v1590 = vpop.f32.mrb[0].mxu0
  %v1591 = vadd.f32 0.0, %v1590
  %v1592 = vpop.f32.mrb[0].mxu0
  %1593 = vmatprep.mubr.bf16.mxu0 0
  %1594 = vmatmul.mubr.bf16.gmra.mrb[0].mxu0 %v1548
  %v1595 = vpop.f32.mrb[0].mxu0
  %v1596 = vadd.f32 0.0, %v1595
  %v1597 = vpop.f32.mrb[0].mxu0
  %v1598 = vpop.f32.mrb[0].mxu0
  %v1599 = vadd.f32 0.0, %v1598
  %v1600 = vpop.f32.mrb[0].mxu0
  %1601 = vdwg.mxu0
  %v1602 = vadd.f32 %v1081, %v1588
  %v1603 = vadd.f32 %v1082, %v1591
  %v1604 = vadd.f32 %v1083, %v1596
  %v1605 = vadd.f32 %v1084, %v1599
  %1606 = vrot.lane.b32.xlu0 %v39, 104
  %v1607 = vpop.permute.xlu0 %1606
  %1608 = vrot.lane.b32.xlu0 %v39, 72
  %v1609 = vpop.permute.xlu0 %1608
  %v1611 = vsel %vm42, %v1607, 0
  %v1614 = vsel %vm42, %v1609, 0
  %1616 = vmatprep.subr.bf16.mxu0 0
  %1617 = vmatpush1.bf16.xpose.msra.mxu0 %v1614
  %1618 = vmatprep.subr.bf16.mxu0 0
  %1619 = vmatpush1.bf16.xpose.msra.mxu0 0
  %1620 = vmatprep.subr.bf16.mxu0 0
  %1621 = vmatpush1.bf16.xpose.msra.mxu0 0
  %1622 = vmatprep.subr.bf16.mxu0 0
  %1623 = vmatpush1.bf16.xpose.msra.mxu0 0
  %1624 = vmatprep.subr.bf16.mxu0 0
  %1625 = vmatpush1.bf16.xpose.msra.mxu0 0
  %1626 = vmatprep.subr.bf16.mxu0 0
  %1627 = vmatpush1.bf16.xpose.msra.mxu0 0
  %1628 = vmatprep.subr.bf16.mxu0 0
  %1629 = vmatpush1.bf16.xpose.msra.mxu0 0
  %1630 = vmatprep.subr.bf16.mxu0 0
  %1631 = vmatpush1.bf16.xpose.msra.mxu0 0
  %1632 = vmatprep.subr.bf16.mxu0 0
  %1633 = vmatpush1.bf16.xpose.msra.mxu0 0
  %1634 = vmatprep.subr.bf16.mxu0 0
  %1635 = vmatpush1.bf16.xpose.msra.mxu0 0
  %1636 = vmatprep.subr.bf16.mxu0 0
  %1637 = vmatpush1.bf16.xpose.msra.mxu0 0
  %1638 = vmatprep.subr.bf16.mxu0 0
  %1639 = vmatpush1.bf16.xpose.msra.mxu0 0
  %1640 = vmatprep.subr.bf16.mxu0 0
  %1641 = vmatpush1.bf16.xpose.msra.mxu0 0
  %1642 = vmatprep.subr.bf16.mxu0 0
  %1643 = vmatpush1.bf16.xpose.msra.mxu0 0
  %1644 = vmatprep.subr.bf16.mxu0 0
  %1645 = vmatpush1.bf16.xpose.msra.mxu0 0
  %1646 = vmatprep.subr.bf16.mxu0 0
  %1647 = vmatpush1.bf16.xpose.msra.mxu0 0
  %1648 = vmatprep.mubr.bf16.mxu0 0
  %1649 = vmatmul.mubr.bf16.gmra.mrb[0].mxu0 %v1611
  %v1650 = vpop.f32.mrb[0].mxu0
  %v1651 = vadd.f32 0.0, %v1650
  %v1652 = vpop.f32.mrb[0].mxu0
  %v1653 = vpop.f32.mrb[0].mxu0
  %v1654 = vpop.f32.mrb[0].mxu0
  %1655 = vdwg.mxu0
  %1656 = vrot.lane.b32.xlu0 %v91, 104
  %v1657 = vpop.permute.xlu0 %1656
  %1658 = vrot.lane.b32.xlu0 %v91, 72
  %v1659 = vpop.permute.xlu0 %1658
  %v1661 = vsel %vm42, %v1657, 0
  %v1664 = vsel %vm42, %v1659, 0
  %1666 = vmatprep.subr.bf16.mxu0 0
  %1667 = vmatpush1.bf16.xpose.msra.mxu0 %v1664
  %1668 = vmatprep.subr.bf16.mxu0 0
  %1669 = vmatpush1.bf16.xpose.msra.mxu0 0
  %1670 = vmatprep.subr.bf16.mxu0 0
  %1671 = vmatpush1.bf16.xpose.msra.mxu0 0
  %1672 = vmatprep.subr.bf16.mxu0 0
  %1673 = vmatpush1.bf16.xpose.msra.mxu0 0
  %1674 = vmatprep.subr.bf16.mxu0 0
  %1675 = vmatpush1.bf16.xpose.msra.mxu0 0
  %1676 = vmatprep.subr.bf16.mxu0 0
  %1677 = vmatpush1.bf16.xpose.msra.mxu0 0
  %1678 = vmatprep.subr.bf16.mxu0 0
  %1679 = vmatpush1.bf16.xpose.msra.mxu0 0
  %1680 = vmatprep.subr.bf16.mxu0 0
  %1681 = vmatpush1.bf16.xpose.msra.mxu0 0
  %1682 = vmatprep.subr.bf16.mxu0 0
  %1683 = vmatpush1.bf16.xpose.msra.mxu0 0
  %1684 = vmatprep.subr.bf16.mxu0 0
  %1685 = vmatpush1.bf16.xpose.msra.mxu0 0
  %1686 = vmatprep.subr.bf16.mxu0 0
  %1687 = vmatpush1.bf16.xpose.msra.mxu0 0
  %1688 = vmatprep.subr.bf16.mxu0 0
  %1689 = vmatpush1.bf16.xpose.msra.mxu0 0
  %1690 = vmatprep.subr.bf16.mxu0 0
  %1691 = vmatpush1.bf16.xpose.msra.mxu0 0
  %1692 = vmatprep.subr.bf16.mxu0 0
  %1693 = vmatpush1.bf16.xpose.msra.mxu0 0
  %1694 = vmatprep.subr.bf16.mxu0 0
  %1695 = vmatpush1.bf16.xpose.msra.mxu0 0
  %1696 = vmatprep.subr.bf16.mxu0 0
  %1697 = vmatpush1.bf16.xpose.msra.mxu0 0
  %1698 = vmatprep.mubr.bf16.mxu0 0
  %1699 = vmatmul.mubr.bf16.gmra.mrb[0].mxu0 %v1661
  %v1700 = vpop.f32.mrb[0].mxu0
  %v1701 = vadd.f32 0.0, %v1700
  %v1702 = vpop.f32.mrb[0].mxu0
  %v1703 = vpop.f32.mrb[0].mxu0
  %v1704 = vpop.f32.mrb[0].mxu0
  %1705 = vdwg.mxu0
  %1706 = vrot.lane.b32.xlu0 %v142, 104
  %v1707 = vpop.permute.xlu0 %1706
  %1708 = vrot.lane.b32.xlu0 %v142, 72
  %v1709 = vpop.permute.xlu0 %1708
  %v1711 = vsel %vm42, %v1707, 0
  %v1714 = vsel %vm42, %v1709, 0
  %1716 = vmatprep.subr.bf16.mxu0 0
  %1717 = vmatpush1.bf16.xpose.msra.mxu0 %v1714
  %1718 = vmatprep.subr.bf16.mxu0 0
  %1719 = vmatpush1.bf16.xpose.msra.mxu0 0
  %1720 = vmatprep.subr.bf16.mxu0 0
  %1721 = vmatpush1.bf16.xpose.msra.mxu0 0
  %1722 = vmatprep.subr.bf16.mxu0 0
  %1723 = vmatpush1.bf16.xpose.msra.mxu0 0
  %1724 = vmatprep.subr.bf16.mxu0 0
  %1725 = vmatpush1.bf16.xpose.msra.mxu0 0
  %1726 = vmatprep.subr.bf16.mxu0 0
  %1727 = vmatpush1.bf16.xpose.msra.mxu0 0
  %1728 = vmatprep.subr.bf16.mxu0 0
  %1729 = vmatpush1.bf16.xpose.msra.mxu0 0
  %1730 = vmatprep.subr.bf16.mxu0 0
  %1731 = vmatpush1.bf16.xpose.msra.mxu0 0
  %1732 = vmatprep.subr.bf16.mxu0 0
  %1733 = vmatpush1.bf16.xpose.msra.mxu0 0
  %1734 = vmatprep.subr.bf16.mxu0 0
  %1735 = vmatpush1.bf16.xpose.msra.mxu0 0
  %1736 = vmatprep.subr.bf16.mxu0 0
  %1737 = vmatpush1.bf16.xpose.msra.mxu0 0
  %1738 = vmatprep.subr.bf16.mxu0 0
  %1739 = vmatpush1.bf16.xpose.msra.mxu0 0
  %1740 = vmatprep.subr.bf16.mxu0 0
  %1741 = vmatpush1.bf16.xpose.msra.mxu0 0
  %1742 = vmatprep.subr.bf16.mxu0 0
  %1743 = vmatpush1.bf16.xpose.msra.mxu0 0
  %1744 = vmatprep.subr.bf16.mxu0 0
  %1745 = vmatpush1.bf16.xpose.msra.mxu0 0
  %1746 = vmatprep.subr.bf16.mxu0 0
  %1747 = vmatpush1.bf16.xpose.msra.mxu0 0
  %1748 = vmatprep.mubr.bf16.mxu0 0
  %1749 = vmatmul.mubr.bf16.gmra.mrb[0].mxu0 %v1711
  %v1750 = vpop.f32.mrb[0].mxu0
  %v1751 = vadd.f32 0.0, %v1750
  %v1752 = vpop.f32.mrb[0].mxu0
  %v1753 = vpop.f32.mrb[0].mxu0
  %v1754 = vpop.f32.mrb[0].mxu0
  %1755 = vdwg.mxu0
  %1756 = vrot.lane.b32.xlu0 %v193, 104
  %v1757 = vpop.permute.xlu0 %1756
  %1758 = vrot.lane.b32.xlu0 %v193, 72
  %v1759 = vpop.permute.xlu0 %1758
  %v1761 = vsel %vm42, %v1757, 0
  %v1764 = vsel %vm42, %v1759, 0
  %1766 = vmatprep.subr.bf16.mxu0 0
  %1767 = vmatpush1.bf16.xpose.msra.mxu0 %v1764
  %1768 = vmatprep.subr.bf16.mxu0 0
  %1769 = vmatpush1.bf16.xpose.msra.mxu0 0
  %1770 = vmatprep.subr.bf16.mxu0 0
  %1771 = vmatpush1.bf16.xpose.msra.mxu0 0
  %1772 = vmatprep.subr.bf16.mxu0 0
  %1773 = vmatpush1.bf16.xpose.msra.mxu0 0
  %1774 = vmatprep.subr.bf16.mxu0 0
  %1775 = vmatpush1.bf16.xpose.msra.mxu0 0
  %1776 = vmatprep.subr.bf16.mxu0 0
  %1777 = vmatpush1.bf16.xpose.msra.mxu0 0
  %1778 = vmatprep.subr.bf16.mxu0 0
  %1779 = vmatpush1.bf16.xpose.msra.mxu0 0
  %1780 = vmatprep.subr.bf16.mxu0 0
  %1781 = vmatpush1.bf16.xpose.msra.mxu0 0
  %1782 = vmatprep.subr.bf16.mxu0 0
  %1783 = vmatpush1.bf16.xpose.msra.mxu0 0
  %1784 = vmatprep.subr.bf16.mxu0 0
  %1785 = vmatpush1.bf16.xpose.msra.mxu0 0
  %1786 = vmatprep.subr.bf16.mxu0 0
  %1787 = vmatpush1.bf16.xpose.msra.mxu0 0
  %1788 = vmatprep.subr.bf16.mxu0 0
  %1789 = vmatpush1.bf16.xpose.msra.mxu0 0
  %1790 = vmatprep.subr.bf16.mxu0 0
  %1791 = vmatpush1.bf16.xpose.msra.mxu0 0
  %1792 = vmatprep.subr.bf16.mxu0 0
  %1793 = vmatpush1.bf16.xpose.msra.mxu0 0
  %1794 = vmatprep.subr.bf16.mxu0 0
  %1795 = vmatpush1.bf16.xpose.msra.mxu0 0
  %1796 = vmatprep.subr.bf16.mxu0 0
  %1797 = vmatpush1.bf16.xpose.msra.mxu0 0
  %1798 = vmatprep.mubr.bf16.mxu0 0
  %1799 = vmatmul.mubr.bf16.gmra.mrb[0].mxu0 %v1761
  %v1800 = vpop.f32.mrb[0].mxu0
  %v1801 = vadd.f32 0.0, %v1800
  %v1802 = vpop.f32.mrb[0].mxu0
  %v1803 = vpop.f32.mrb[0].mxu0
  %v1804 = vpop.f32.mrb[0].mxu0
  %1805 = vdwg.mxu0
  %v1806 = vmul.f32 %v1651, 0.35355338
  %v1807 = vmul.f32 %v1701, 0.35355338
  %v1808 = vmul.f32 %v1751, 0.35355338
  %v1809 = vmul.f32 %v1801, 0.35355338
  %v1810 = vsel %vm42, %v1806, -inf
  %1811 = vmax.xlane.f32.xlu0 %v1810
  %v1812 = vpop.xlane.xlu0 %1811
  %v1813 = vsel %vm42, %v1807, -inf
  %1814 = vmax.xlane.f32.xlu0 %v1813
  %v1815 = vpop.xlane.xlu0 %1814
  %v1816 = vsel %vm42, %v1808, -inf
  %1817 = vmax.xlane.f32.xlu0 %v1816
  %v1818 = vpop.xlane.xlu0 %1817
  %v1819 = vsel %vm42, %v1809, -inf
  %1820 = vmax.xlane.f32.xlu0 %v1819
  %v1821 = vpop.xlane.xlu0 %1820
  %v1822 = vsub.f32 %v1806, %v1812
  %v1823 = vsub.f32 %v1807, %v1815
  %v1824 = vsub.f32 %v1808, %v1818
  %v1825 = vsub.f32 %v1809, %v1821
  %v1826 = vmul.f32 %v1822, 1.442695
  %v1827 = vpow.pop %v1826
  %v1828 = vmul.f32 %v1823, 1.442695
  %v1829 = vpow.pop %v1828
  %v1830 = vmul.f32 %v1824, 1.442695
  %v1831 = vpow.pop %v1830
  %v1832 = vmul.f32 %v1825, 1.442695
  %v1833 = vpow.pop %v1832
  %v1834 = vsel %vm42, %v1827, 0.0
  %1835 = vadd.xlane.f32.xlu0 %v1834
  %v1836 = vpop.xlane.xlu0 %1835
  %v1837 = vsel %vm42, %v1829, 0.0
  %1838 = vadd.xlane.f32.xlu0 %v1837
  %v1839 = vpop.xlane.xlu0 %1838
  %v1840 = vsel %vm42, %v1831, 0.0
  %1841 = vadd.xlane.f32.xlu0 %v1840
  %v1842 = vpop.xlane.xlu0 %1841
  %v1843 = vsel %vm42, %v1833, 0.0
  %1844 = vadd.xlane.f32.xlu0 %v1843
  %v1845 = vpop.xlane.xlu0 %1844
  %v1846 = vrcp.pop %v1836
  %v1847 = vrcp.pop %v1839
  %v1848 = vrcp.pop %v1842
  %v1849 = vrcp.pop %v1845
  %v1850 = vmul.f32 %v1827, %v1846
  %v1851 = vmul.f32 %v1829, %v1847
  %v1852 = vmul.f32 %v1831, %v1848
  %v1853 = vmul.f32 %v1833, %v1849
  %v1854 = vpack.c.bf16 %v1850, %v1850
  %v1855 = vpack.c.bf16 %v1851, %v1851
  %v1856 = vpack.c.bf16 %v1852, %v1852
  %v1857 = vpack.c.bf16 %v1853, %v1853
  %1858 = vrot.lane.b32.xlu0 %v39, 40
  %v1859 = vpop.permute.xlu0 %1858
  %v1861 = vsel %vm42, %v1854, 0
  %v1864 = vsel %vm299, %v1859, 0
  %1866 = vmatprep.subr.bf16.mxu0 0
  %1867 = vmatpush1.bf16.msra.mxu0 %v1864
  %1868 = vmatprep.subr.bf16.mxu0 0
  %1869 = vmatpush1.bf16.msra.mxu0 0
  %1870 = vmatprep.subr.bf16.mxu0 0
  %1871 = vmatpush1.bf16.msra.mxu0 0
  %1872 = vmatprep.subr.bf16.mxu0 0
  %1873 = vmatpush1.bf16.msra.mxu0 0
  %1874 = vmatprep.subr.bf16.mxu0 0
  %1875 = vmatpush1.bf16.msra.mxu0 0
  %1876 = vmatprep.subr.bf16.mxu0 0
  %1877 = vmatpush1.bf16.msra.mxu0 0
  %1878 = vmatprep.subr.bf16.mxu0 0
  %1879 = vmatpush1.bf16.msra.mxu0 0
  %1880 = vmatprep.subr.bf16.mxu0 0
  %1881 = vmatpush1.bf16.msra.mxu0 0
  %1882 = vmatprep.subr.bf16.mxu0 0
  %1883 = vmatpush1.bf16.msra.mxu0 0
  %1884 = vmatprep.subr.bf16.mxu0 0
  %1885 = vmatpush1.bf16.msra.mxu0 0
  %1886 = vmatprep.subr.bf16.mxu0 0
  %1887 = vmatpush1.bf16.msra.mxu0 0
  %1888 = vmatprep.subr.bf16.mxu0 0
  %1889 = vmatpush1.bf16.msra.mxu0 0
  %1890 = vmatprep.subr.bf16.mxu0 0
  %1891 = vmatpush1.bf16.msra.mxu0 0
  %1892 = vmatprep.subr.bf16.mxu0 0
  %1893 = vmatpush1.bf16.msra.mxu0 0
  %1894 = vmatprep.subr.bf16.mxu0 0
  %1895 = vmatpush1.bf16.msra.mxu0 0
  %1896 = vmatprep.subr.bf16.mxu0 0
  %1897 = vmatpush1.bf16.msra.mxu0 0
  %1898 = vmatprep.mubr.bf16.mxu0 0
  %1899 = vmatmul.mubr.bf16.gmra.mrb[0].mxu0 %v1861
  %v1900 = vpop.f32.mrb[0].mxu0
  %v1901 = vadd.f32 0.0, %v1900
  %v1902 = vpop.f32.mrb[0].mxu0
  %v1903 = vpop.f32.mrb[0].mxu0
  %v1904 = vpop.f32.mrb[0].mxu0
  %1905 = vdwg.mxu0
  %1906 = vrot.lane.b32.xlu0 %v91, 40
  %v1907 = vpop.permute.xlu0 %1906
  %v1909 = vsel %vm42, %v1855, 0
  %v1912 = vsel %vm299, %v1907, 0
  %1914 = vmatprep.subr.bf16.mxu0 0
  %1915 = vmatpush1.bf16.msra.mxu0 %v1912
  %1916 = vmatprep.subr.bf16.mxu0 0
  %1917 = vmatpush1.bf16.msra.mxu0 0
  %1918 = vmatprep.subr.bf16.mxu0 0
  %1919 = vmatpush1.bf16.msra.mxu0 0
  %1920 = vmatprep.subr.bf16.mxu0 0
  %1921 = vmatpush1.bf16.msra.mxu0 0
  %1922 = vmatprep.subr.bf16.mxu0 0
  %1923 = vmatpush1.bf16.msra.mxu0 0
  %1924 = vmatprep.subr.bf16.mxu0 0
  %1925 = vmatpush1.bf16.msra.mxu0 0
  %1926 = vmatprep.subr.bf16.mxu0 0
  %1927 = vmatpush1.bf16.msra.mxu0 0
  %1928 = vmatprep.subr.bf16.mxu0 0
  %1929 = vmatpush1.bf16.msra.mxu0 0
  %1930 = vmatprep.subr.bf16.mxu0 0
  %1931 = vmatpush1.bf16.msra.mxu0 0
  %1932 = vmatprep.subr.bf16.mxu0 0
  %1933 = vmatpush1.bf16.msra.mxu0 0
  %1934 = vmatprep.subr.bf16.mxu0 0
  %1935 = vmatpush1.bf16.msra.mxu0 0
  %1936 = vmatprep.subr.bf16.mxu0 0
  %1937 = vmatpush1.bf16.msra.mxu0 0
  %1938 = vmatprep.subr.bf16.mxu0 0
  %1939 = vmatpush1.bf16.msra.mxu0 0
  %1940 = vmatprep.subr.bf16.mxu0 0
  %1941 = vmatpush1.bf16.msra.mxu0 0
  %1942 = vmatprep.subr.bf16.mxu0 0
  %1943 = vmatpush1.bf16.msra.mxu0 0
  %1944 = vmatprep.subr.bf16.mxu0 0
  %1945 = vmatpush1.bf16.msra.mxu0 0
  %1946 = vmatprep.mubr.bf16.mxu0 0
  %1947 = vmatmul.mubr.bf16.gmra.mrb[0].mxu0 %v1909
  %v1948 = vpop.f32.mrb[0].mxu0
  %v1949 = vadd.f32 0.0, %v1948
  %v1950 = vpop.f32.mrb[0].mxu0
  %v1951 = vpop.f32.mrb[0].mxu0
  %v1952 = vpop.f32.mrb[0].mxu0
  %1953 = vdwg.mxu0
  %1954 = vrot.lane.b32.xlu0 %v142, 40
  %v1955 = vpop.permute.xlu0 %1954
  %v1957 = vsel %vm42, %v1856, 0
  %v1960 = vsel %vm299, %v1955, 0
  %1962 = vmatprep.subr.bf16.mxu0 0
  %1963 = vmatpush1.bf16.msra.mxu0 %v1960
  %1964 = vmatprep.subr.bf16.mxu0 0
  %1965 = vmatpush1.bf16.msra.mxu0 0
  %1966 = vmatprep.subr.bf16.mxu0 0
  %1967 = vmatpush1.bf16.msra.mxu0 0
  %1968 = vmatprep.subr.bf16.mxu0 0
  %1969 = vmatpush1.bf16.msra.mxu0 0
  %1970 = vmatprep.subr.bf16.mxu0 0
  %1971 = vmatpush1.bf16.msra.mxu0 0
  %1972 = vmatprep.subr.bf16.mxu0 0
  %1973 = vmatpush1.bf16.msra.mxu0 0
  %1974 = vmatprep.subr.bf16.mxu0 0
  %1975 = vmatpush1.bf16.msra.mxu0 0
  %1976 = vmatprep.subr.bf16.mxu0 0
  %1977 = vmatpush1.bf16.msra.mxu0 0
  %1978 = vmatprep.subr.bf16.mxu0 0
  %1979 = vmatpush1.bf16.msra.mxu0 0
  %1980 = vmatprep.subr.bf16.mxu0 0
  %1981 = vmatpush1.bf16.msra.mxu0 0
  %1982 = vmatprep.subr.bf16.mxu0 0
  %1983 = vmatpush1.bf16.msra.mxu0 0
  %1984 = vmatprep.subr.bf16.mxu0 0
  %1985 = vmatpush1.bf16.msra.mxu0 0
  %1986 = vmatprep.subr.bf16.mxu0 0
  %1987 = vmatpush1.bf16.msra.mxu0 0
  %1988 = vmatprep.subr.bf16.mxu0 0
  %1989 = vmatpush1.bf16.msra.mxu0 0
  %1990 = vmatprep.subr.bf16.mxu0 0
  %1991 = vmatpush1.bf16.msra.mxu0 0
  %1992 = vmatprep.subr.bf16.mxu0 0
  %1993 = vmatpush1.bf16.msra.mxu0 0
  %1994 = vmatprep.mubr.bf16.mxu0 0
  %1995 = vmatmul.mubr.bf16.gmra.mrb[0].mxu0 %v1957
  %v1996 = vpop.f32.mrb[0].mxu0
  %v1997 = vadd.f32 0.0, %v1996
  %v1998 = vpop.f32.mrb[0].mxu0
  %v1999 = vpop.f32.mrb[0].mxu0
  %v2000 = vpop.f32.mrb[0].mxu0
  %2001 = vdwg.mxu0
  %2002 = vrot.lane.b32.xlu0 %v193, 40
  %v2003 = vpop.permute.xlu0 %2002
  %v2005 = vsel %vm42, %v1857, 0
  %v2008 = vsel %vm299, %v2003, 0
  %2010 = vmatprep.subr.bf16.mxu0 0
  %2011 = vmatpush1.bf16.msra.mxu0 %v2008
  %2012 = vmatprep.subr.bf16.mxu0 0
  %2013 = vmatpush1.bf16.msra.mxu0 0
  %2014 = vmatprep.subr.bf16.mxu0 0
  %2015 = vmatpush1.bf16.msra.mxu0 0
  %2016 = vmatprep.subr.bf16.mxu0 0
  %2017 = vmatpush1.bf16.msra.mxu0 0
  %2018 = vmatprep.subr.bf16.mxu0 0
  %2019 = vmatpush1.bf16.msra.mxu0 0
  %2020 = vmatprep.subr.bf16.mxu0 0
  %2021 = vmatpush1.bf16.msra.mxu0 0
  %2022 = vmatprep.subr.bf16.mxu0 0
  %2023 = vmatpush1.bf16.msra.mxu0 0
  %2024 = vmatprep.subr.bf16.mxu0 0
  %2025 = vmatpush1.bf16.msra.mxu0 0
  %2026 = vmatprep.subr.bf16.mxu0 0
  %2027 = vmatpush1.bf16.msra.mxu0 0
  %2028 = vmatprep.subr.bf16.mxu0 0
  %2029 = vmatpush1.bf16.msra.mxu0 0
  %2030 = vmatprep.subr.bf16.mxu0 0
  %2031 = vmatpush1.bf16.msra.mxu0 0
  %2032 = vmatprep.subr.bf16.mxu0 0
  %2033 = vmatpush1.bf16.msra.mxu0 0
  %2034 = vmatprep.subr.bf16.mxu0 0
  %2035 = vmatpush1.bf16.msra.mxu0 0
  %2036 = vmatprep.subr.bf16.mxu0 0
  %2037 = vmatpush1.bf16.msra.mxu0 0
  %2038 = vmatprep.subr.bf16.mxu0 0
  %2039 = vmatpush1.bf16.msra.mxu0 0
  %2040 = vmatprep.subr.bf16.mxu0 0
  %2041 = vmatpush1.bf16.msra.mxu0 0
  %2042 = vmatprep.mubr.bf16.mxu0 0
  %2043 = vmatmul.mubr.bf16.gmra.mrb[0].mxu0 %v2005
  %v2044 = vpop.f32.mrb[0].mxu0
  %v2045 = vadd.f32 0.0, %v2044
  %v2046 = vpop.f32.mrb[0].mxu0
  %v2047 = vpop.f32.mrb[0].mxu0
  %v2048 = vpop.f32.mrb[0].mxu0
  %2049 = vdwg.mxu0
  %v2050 = vpack.c.bf16 %v1901, %v1901
  %v2051 = vpack.c.bf16 %v1949, %v1949
  %v2052 = vpack.c.bf16 %v1997, %v1997
  %v2053 = vpack.c.bf16 %v2045, %v2045
  %v2054 = vld [vmem:[%s1 + $0xc] sm:$0xf]
  %v2059 = vunpack.c.l.b16 %v2050
  %v2060 = vunpack.c.l.b16 %v2051
  %v2061 = vunpack.c.l.b16 %v2052
  %v2062 = vunpack.c.l.b16 %v2053
  %v2063 = vpack.c.b16 %v2060, %v2059
  %v2064 = vpack.c.b16 %v2062, %v2061
  %v2066 = vsel %vm42, %v2063, 0
  %v2069 = vsel %vm42, %v2064, 0
  %v2072 = vsel %vm299, %v2054, 0
  %2074 = vmatprep.subr.bf16.mxu0 0
  %2075 = vmatpush1.bf16.msra.mxu0 %v2072
  %2076 = vmatprep.subr.bf16.mxu0 0
  %2077 = vmatpush1.bf16.msra.mxu0 0
  %2078 = vmatprep.subr.bf16.mxu0 0
  %2079 = vmatpush1.bf16.msra.mxu0 0
  %2080 = vmatprep.subr.bf16.mxu0 0
  %2081 = vmatpush1.bf16.msra.mxu0 0
  %2082 = vmatprep.subr.bf16.mxu0 0
  %2083 = vmatpush1.bf16.msra.mxu0 0
  %2084 = vmatprep.subr.bf16.mxu0 0
  %2085 = vmatpush1.bf16.msra.mxu0 0
  %2086 = vmatprep.subr.bf16.mxu0 0
  %2087 = vmatpush1.bf16.msra.mxu0 0
  %2088 = vmatprep.subr.bf16.mxu0 0
  %2089 = vmatpush1.bf16.msra.mxu0 0
  %2090 = vmatprep.subr.bf16.mxu0 0
  %2091 = vmatpush1.bf16.msra.mxu0 0
  %2092 = vmatprep.subr.bf16.mxu0 0
  %2093 = vmatpush1.bf16.msra.mxu0 0
  %2094 = vmatprep.subr.bf16.mxu0 0
  %2095 = vmatpush1.bf16.msra.mxu0 0
  %2096 = vmatprep.subr.bf16.mxu0 0
  %2097 = vmatpush1.bf16.msra.mxu0 0
  %2098 = vmatprep.subr.bf16.mxu0 0
  %2099 = vmatpush1.bf16.msra.mxu0 0
  %2100 = vmatprep.subr.bf16.mxu0 0
  %2101 = vmatpush1.bf16.msra.mxu0 0
  %2102 = vmatprep.subr.bf16.mxu0 0
  %2103 = vmatpush1.bf16.msra.mxu0 0
  %2104 = vmatprep.subr.bf16.mxu0 0
  %2105 = vmatpush1.bf16.msra.mxu0 0
  %2106 = vmatprep.mubr.bf16.mxu0 0
  %2107 = vmatmul.mubr.bf16.gmra.mrb[0].mxu0 %v2066
  %v2108 = vpop.f32.mrb[0].mxu0
  %v2109 = vadd.f32 0.0, %v2108
  %v2110 = vpop.f32.mrb[0].mxu0
  %v2111 = vpop.f32.mrb[0].mxu0
  %v2112 = vadd.f32 0.0, %v2111
  %v2113 = vpop.f32.mrb[0].mxu0
  %2114 = vmatprep.mubr.bf16.mxu0 0
  %2115 = vmatmul.mubr.bf16.gmra.mrb[0].mxu0 %v2069
  %v2116 = vpop.f32.mrb[0].mxu0
  %v2117 = vadd.f32 0.0, %v2116
  %v2118 = vpop.f32.mrb[0].mxu0
  %v2119 = vpop.f32.mrb[0].mxu0
  %v2120 = vadd.f32 0.0, %v2119
  %v2121 = vpop.f32.mrb[0].mxu0
  %2122 = vdwg.mxu0
  %v2123 = vadd.f32 %v1602, %v2109
  %v2124 = vadd.f32 %v1603, %v2112
  %v2125 = vadd.f32 %v1604, %v2117
  %v2126 = vadd.f32 %v1605, %v2120
  %vm2127 = vcmask 261120
  %2128 = vst.msk [vmem:[%s4] sm:$0xff] %vm2127, %v2123
  %2129 = vst.msk [vmem:[%s4 + $0x8] sm:$0xff] %vm2127, %v2124
  %2130 = vst.msk [vmem:[%s4 + $0x10] sm:$0xff] %vm2127, %v2125
  %2131 = vst.msk [vmem:[%s4 + $0x18] sm:$0xff] %vm2127, %v2126
  // Predicated region
  $region18: #{transformer_forward.7} parent=0 // pred_check
    _
  $region19: #{transformer_forward.7} parent=0 // pred_check_branch
    %2133 = sbr.rel (0) target = $region21
  $region20: #{transformer_forward.7} parent=0 // pred_region
    _
  $region21: #{transformer_forward.7} parent=0 // pred_fallthru
    _
  // Predicated region
  $region22: #{transformer_forward.7} parent=0 // pred_check
    _
  $region23: #{transformer_forward.7} parent=0 // pred_check_branch
    %2135 = sbr.rel (0) target = $region25
  $region24: #{transformer_forward.7} parent=0 // pred_region
    _
  $region25: #{transformer_forward.7} parent=0 // pred_fallthru
    _

</llo_original>
